<compile_context>
chip_gen: v6e
topology: v6e:2x2x1
jax: 0.10.0
libtpu: 0.0.40
codegen_flags: <defaults>
</compile_context>

<pallas_src>
from functools import partial

import numpy as np

import jax
import jax.numpy as jnp
from jax.experimental import pallas as pl
from jax.experimental.pallas import tpu as pltpu

N_FILTERS = 32
LRELU_SLOPE = 0.2
IN_EPS = 1e-5

# Row-block sizes for the stacked selection matrices (>= #output pixels of the conv,
# and a multiple of 16 so bf16-packed sublane slices stay tile aligned).
_C2_BLK = 64   # conv2 has 7*7 = 49 output pixels
_C3_BLK = 16   # conv3 has 4*4 = 16 output pixels


# ---------------------------------------------------------------------------
# Fused whole-network kernel (one grid step == one sample)
# ---------------------------------------------------------------------------
def _leaky_relu(x):
    return jnp.where(x >= 0.0, x, LRELU_SLOPE * x)


def _instance_norm(x):
    """x: (spatial, channels) float32; stats per channel over the spatial axis."""
    mean = jnp.mean(x, axis=0, keepdims=True)
    cen = x - mean
    var = jnp.mean(cen * cen, axis=0, keepdims=True)   # biased var, like PyTorch
    return cen * jax.lax.rsqrt(var + IN_EPS)


def _fused_disc_kernel(col1_ref, w1_ref, sel2_ref, w2_ref, sel3_ref, w3_ref, w4_ref,
                       o_ref, *, c2_valid, c3_valid):
    bf16 = jnp.bfloat16
    f32 = jnp.float32

    # ---- conv1 (im2col'd in the wrapper) + LeakyReLU -------------------------------
    h1 = jnp.dot(col1_ref[0], w1_ref[...], preferred_element_type=f32)   # (196, 32)
    h1 = _leaky_relu(h1).astype(bf16)

    # ---- conv2 (4x4, s2, p1) + InstanceNorm + LeakyReLU ----------------------------
    # One stacked selection matmul gathers the stride-2 / zero-padded rows for all 16
    # kernel offsets at once; then one small weight matmul per offset accumulates.
    n_g2 = w2_ref.shape[0]                                               # 16 offsets
    x2 = jnp.dot(sel2_ref[...], h1, preferred_element_type=f32)         # (16*64, 32)
    x2 = x2.astype(bf16)
    acc2 = jnp.zeros((_C2_BLK, w2_ref.shape[2]), f32)                   # (64, 64)
    for g in range(n_g2):
        acc2 = acc2 + jnp.dot(x2[g * _C2_BLK:(g + 1) * _C2_BLK, :], w2_ref[g],
                              preferred_element_type=f32)
    h2 = _leaky_relu(_instance_norm(acc2[:c2_valid, :])).astype(bf16)   # (49, 64)

    # ---- conv3 (3x3, s2, p1) + InstanceNorm + LeakyReLU ----------------------------
    n_g3 = w3_ref.shape[0]                                               # 9 offsets
    x3 = jnp.dot(sel3_ref[...], h2, preferred_element_type=f32)         # (9*16, 64)
    x3 = x3.astype(bf16)
    acc3 = jnp.zeros((_C3_BLK, w3_ref.shape[2]), f32)                   # (16, 128)
    for g in range(n_g3):
        acc3 = acc3 + jnp.dot(x3[g * _C3_BLK:(g + 1) * _C3_BLK, :], w3_ref[g],
                              preferred_element_type=f32)
    h3 = _leaky_relu(_instance_norm(acc3[:c3_valid, :]))                # (16, 128) f32

    # ---- conv4 (4x4 valid, Cout=1) as VPU multiply + reduce, then sigmoid ----------
    prod = h3 * w4_ref[...]                                             # (16, 128)
    s = jnp.sum(jnp.sum(prod, axis=1, keepdims=True), axis=0, keepdims=True)  # (1, 1)
    o_ref[0] = (1.0 / (1.0 + jnp.exp(-s))).astype(o_ref.dtype)


# ---------------------------------------------------------------------------
# Wrapper-side constant construction
# ---------------------------------------------------------------------------
def _make_stacked_selection(h_in, w_in, ksize, stride, pad, row_block):
    """Stacked constant 0/1 selection matrix of shape (K*K*row_block, Hin*Win).
    Row block g (kernel offset g = ki*K + kj) holds, for each output pixel p=ho*Wo+wo,
    a one-hot row selecting the in-bounds input pixel hit at that offset; rows beyond
    the valid output pixels (and out-of-bounds hits) are all zero = zero padding."""
    h_out = (h_in + 2 * pad - ksize) // stride + 1
    w_out = (w_in + 2 * pad - ksize) // stride + 1
    assert h_out * w_out <= row_block
    sel = np.zeros((ksize * ksize, row_block, h_in * w_in), np.float32)
    for ki in range(ksize):
        for kj in range(ksize):
            g = ki * ksize + kj
            for ho in range(h_out):
                h = stride * ho + ki - pad
                if h < 0 or h >= h_in:
                    continue
                for wo in range(w_out):
                    w = stride * wo + kj - pad
                    if 0 <= w < w_in:
                        sel[g, ho * w_out + wo, h * w_in + w] = 1.0
    return sel.reshape(ksize * ksize * row_block, h_in * w_in), h_out, w_out


def _stack_conv_weight(w_oihw):
    """OIHW -> (KH*KW, Cin, Cout), kernel-offset-major (matches the selection order)."""
    co, ci, kh, kw = w_oihw.shape
    return jnp.transpose(w_oihw, (2, 3, 1, 0)).reshape(kh * kw, ci, co)


def _im2col_conv1(x_nhwc, ksize, stride, pad):
    """im2col for the first conv only (raw network input, Cin=1): (N, Ho*Wo, KH*KW*Cin)."""
    n, h, w, c = x_nhwc.shape
    xp = jnp.pad(x_nhwc, ((0, 0), (pad, pad), (pad, pad), (0, 0)))
    ho = (h + 2 * pad - ksize) // stride + 1
    wo = (w + 2 * pad - ksize) // stride + 1
    cols = []
    for ki in range(ksize):
        for kj in range(ksize):
            cols.append(xp[:, ki:ki + stride * ho:stride, kj:kj + stride * wo:stride, :])
    col = jnp.stack(cols, axis=3).reshape(n, ho * wo, ksize * ksize * c)
    return col, ho, wo


# ---------------------------------------------------------------------------
# Full forward pass
# ---------------------------------------------------------------------------
def discriminator_wgan_forward(x_nchw, params):
    n = x_nchw.shape[0]
    x = jnp.transpose(x_nchw, (0, 2, 3, 1)).astype(jnp.float32)        # NHWC, C=1

    w1, w2, w3, w4 = params["w1"], params["w2"], params["w3"], params["w4"]

    # conv1 im2col (input prep only) + its weight matrix; bf16 halves the per-sample DMA.
    col1, h1o, w1o = _im2col_conv1(x, ksize=4, stride=2, pad=1)
    col1 = col1.astype(jnp.bfloat16)                                    # (N, 196, 16)
    w1mat = _stack_conv_weight(w1).reshape(-1, w1.shape[0]).astype(jnp.bfloat16)  # (16,32)

    # Stacked selection matrices for the in-kernel im2col of conv2 / conv3.
    sel2_np, h2o, w2o = _make_stacked_selection(h1o, w1o, 4, 2, 1, _C2_BLK)
    sel3_np, h3o, w3o = _make_stacked_selection(h2o, w2o, 3, 2, 1, _C3_BLK)
    sel2 = jnp.asarray(sel2_np, jnp.bfloat16)                           # (1024, 196)
    sel3 = jnp.asarray(sel3_np, jnp.bfloat16)                           # (144, 49)
    w2s = _stack_conv_weight(w2).astype(jnp.bfloat16)                   # (16, 32, 64)
    w3s = _stack_conv_weight(w3).astype(jnp.bfloat16)                   # (9, 64, 128)

    # conv4 (4x4 valid, Cout=1) -> plain weighted sum over the (4*4, 128) activation.
    assert (h3o, w3o) == (4, 4), "DiscriminatorWGAN expects 28x28 inputs"
    w4mat = jnp.transpose(w4[0], (1, 2, 0)).reshape(h3o * w3o, w4.shape[1]).astype(
        jnp.float32)                                                    # (16, 128)

    kernel = partial(_fused_disc_kernel, c2_valid=h2o * w2o, c3_valid=h3o * w3o)

    out = pl.pallas_call(
        kernel,
        out_shape=jax.ShapeDtypeStruct((n, 1, 1), jnp.float32),
        grid=(n,),
        in_specs=[
            pl.BlockSpec((1,) + col1.shape[1:], lambda i: (i, 0, 0)),  # per-sample col1
            pl.BlockSpec(w1mat.shape, lambda i: (0, 0)),               # constants below:
            pl.BlockSpec(sel2.shape, lambda i: (0, 0)),                # same block every
            pl.BlockSpec(w2s.shape, lambda i: (0, 0, 0)),              # step -> resident
            pl.BlockSpec(sel3.shape, lambda i: (0, 0)),                # in VMEM, no
            pl.BlockSpec(w3s.shape, lambda i: (0, 0, 0)),              # re-DMA
            pl.BlockSpec(w4mat.shape, lambda i: (0, 0)),
        ],
        out_specs=pl.BlockSpec((1, 1, 1), lambda i: (i, 0, 0)),
        compiler_params=pltpu.CompilerParams(
            dimension_semantics=("parallel",)),                        # dual-TC on v7x
    )(col1, w1mat, sel2, w2s, sel3, w3s, w4mat)

    # PyTorch: output.view(-1, 1).squeeze(0)  (squeeze only removes dim 0 if batch == 1)
    out = out.reshape(-1, 1)
    if out.shape[0] == 1:
        out = jnp.squeeze(out, axis=0)
    return out


# ---------------------------------------------------------------------------
# Pure-JAX reference (for a correctness sanity check) and param init
# ---------------------------------------------------------------------------
def _reference_forward(x_nchw, params):
    def conv(x, w, stride, pad):
        return jax.lax.conv_general_dilated(
            x, w, window_strides=(stride, stride),
            padding=[(pad, pad), (pad, pad)],
            dimension_numbers=("NCHW", "OIHW", "NCHW"),
            precision=jax.lax.Precision.HIGHEST)

    def lrelu(v):
        return jnp.where(v >= 0.0, v, LRELU_SLOPE * v)

    def inorm(v):
        mean = jnp.mean(v, axis=(2, 3), keepdims=True)
        var = jnp.mean((v - mean) ** 2, axis=(2, 3), keepdims=True)
        return (v - mean) * jax.lax.rsqrt(var + IN_EPS)

    h = lrelu(conv(x_nchw, params["w1"], 2, 1))
    h = lrelu(inorm(conv(h, params["w2"], 2, 1)))
    h = lrelu(inorm(conv(h, params["w3"], 2, 1)))
    h = jax.nn.sigmoid(conv(h, params["w4"], 1, 0))
    out = h.reshape(-1, 1)
    if out.shape[0] == 1:
        out = jnp.squeeze(out, axis=0)
    return out


def init_params(key, n_filters=N_FILTERS):
    ks = jax.random.split(key, 4)

    def w(k, shape):
        fan_in = shape[1] * shape[2] * shape[3]
        return jax.random.normal(k, shape, jnp.float32) * (1.0 / jnp.sqrt(fan_in))

    return {
        "w1": w(ks[0], (n_filters, 1, 4, 4)),
        "w2": w(ks[1], (n_filters * 2, n_filters, 4, 4)),
        "w3": w(ks[2], (n_filters * 4, n_filters * 2, 3, 3)),
        "w4": w(ks[3], (1, n_filters * 4, 4, 4)),
    }


if __name__ == "__main__":
    key = jax.random.PRNGKey(0)
    k_params, k_x = jax.random.split(key)
    params = init_params(k_params)

    # Input consistent with the module: MNIST-style (N, 1, 28, 28) NCHW images.
    x = jax.random.normal(k_x, (2, 1, 28, 28), dtype=jnp.float32)

    fwd = jax.jit(discriminator_wgan_forward)
    out = fwd(x, params)
    jax.block_until_ready(out)

    assert out.shape == (2, 1), out.shape
    assert bool(jnp.all((out >= 0.0) & (out <= 1.0)))       # sigmoid output range

    ref = _reference_forward(x, params)                     # f32 XLA reference
    assert bool(jnp.allclose(out, ref, atol=5e-2)), (out, ref)

    print("KERNEL_OK")
</pallas_src>

<mosaic_0001>
module attributes {stable_mosaic.version = 11 : i64} {
  func.func @_fused_disc_kernel(%arg0: i32, %arg1: memref<1x196x16xbf16, #tpu.memory_space<vmem>>, %arg2: memref<16x32xbf16, #tpu.memory_space<vmem>>, %arg3: memref<1024x196xbf16, #tpu.memory_space<vmem>>, %arg4: memref<16x32x64xbf16, #tpu.memory_space<vmem>>, %arg5: memref<144x49xbf16, #tpu.memory_space<vmem>>, %arg6: memref<9x64x128xbf16, #tpu.memory_space<vmem>>, %arg7: memref<16x128xf32, #tpu.memory_space<vmem>>, %arg8: memref<1x1x1xf32, #tpu.memory_space<vmem>>) attributes {dimension_semantics = [#tpu.dimension_semantics<parallel>], iteration_bounds = array<i64: 2>, scalar_prefetch = 0 : i64, scratch_operands = 0 : i64, tpu.core_type = #tpu.core_type<tc>, window_params = [{transform_indices = @transform_0, window_bounds = array<i64: 1, 196, 16>}, {pipeline_mode = #tpu.pipeline_mode<synchronous>, transform_indices = @transform_1, window_bounds = array<i64: 16, 32>}, {pipeline_mode = #tpu.pipeline_mode<synchronous>, transform_indices = @transform_2, window_bounds = array<i64: 1024, 196>}, {pipeline_mode = #tpu.pipeline_mode<synchronous>, transform_indices = @transform_3, window_bounds = array<i64: 16, 32, 64>}, {pipeline_mode = #tpu.pipeline_mode<synchronous>, transform_indices = @transform_4, window_bounds = array<i64: 144, 49>}, {pipeline_mode = #tpu.pipeline_mode<synchronous>, transform_indices = @transform_5, window_bounds = array<i64: 9, 64, 128>}, {pipeline_mode = #tpu.pipeline_mode<synchronous>, transform_indices = @transform_6, window_bounds = array<i64: 16, 128>}, {transform_indices = @transform_7, window_bounds = array<i64: 1, 1, 1>}]} {
    %c0 = arith.constant 0 : index
    %c0_0 = arith.constant 0 : index
    %c0_1 = arith.constant 0 : index
    %0 = vector.load %arg1[%c0, %c0_0, %c0_1] : memref<1x196x16xbf16, #tpu.memory_space<vmem>>, vector<1x196x16xbf16>
    %1 = vector.shape_cast %0 : vector<1x196x16xbf16> to vector<196x16xbf16>
    %c0_2 = arith.constant 0 : index
    %c0_3 = arith.constant 0 : index
    %2 = vector.load %arg2[%c0_2, %c0_3] : memref<16x32xbf16, #tpu.memory_space<vmem>>, vector<16x32xbf16>
    %cst = arith.constant dense<0.000000e+00> : vector<196x32xf32>
    %3 = tpu.matmul %1, %2, %cst {dimension_numbers = #tpu.dot_dimension_numbers<[1], [0], [0], [1], [0, 0, 1, 1], [], []>} : vector<196x16xbf16>, vector<16x32xbf16>, vector<196x32xf32> -> vector<196x32xf32>
    %cst_4 = arith.constant 0.000000e+00 : f32
    %4 = vector.broadcast %cst_4 : f32 to vector<196x32xf32>
    %5 = arith.cmpf oge, %3, %4 : vector<196x32xf32>
    %cst_5 = arith.constant 2.000000e-01 : f32
    %6 = vector.broadcast %cst_5 : f32 to vector<196x32xf32>
    %7 = arith.mulf %6, %3 : vector<196x32xf32>
    %8 = arith.select %5, %3, %7 : vector<196x32xi1>, vector<196x32xf32>
    %9 = arith.truncf %8 : vector<196x32xf32> to vector<196x32xbf16>
    %c0_6 = arith.constant 0 : index
    %c0_7 = arith.constant 0 : index
    %10 = vector.load %arg3[%c0_6, %c0_7] : memref<1024x196xbf16, #tpu.memory_space<vmem>>, vector<1024x196xbf16>
    %cst_8 = arith.constant dense<0.000000e+00> : vector<1024x32xf32>
    %11 = tpu.matmul %10, %9, %cst_8 {dimension_numbers = #tpu.dot_dimension_numbers<[1], [0], [0], [1], [0, 0, 1, 1], [], []>} : vector<1024x196xbf16>, vector<196x32xbf16>, vector<1024x32xf32> -> vector<1024x32xf32>
    %12 = arith.truncf %11 : vector<1024x32xf32> to vector<1024x32xbf16>
    %cst_9 = arith.constant 0.000000e+00 : f32
    %13 = vector.broadcast %cst_9 : f32 to vector<64x64xf32>
    %14 = vector.extract_strided_slice %12 {offsets = [0, 0], sizes = [64, 32], strides = [1, 1]} : vector<1024x32xbf16> to vector<64x32xbf16>
    %c0_10 = arith.constant 0 : index
    %c0_11 = arith.constant 0 : index
    %c0_12 = arith.constant 0 : index
    %15 = vector.load %arg4[%c0_10, %c0_11, %c0_12] : memref<16x32x64xbf16, #tpu.memory_space<vmem>>, vector<1x32x64xbf16>
    %16 = vector.shape_cast %15 : vector<1x32x64xbf16> to vector<32x64xbf16>
    %cst_13 = arith.constant dense<0.000000e+00> : vector<64x64xf32>
    %17 = tpu.matmul %14, %16, %cst_13 {dimension_numbers = #tpu.dot_dimension_numbers<[1], [0], [0], [1], [0, 0, 1, 1], [], []>} : vector<64x32xbf16>, vector<32x64xbf16>, vector<64x64xf32> -> vector<64x64xf32>
    %18 = arith.addf %13, %17 : vector<64x64xf32>
    %19 = vector.extract_strided_slice %12 {offsets = [64, 0], sizes = [64, 32], strides = [1, 1]} : vector<1024x32xbf16> to vector<64x32xbf16>
    %c1 = arith.constant 1 : index
    %c0_14 = arith.constant 0 : index
    %c0_15 = arith.constant 0 : index
    %20 = vector.load %arg4[%c1, %c0_14, %c0_15] : memref<16x32x64xbf16, #tpu.memory_space<vmem>>, vector<1x32x64xbf16>
    %21 = vector.shape_cast %20 : vector<1x32x64xbf16> to vector<32x64xbf16>
    %cst_16 = arith.constant dense<0.000000e+00> : vector<64x64xf32>
    %22 = tpu.matmul %19, %21, %cst_16 {dimension_numbers = #tpu.dot_dimension_numbers<[1], [0], [0], [1], [0, 0, 1, 1], [], []>} : vector<64x32xbf16>, vector<32x64xbf16>, vector<64x64xf32> -> vector<64x64xf32>
    %23 = arith.addf %18, %22 : vector<64x64xf32>
    %24 = vector.extract_strided_slice %12 {offsets = [128, 0], sizes = [64, 32], strides = [1, 1]} : vector<1024x32xbf16> to vector<64x32xbf16>
    %c2 = arith.constant 2 : index
    %c0_17 = arith.constant 0 : index
    %c0_18 = arith.constant 0 : index
    %25 = vector.load %arg4[%c2, %c0_17, %c0_18] : memref<16x32x64xbf16, #tpu.memory_space<vmem>>, vector<1x32x64xbf16>
    %26 = vector.shape_cast %25 : vector<1x32x64xbf16> to vector<32x64xbf16>
    %cst_19 = arith.constant dense<0.000000e+00> : vector<64x64xf32>
    %27 = tpu.matmul %24, %26, %cst_19 {dimension_numbers = #tpu.dot_dimension_numbers<[1], [0], [0], [1], [0, 0, 1, 1], [], []>} : vector<64x32xbf16>, vector<32x64xbf16>, vector<64x64xf32> -> vector<64x64xf32>
    %28 = arith.addf %23, %27 : vector<64x64xf32>
    %29 = vector.extract_strided_slice %12 {offsets = [192, 0], sizes = [64, 32], strides = [1, 1]} : vector<1024x32xbf16> to vector<64x32xbf16>
    %c3 = arith.constant 3 : index
    %c0_20 = arith.constant 0 : index
    %c0_21 = arith.constant 0 : index
    %30 = vector.load %arg4[%c3, %c0_20, %c0_21] : memref<16x32x64xbf16, #tpu.memory_space<vmem>>, vector<1x32x64xbf16>
    %31 = vector.shape_cast %30 : vector<1x32x64xbf16> to vector<32x64xbf16>
    %cst_22 = arith.constant dense<0.000000e+00> : vector<64x64xf32>
    %32 = tpu.matmul %29, %31, %cst_22 {dimension_numbers = #tpu.dot_dimension_numbers<[1], [0], [0], [1], [0, 0, 1, 1], [], []>} : vector<64x32xbf16>, vector<32x64xbf16>, vector<64x64xf32> -> vector<64x64xf32>
    %33 = arith.addf %28, %32 : vector<64x64xf32>
    %34 = vector.extract_strided_slice %12 {offsets = [256, 0], sizes = [64, 32], strides = [1, 1]} : vector<1024x32xbf16> to vector<64x32xbf16>
    %c4 = arith.constant 4 : index
    %c0_23 = arith.constant 0 : index
    %c0_24 = arith.constant 0 : index
    %35 = vector.load %arg4[%c4, %c0_23, %c0_24] : memref<16x32x64xbf16, #tpu.memory_space<vmem>>, vector<1x32x64xbf16>
    %36 = vector.shape_cast %35 : vector<1x32x64xbf16> to vector<32x64xbf16>
    %cst_25 = arith.constant dense<0.000000e+00> : vector<64x64xf32>
    %37 = tpu.matmul %34, %36, %cst_25 {dimension_numbers = #tpu.dot_dimension_numbers<[1], [0], [0], [1], [0, 0, 1, 1], [], []>} : vector<64x32xbf16>, vector<32x64xbf16>, vector<64x64xf32> -> vector<64x64xf32>
    %38 = arith.addf %33, %37 : vector<64x64xf32>
    %39 = vector.extract_strided_slice %12 {offsets = [320, 0], sizes = [64, 32], strides = [1, 1]} : vector<1024x32xbf16> to vector<64x32xbf16>
    %c5 = arith.constant 5 : index
    %c0_26 = arith.constant 0 : index
    %c0_27 = arith.constant 0 : index
    %40 = vector.load %arg4[%c5, %c0_26, %c0_27] : memref<16x32x64xbf16, #tpu.memory_space<vmem>>, vector<1x32x64xbf16>
    %41 = vector.shape_cast %40 : vector<1x32x64xbf16> to vector<32x64xbf16>
    %cst_28 = arith.constant dense<0.000000e+00> : vector<64x64xf32>
    %42 = tpu.matmul %39, %41, %cst_28 {dimension_numbers = #tpu.dot_dimension_numbers<[1], [0], [0], [1], [0, 0, 1, 1], [], []>} : vector<64x32xbf16>, vector<32x64xbf16>, vector<64x64xf32> -> vector<64x64xf32>
    %43 = arith.addf %38, %42 : vector<64x64xf32>
    %44 = vector.extract_strided_slice %12 {offsets = [384, 0], sizes = [64, 32], strides = [1, 1]} : vector<1024x32xbf16> to vector<64x32xbf16>
    %c6 = arith.constant 6 : index
    %c0_29 = arith.constant 0 : index
    %c0_30 = arith.constant 0 : index
    %45 = vector.load %arg4[%c6, %c0_29, %c0_30] : memref<16x32x64xbf16, #tpu.memory_space<vmem>>, vector<1x32x64xbf16>
    %46 = vector.shape_cast %45 : vector<1x32x64xbf16> to vector<32x64xbf16>
    %cst_31 = arith.constant dense<0.000000e+00> : vector<64x64xf32>
    %47 = tpu.matmul %44, %46, %cst_31 {dimension_numbers = #tpu.dot_dimension_numbers<[1], [0], [0], [1], [0, 0, 1, 1], [], []>} : vector<64x32xbf16>, vector<32x64xbf16>, vector<64x64xf32> -> vector<64x64xf32>
    %48 = arith.addf %43, %47 : vector<64x64xf32>
    %49 = vector.extract_strided_slice %12 {offsets = [448, 0], sizes = [64, 32], strides = [1, 1]} : vector<1024x32xbf16> to vector<64x32xbf16>
    %c7 = arith.constant 7 : index
    %c0_32 = arith.constant 0 : index
    %c0_33 = arith.constant 0 : index
    %50 = vector.load %arg4[%c7, %c0_32, %c0_33] : memref<16x32x64xbf16, #tpu.memory_space<vmem>>, vector<1x32x64xbf16>
    %51 = vector.shape_cast %50 : vector<1x32x64xbf16> to vector<32x64xbf16>
    %cst_34 = arith.constant dense<0.000000e+00> : vector<64x64xf32>
    %52 = tpu.matmul %49, %51, %cst_34 {dimension_numbers = #tpu.dot_dimension_numbers<[1], [0], [0], [1], [0, 0, 1, 1], [], []>} : vector<64x32xbf16>, vector<32x64xbf16>, vector<64x64xf32> -> vector<64x64xf32>
    %53 = arith.addf %48, %52 : vector<64x64xf32>
    %54 = vector.extract_strided_slice %12 {offsets = [512, 0], sizes = [64, 32], strides = [1, 1]} : vector<1024x32xbf16> to vector<64x32xbf16>
    %c8 = arith.constant 8 : index
    %c0_35 = arith.constant 0 : index
    %c0_36 = arith.constant 0 : index
    %55 = vector.load %arg4[%c8, %c0_35, %c0_36] : memref<16x32x64xbf16, #tpu.memory_space<vmem>>, vector<1x32x64xbf16>
    %56 = vector.shape_cast %55 : vector<1x32x64xbf16> to vector<32x64xbf16>
    %cst_37 = arith.constant dense<0.000000e+00> : vector<64x64xf32>
    %57 = tpu.matmul %54, %56, %cst_37 {dimension_numbers = #tpu.dot_dimension_numbers<[1], [0], [0], [1], [0, 0, 1, 1], [], []>} : vector<64x32xbf16>, vector<32x64xbf16>, vector<64x64xf32> -> vector<64x64xf32>
    %58 = arith.addf %53, %57 : vector<64x64xf32>
    %59 = vector.extract_strided_slice %12 {offsets = [576, 0], sizes = [64, 32], strides = [1, 1]} : vector<1024x32xbf16> to vector<64x32xbf16>
    %c9 = arith.constant 9 : index
    %c0_38 = arith.constant 0 : index
    %c0_39 = arith.constant 0 : index
    %60 = vector.load %arg4[%c9, %c0_38, %c0_39] : memref<16x32x64xbf16, #tpu.memory_space<vmem>>, vector<1x32x64xbf16>
    %61 = vector.shape_cast %60 : vector<1x32x64xbf16> to vector<32x64xbf16>
    %cst_40 = arith.constant dense<0.000000e+00> : vector<64x64xf32>
    %62 = tpu.matmul %59, %61, %cst_40 {dimension_numbers = #tpu.dot_dimension_numbers<[1], [0], [0], [1], [0, 0, 1, 1], [], []>} : vector<64x32xbf16>, vector<32x64xbf16>, vector<64x64xf32> -> vector<64x64xf32>
    %63 = arith.addf %58, %62 : vector<64x64xf32>
    %64 = vector.extract_strided_slice %12 {offsets = [640, 0], sizes = [64, 32], strides = [1, 1]} : vector<1024x32xbf16> to vector<64x32xbf16>
    %c10 = arith.constant 10 : index
    %c0_41 = arith.constant 0 : index
    %c0_42 = arith.constant 0 : index
    %65 = vector.load %arg4[%c10, %c0_41, %c0_42] : memref<16x32x64xbf16, #tpu.memory_space<vmem>>, vector<1x32x64xbf16>
    %66 = vector.shape_cast %65 : vector<1x32x64xbf16> to vector<32x64xbf16>
    %cst_43 = arith.constant dense<0.000000e+00> : vector<64x64xf32>
    %67 = tpu.matmul %64, %66, %cst_43 {dimension_numbers = #tpu.dot_dimension_numbers<[1], [0], [0], [1], [0, 0, 1, 1], [], []>} : vector<64x32xbf16>, vector<32x64xbf16>, vector<64x64xf32> -> vector<64x64xf32>
    %68 = arith.addf %63, %67 : vector<64x64xf32>
    %69 = vector.extract_strided_slice %12 {offsets = [704, 0], sizes = [64, 32], strides = [1, 1]} : vector<1024x32xbf16> to vector<64x32xbf16>
    %c11 = arith.constant 11 : index
    %c0_44 = arith.constant 0 : index
    %c0_45 = arith.constant 0 : index
    %70 = vector.load %arg4[%c11, %c0_44, %c0_45] : memref<16x32x64xbf16, #tpu.memory_space<vmem>>, vector<1x32x64xbf16>
    %71 = vector.shape_cast %70 : vector<1x32x64xbf16> to vector<32x64xbf16>
    %cst_46 = arith.constant dense<0.000000e+00> : vector<64x64xf32>
    %72 = tpu.matmul %69, %71, %cst_46 {dimension_numbers = #tpu.dot_dimension_numbers<[1], [0], [0], [1], [0, 0, 1, 1], [], []>} : vector<64x32xbf16>, vector<32x64xbf16>, vector<64x64xf32> -> vector<64x64xf32>
    %73 = arith.addf %68, %72 : vector<64x64xf32>
    %74 = vector.extract_strided_slice %12 {offsets = [768, 0], sizes = [64, 32], strides = [1, 1]} : vector<1024x32xbf16> to vector<64x32xbf16>
    %c12 = arith.constant 12 : index
    %c0_47 = arith.constant 0 : index
    %c0_48 = arith.constant 0 : index
    %75 = vector.load %arg4[%c12, %c0_47, %c0_48] : memref<16x32x64xbf16, #tpu.memory_space<vmem>>, vector<1x32x64xbf16>
    %76 = vector.shape_cast %75 : vector<1x32x64xbf16> to vector<32x64xbf16>
    %cst_49 = arith.constant dense<0.000000e+00> : vector<64x64xf32>
    %77 = tpu.matmul %74, %76, %cst_49 {dimension_numbers = #tpu.dot_dimension_numbers<[1], [0], [0], [1], [0, 0, 1, 1], [], []>} : vector<64x32xbf16>, vector<32x64xbf16>, vector<64x64xf32> -> vector<64x64xf32>
    %78 = arith.addf %73, %77 : vector<64x64xf32>
    %79 = vector.extract_strided_slice %12 {offsets = [832, 0], sizes = [64, 32], strides = [1, 1]} : vector<1024x32xbf16> to vector<64x32xbf16>
    %c13 = arith.constant 13 : index
    %c0_50 = arith.constant 0 : index
    %c0_51 = arith.constant 0 : index
    %80 = vector.load %arg4[%c13, %c0_50, %c0_51] : memref<16x32x64xbf16, #tpu.memory_space<vmem>>, vector<1x32x64xbf16>
    %81 = vector.shape_cast %80 : vector<1x32x64xbf16> to vector<32x64xbf16>
    %cst_52 = arith.constant dense<0.000000e+00> : vector<64x64xf32>
    %82 = tpu.matmul %79, %81, %cst_52 {dimension_numbers = #tpu.dot_dimension_numbers<[1], [0], [0], [1], [0, 0, 1, 1], [], []>} : vector<64x32xbf16>, vector<32x64xbf16>, vector<64x64xf32> -> vector<64x64xf32>
    %83 = arith.addf %78, %82 : vector<64x64xf32>
    %84 = vector.extract_strided_slice %12 {offsets = [896, 0], sizes = [64, 32], strides = [1, 1]} : vector<1024x32xbf16> to vector<64x32xbf16>
    %c14 = arith.constant 14 : index
    %c0_53 = arith.constant 0 : index
    %c0_54 = arith.constant 0 : index
    %85 = vector.load %arg4[%c14, %c0_53, %c0_54] : memref<16x32x64xbf16, #tpu.memory_space<vmem>>, vector<1x32x64xbf16>
    %86 = vector.shape_cast %85 : vector<1x32x64xbf16> to vector<32x64xbf16>
    %cst_55 = arith.constant dense<0.000000e+00> : vector<64x64xf32>
    %87 = tpu.matmul %84, %86, %cst_55 {dimension_numbers = #tpu.dot_dimension_numbers<[1], [0], [0], [1], [0, 0, 1, 1], [], []>} : vector<64x32xbf16>, vector<32x64xbf16>, vector<64x64xf32> -> vector<64x64xf32>
    %88 = arith.addf %83, %87 : vector<64x64xf32>
    %89 = vector.extract_strided_slice %12 {offsets = [960, 0], sizes = [64, 32], strides = [1, 1]} : vector<1024x32xbf16> to vector<64x32xbf16>
    %c15 = arith.constant 15 : index
    %c0_56 = arith.constant 0 : index
    %c0_57 = arith.constant 0 : index
    %90 = vector.load %arg4[%c15, %c0_56, %c0_57] : memref<16x32x64xbf16, #tpu.memory_space<vmem>>, vector<1x32x64xbf16>
    %91 = vector.shape_cast %90 : vector<1x32x64xbf16> to vector<32x64xbf16>
    %cst_58 = arith.constant dense<0.000000e+00> : vector<64x64xf32>
    %92 = tpu.matmul %89, %91, %cst_58 {dimension_numbers = #tpu.dot_dimension_numbers<[1], [0], [0], [1], [0, 0, 1, 1], [], []>} : vector<64x32xbf16>, vector<32x64xbf16>, vector<64x64xf32> -> vector<64x64xf32>
    %93 = arith.addf %88, %92 : vector<64x64xf32>
    %94 = vector.extract_strided_slice %93 {offsets = [0, 0], sizes = [49, 64], strides = [1, 1]} : vector<64x64xf32> to vector<49x64xf32>
    %cst_59 = arith.constant dense<0.000000e+00> : vector<64xf32>
    %95 = vector.multi_reduction <add>, %94, %cst_59 [0] : vector<49x64xf32> to vector<64xf32>
    %96 = vector.shape_cast %95 : vector<64xf32> to vector<1x64xf32>
    %cst_60 = arith.constant 4.900000e+01 : f32
    %97 = vector.broadcast %cst_60 : f32 to vector<1x64xf32>
    %98 = arith.divf %96, %97 : vector<1x64xf32>
    %99 = vector.broadcast %98 : vector<1x64xf32> to vector<49x64xf32>
    %100 = arith.subf %94, %99 : vector<49x64xf32>
    %101 = arith.mulf %100, %100 : vector<49x64xf32>
    %cst_61 = arith.constant dense<0.000000e+00> : vector<64xf32>
    %102 = vector.multi_reduction <add>, %101, %cst_61 [0] : vector<49x64xf32> to vector<64xf32>
    %103 = vector.shape_cast %102 : vector<64xf32> to vector<1x64xf32>
    %cst_62 = arith.constant 4.900000e+01 : f32
    %104 = vector.broadcast %cst_62 : f32 to vector<1x64xf32>
    %105 = arith.divf %103, %104 : vector<1x64xf32>
    %cst_63 = arith.constant 9.99999974E-6 : f32
    %106 = vector.broadcast %cst_63 : f32 to vector<1x64xf32>
    %107 = arith.addf %105, %106 : vector<1x64xf32>
    %108 = math.rsqrt %107 : vector<1x64xf32>
    %109 = vector.broadcast %108 : vector<1x64xf32> to vector<49x64xf32>
    %110 = arith.mulf %100, %109 : vector<49x64xf32>
    %cst_64 = arith.constant 0.000000e+00 : f32
    %111 = vector.broadcast %cst_64 : f32 to vector<49x64xf32>
    %112 = arith.cmpf oge, %110, %111 : vector<49x64xf32>
    %cst_65 = arith.constant 2.000000e-01 : f32
    %113 = vector.broadcast %cst_65 : f32 to vector<49x64xf32>
    %114 = arith.mulf %113, %110 : vector<49x64xf32>
    %115 = arith.select %112, %110, %114 : vector<49x64xi1>, vector<49x64xf32>
    %116 = arith.truncf %115 : vector<49x64xf32> to vector<49x64xbf16>
    %c0_66 = arith.constant 0 : index
    %c0_67 = arith.constant 0 : index
    %117 = vector.load %arg5[%c0_66, %c0_67] : memref<144x49xbf16, #tpu.memory_space<vmem>>, vector<144x49xbf16>
    %cst_68 = arith.constant dense<0.000000e+00> : vector<144x64xf32>
    %118 = tpu.matmul %117, %116, %cst_68 {dimension_numbers = #tpu.dot_dimension_numbers<[1], [0], [0], [1], [0, 0, 1, 1], [], []>} : vector<144x49xbf16>, vector<49x64xbf16>, vector<144x64xf32> -> vector<144x64xf32>
    %119 = arith.truncf %118 : vector<144x64xf32> to vector<144x64xbf16>
    %cst_69 = arith.constant 0.000000e+00 : f32
    %120 = vector.broadcast %cst_69 : f32 to vector<16x128xf32>
    %121 = vector.extract_strided_slice %119 {offsets = [0, 0], sizes = [16, 64], strides = [1, 1]} : vector<144x64xbf16> to vector<16x64xbf16>
    %c0_70 = arith.constant 0 : index
    %c0_71 = arith.constant 0 : index
    %c0_72 = arith.constant 0 : index
    %122 = vector.load %arg6[%c0_70, %c0_71, %c0_72] : memref<9x64x128xbf16, #tpu.memory_space<vmem>>, vector<1x64x128xbf16>
    %123 = vector.shape_cast %122 : vector<1x64x128xbf16> to vector<64x128xbf16>
    %cst_73 = arith.constant dense<0.000000e+00> : vector<16x128xf32>
    %124 = tpu.matmul %121, %123, %cst_73 {dimension_numbers = #tpu.dot_dimension_numbers<[1], [0], [0], [1], [0, 0, 1, 1], [], []>} : vector<16x64xbf16>, vector<64x128xbf16>, vector<16x128xf32> -> vector<16x128xf32>
    %125 = arith.addf %120, %124 : vector<16x128xf32>
    %126 = vector.extract_strided_slice %119 {offsets = [16, 0], sizes = [16, 64], strides = [1, 1]} : vector<144x64xbf16> to vector<16x64xbf16>
    %c1_74 = arith.constant 1 : index
    %c0_75 = arith.constant 0 : index
    %c0_76 = arith.constant 0 : index
    %127 = vector.load %arg6[%c1_74, %c0_75, %c0_76] : memref<9x64x128xbf16, #tpu.memory_space<vmem>>, vector<1x64x128xbf16>
    %128 = vector.shape_cast %127 : vector<1x64x128xbf16> to vector<64x128xbf16>
    %cst_77 = arith.constant dense<0.000000e+00> : vector<16x128xf32>
    %129 = tpu.matmul %126, %128, %cst_77 {dimension_numbers = #tpu.dot_dimension_numbers<[1], [0], [0], [1], [0, 0, 1, 1], [], []>} : vector<16x64xbf16>, vector<64x128xbf16>, vector<16x128xf32> -> vector<16x128xf32>
    %130 = arith.addf %125, %129 : vector<16x128xf32>
    %131 = vector.extract_strided_slice %119 {offsets = [32, 0], sizes = [16, 64], strides = [1, 1]} : vector<144x64xbf16> to vector<16x64xbf16>
    %c2_78 = arith.constant 2 : index
    %c0_79 = arith.constant 0 : index
    %c0_80 = arith.constant 0 : index
    %132 = vector.load %arg6[%c2_78, %c0_79, %c0_80] : memref<9x64x128xbf16, #tpu.memory_space<vmem>>, vector<1x64x128xbf16>
    %133 = vector.shape_cast %132 : vector<1x64x128xbf16> to vector<64x128xbf16>
    %cst_81 = arith.constant dense<0.000000e+00> : vector<16x128xf32>
    %134 = tpu.matmul %131, %133, %cst_81 {dimension_numbers = #tpu.dot_dimension_numbers<[1], [0], [0], [1], [0, 0, 1, 1], [], []>} : vector<16x64xbf16>, vector<64x128xbf16>, vector<16x128xf32> -> vector<16x128xf32>
    %135 = arith.addf %130, %134 : vector<16x128xf32>
    %136 = vector.extract_strided_slice %119 {offsets = [48, 0], sizes = [16, 64], strides = [1, 1]} : vector<144x64xbf16> to vector<16x64xbf16>
    %c3_82 = arith.constant 3 : index
    %c0_83 = arith.constant 0 : index
    %c0_84 = arith.constant 0 : index
    %137 = vector.load %arg6[%c3_82, %c0_83, %c0_84] : memref<9x64x128xbf16, #tpu.memory_space<vmem>>, vector<1x64x128xbf16>
    %138 = vector.shape_cast %137 : vector<1x64x128xbf16> to vector<64x128xbf16>
    %cst_85 = arith.constant dense<0.000000e+00> : vector<16x128xf32>
    %139 = tpu.matmul %136, %138, %cst_85 {dimension_numbers = #tpu.dot_dimension_numbers<[1], [0], [0], [1], [0, 0, 1, 1], [], []>} : vector<16x64xbf16>, vector<64x128xbf16>, vector<16x128xf32> -> vector<16x128xf32>
    %140 = arith.addf %135, %139 : vector<16x128xf32>
    %141 = vector.extract_strided_slice %119 {offsets = [64, 0], sizes = [16, 64], strides = [1, 1]} : vector<144x64xbf16> to vector<16x64xbf16>
    %c4_86 = arith.constant 4 : index
    %c0_87 = arith.constant 0 : index
    %c0_88 = arith.constant 0 : index
    %142 = vector.load %arg6[%c4_86, %c0_87, %c0_88] : memref<9x64x128xbf16, #tpu.memory_space<vmem>>, vector<1x64x128xbf16>
    %143 = vector.shape_cast %142 : vector<1x64x128xbf16> to vector<64x128xbf16>
    %cst_89 = arith.constant dense<0.000000e+00> : vector<16x128xf32>
    %144 = tpu.matmul %141, %143, %cst_89 {dimension_numbers = #tpu.dot_dimension_numbers<[1], [0], [0], [1], [0, 0, 1, 1], [], []>} : vector<16x64xbf16>, vector<64x128xbf16>, vector<16x128xf32> -> vector<16x128xf32>
    %145 = arith.addf %140, %144 : vector<16x128xf32>
    %146 = vector.extract_strided_slice %119 {offsets = [80, 0], sizes = [16, 64], strides = [1, 1]} : vector<144x64xbf16> to vector<16x64xbf16>
    %c5_90 = arith.constant 5 : index
    %c0_91 = arith.constant 0 : index
    %c0_92 = arith.constant 0 : index
    %147 = vector.load %arg6[%c5_90, %c0_91, %c0_92] : memref<9x64x128xbf16, #tpu.memory_space<vmem>>, vector<1x64x128xbf16>
    %148 = vector.shape_cast %147 : vector<1x64x128xbf16> to vector<64x128xbf16>
    %cst_93 = arith.constant dense<0.000000e+00> : vector<16x128xf32>
    %149 = tpu.matmul %146, %148, %cst_93 {dimension_numbers = #tpu.dot_dimension_numbers<[1], [0], [0], [1], [0, 0, 1, 1], [], []>} : vector<16x64xbf16>, vector<64x128xbf16>, vector<16x128xf32> -> vector<16x128xf32>
    %150 = arith.addf %145, %149 : vector<16x128xf32>
    %151 = vector.extract_strided_slice %119 {offsets = [96, 0], sizes = [16, 64], strides = [1, 1]} : vector<144x64xbf16> to vector<16x64xbf16>
    %c6_94 = arith.constant 6 : index
    %c0_95 = arith.constant 0 : index
    %c0_96 = arith.constant 0 : index
    %152 = vector.load %arg6[%c6_94, %c0_95, %c0_96] : memref<9x64x128xbf16, #tpu.memory_space<vmem>>, vector<1x64x128xbf16>
    %153 = vector.shape_cast %152 : vector<1x64x128xbf16> to vector<64x128xbf16>
    %cst_97 = arith.constant dense<0.000000e+00> : vector<16x128xf32>
    %154 = tpu.matmul %151, %153, %cst_97 {dimension_numbers = #tpu.dot_dimension_numbers<[1], [0], [0], [1], [0, 0, 1, 1], [], []>} : vector<16x64xbf16>, vector<64x128xbf16>, vector<16x128xf32> -> vector<16x128xf32>
    %155 = arith.addf %150, %154 : vector<16x128xf32>
    %156 = vector.extract_strided_slice %119 {offsets = [112, 0], sizes = [16, 64], strides = [1, 1]} : vector<144x64xbf16> to vector<16x64xbf16>
    %c7_98 = arith.constant 7 : index
    %c0_99 = arith.constant 0 : index
    %c0_100 = arith.constant 0 : index
    %157 = vector.load %arg6[%c7_98, %c0_99, %c0_100] : memref<9x64x128xbf16, #tpu.memory_space<vmem>>, vector<1x64x128xbf16>
    %158 = vector.shape_cast %157 : vector<1x64x128xbf16> to vector<64x128xbf16>
    %cst_101 = arith.constant dense<0.000000e+00> : vector<16x128xf32>
    %159 = tpu.matmul %156, %158, %cst_101 {dimension_numbers = #tpu.dot_dimension_numbers<[1], [0], [0], [1], [0, 0, 1, 1], [], []>} : vector<16x64xbf16>, vector<64x128xbf16>, vector<16x128xf32> -> vector<16x128xf32>
    %160 = arith.addf %155, %159 : vector<16x128xf32>
    %161 = vector.extract_strided_slice %119 {offsets = [128, 0], sizes = [16, 64], strides = [1, 1]} : vector<144x64xbf16> to vector<16x64xbf16>
    %c8_102 = arith.constant 8 : index
    %c0_103 = arith.constant 0 : index
    %c0_104 = arith.constant 0 : index
    %162 = vector.load %arg6[%c8_102, %c0_103, %c0_104] : memref<9x64x128xbf16, #tpu.memory_space<vmem>>, vector<1x64x128xbf16>
    %163 = vector.shape_cast %162 : vector<1x64x128xbf16> to vector<64x128xbf16>
    %cst_105 = arith.constant dense<0.000000e+00> : vector<16x128xf32>
    %164 = tpu.matmul %161, %163, %cst_105 {dimension_numbers = #tpu.dot_dimension_numbers<[1], [0], [0], [1], [0, 0, 1, 1], [], []>} : vector<16x64xbf16>, vector<64x128xbf16>, vector<16x128xf32> -> vector<16x128xf32>
    %165 = arith.addf %160, %164 : vector<16x128xf32>
    %cst_106 = arith.constant dense<0.000000e+00> : vector<128xf32>
    %166 = vector.multi_reduction <add>, %165, %cst_106 [0] : vector<16x128xf32> to vector<128xf32>
    %167 = vector.shape_cast %166 : vector<128xf32> to vector<1x128xf32>
    %cst_107 = arith.constant 1.600000e+01 : f32
    %168 = vector.broadcast %cst_107 : f32 to vector<1x128xf32>
    %169 = arith.divf %167, %168 : vector<1x128xf32>
    %170 = vector.broadcast %169 : vector<1x128xf32> to vector<16x128xf32>
    %171 = arith.subf %165, %170 : vector<16x128xf32>
    %172 = arith.mulf %171, %171 : vector<16x128xf32>
    %cst_108 = arith.constant dense<0.000000e+00> : vector<128xf32>
    %173 = vector.multi_reduction <add>, %172, %cst_108 [0] : vector<16x128xf32> to vector<128xf32>
    %174 = vector.shape_cast %173 : vector<128xf32> to vector<1x128xf32>
    %cst_109 = arith.constant 1.600000e+01 : f32
    %175 = vector.broadcast %cst_109 : f32 to vector<1x128xf32>
    %176 = arith.divf %174, %175 : vector<1x128xf32>
    %cst_110 = arith.constant 9.99999974E-6 : f32
    %177 = vector.broadcast %cst_110 : f32 to vector<1x128xf32>
    %178 = arith.addf %176, %177 : vector<1x128xf32>
    %179 = math.rsqrt %178 : vector<1x128xf32>
    %180 = vector.broadcast %179 : vector<1x128xf32> to vector<16x128xf32>
    %181 = arith.mulf %171, %180 : vector<16x128xf32>
    %cst_111 = arith.constant 0.000000e+00 : f32
    %182 = vector.broadcast %cst_111 : f32 to vector<16x128xf32>
    %183 = arith.cmpf oge, %181, %182 : vector<16x128xf32>
    %cst_112 = arith.constant 2.000000e-01 : f32
    %184 = vector.broadcast %cst_112 : f32 to vector<16x128xf32>
    %185 = arith.mulf %184, %181 : vector<16x128xf32>
    %186 = arith.select %183, %181, %185 : vector<16x128xi1>, vector<16x128xf32>
    %c0_113 = arith.constant 0 : index
    %c0_114 = arith.constant 0 : index
    %187 = vector.load %arg7[%c0_113, %c0_114] : memref<16x128xf32, #tpu.memory_space<vmem>>, vector<16x128xf32>
    %188 = arith.mulf %186, %187 : vector<16x128xf32>
    %cst_115 = arith.constant dense<0.000000e+00> : vector<16xf32>
    %189 = vector.multi_reduction <add>, %188, %cst_115 [1] : vector<16x128xf32> to vector<16xf32>
    %190 = vector.shape_cast %189 : vector<16xf32> to vector<16x1xf32>
    %cst_116 = arith.constant dense<0.000000e+00> : vector<1xf32>
    %191 = vector.multi_reduction <add>, %190, %cst_116 [0] : vector<16x1xf32> to vector<1xf32>
    %192 = vector.shape_cast %191 : vector<1xf32> to vector<1x1xf32>
    %cst_117 = arith.constant 0.000000e+00 : f32
    %193 = vector.broadcast %cst_117 : f32 to vector<1x1xf32>
    %194 = arith.subf %193, %192 : vector<1x1xf32>
    %195 = math.exp %194 : vector<1x1xf32>
    %cst_118 = arith.constant 1.000000e+00 : f32
    %196 = vector.broadcast %cst_118 : f32 to vector<1x1xf32>
    %197 = arith.addf %196, %195 : vector<1x1xf32>
    %cst_119 = arith.constant 1.000000e+00 : f32
    %198 = vector.broadcast %cst_119 : f32 to vector<1x1xf32>
    %199 = arith.divf %198, %197 : vector<1x1xf32>
    %c0_120 = arith.constant 0 : index
    %c0_121 = arith.constant 0 : index
    %c0_122 = arith.constant 0 : index
    %200 = vector.load %arg8[%c0_120, %c0_121, %c0_122] : memref<1x1x1xf32, #tpu.memory_space<vmem>>, vector<1x1x1xf32>
    %201 = vector.shape_cast %200 : vector<1x1x1xf32> to vector<1x1xf32>
    %202 = vector.shape_cast %199 : vector<1x1xf32> to vector<1x1x1xf32>
    tpu.vector_store %arg8[%c0_120, %c0_121, %c0_122], %202 {strides = array<i32>} : memref<1x1x1xf32, #tpu.memory_space<vmem>>, vector<1x1x1xf32>,
    return
  }
  func.func @transform_0(%arg0: i32) -> (i32, i32, i32) {
    %c0_i32 = arith.constant 0 : i32
    %c0_i32_0 = arith.constant 0 : i32
    %c0_i32_1 = arith.constant 0 : i32
    return %arg0, %c0_i32, %c0_i32_0 : i32, i32, i32
  }
  func.func @transform_1(%arg0: i32) -> (i32, i32) {
    %c0_i32 = arith.constant 0 : i32
    %c0_i32_0 = arith.constant 0 : i32
    %c0_i32_1 = arith.constant 0 : i32
    return %c0_i32, %c0_i32_0 : i32, i32
  }
  func.func @transform_2(%arg0: i32) -> (i32, i32) {
    %c0_i32 = arith.constant 0 : i32
    %c0_i32_0 = arith.constant 0 : i32
    %c0_i32_1 = arith.constant 0 : i32
    return %c0_i32, %c0_i32_0 : i32, i32
  }
  func.func @transform_3(%arg0: i32) -> (i32, i32, i32) {
    %c0_i32 = arith.constant 0 : i32
    %c0_i32_0 = arith.constant 0 : i32
    %c0_i32_1 = arith.constant 0 : i32
    %c0_i32_2 = arith.constant 0 : i32
    return %c0_i32, %c0_i32_0, %c0_i32_1 : i32, i32, i32
  }
  func.func @transform_4(%arg0: i32) -> (i32, i32) {
    %c0_i32 = arith.constant 0 : i32
    %c0_i32_0 = arith.constant 0 : i32
    %c0_i32_1 = arith.constant 0 : i32
    return %c0_i32, %c0_i32_0 : i32, i32
  }
  func.func @transform_5(%arg0: i32) -> (i32, i32, i32) {
    %c0_i32 = arith.constant 0 : i32
    %c0_i32_0 = arith.constant 0 : i32
    %c0_i32_1 = arith.constant 0 : i32
    %c0_i32_2 = arith.constant 0 : i32
    return %c0_i32, %c0_i32_0, %c0_i32_1 : i32, i32, i32
  }
  func.func @transform_6(%arg0: i32) -> (i32, i32) {
    %c0_i32 = arith.constant 0 : i32
    %c0_i32_0 = arith.constant 0 : i32
    %c0_i32_1 = arith.constant 0 : i32
    return %c0_i32, %c0_i32_0 : i32, i32
  }
  func.func @transform_7(%arg0: i32) -> (i32, i32, i32) {
    %c0_i32 = arith.constant 0 : i32
    %c0_i32_0 = arith.constant 0 : i32
    %c0_i32_1 = arith.constant 0 : i32
    return %arg0, %c0_i32, %c0_i32_0 : i32, i32, i32
  }
}

</mosaic_0001>

<llo_original>
// kernel: discriminator_wgan_forward.1
$region0: #{discriminator_wgan_forward.1}
  #allocation0 [shape = 'u32[]', space=smem, size = 0x4, offset = 0x4, fixed_abs, tag = 'smem constant byte address 0x4 - core index']
  #allocation1 [shape = 'u32[144,128]{1,0:T(1,128)}', space=vmem, size = 0x12000, scoped, tag = 'internal scratch']
  %s0 = inlined_call_operand.vmem [shape: bf16[2,196,16], index: 0, kind: input, shape index: {}]
  %s1 = inlined_call_operand.vmem [shape: bf16[16,32], index: 1, kind: input, shape index: {}]
  %s2 = inlined_call_operand.vmem [shape: bf16[1024,196], index: 2, kind: input, shape index: {}]
  %s3 = inlined_call_operand.vmem [shape: bf16[16,32,64], index: 3, kind: input, shape index: {}]
  %s4 = inlined_call_operand.vmem [shape: bf16[144,49], index: 4, kind: input, shape index: {}]
  %s5 = inlined_call_operand.vmem [shape: bf16[9,64,128], index: 5, kind: input, shape index: {}]
  %s6 = inlined_call_operand.vmem [shape: f32[16,128], index: 6, kind: input, shape index: {}]
  %s7 = inlined_call_operand.vmem [shape: f32[2,1,1], index: 7, kind: output, shape index: {}]
  %s8 = sld [smem:[#allocation0]]
  $region61: #{discriminator_wgan_forward.1} parent=0
    _
  %s10 = ssub.s32 1, %s8
  %s11 = scalar_select 0, %s10, %s8
  loop: start=0, step=1, limit=4
  $region2: #{discriminator_wgan_forward.1} parent=0 // loop_pre_header
    _
  $region3: #{discriminator_wgan_forward.1} parent=0 // loop_header
    %s13 = sphi 0, %s17
    %p14 = scmp.ge.s32.totalorder %s13, 4
    %s23 = sphi 0, %s25
    %s26 = sphi 0, %s23
    %s27 = sphi 0, %s26
    %s43 = sphi 0, %s27
    %s47 = sphi 0, %s47
    %s49 = sphi 0, %s47
    %s50 = sphi 0, %s49
    %s64 = sphi 0, %s50
    %s68 = sphi 0, %s68
    %s70 = sphi 0, %s68
    %s71 = sphi 0, %s70
    %s85 = sphi 0, %s71
    %s89 = sphi 0, %s89
    %s91 = sphi 0, %s89
    %s92 = sphi 0, %s91
    %s106 = sphi 0, %s92
    %s110 = sphi 0, %s110
    %s112 = sphi 0, %s110
    %s113 = sphi 0, %s112
    %s127 = sphi 0, %s113
    %s131 = sphi 0, %s131
    %s133 = sphi 0, %s131
    %s134 = sphi 0, %s133
    %s148 = sphi 0, %s134
    %s152 = sphi 0, %s152
    %s154 = sphi 0, %s152
    %s155 = sphi 0, %s154
    %s169 = sphi 0, %s155
    %s175 = sphi 0, %s177
    %s178 = sphi 0, %s175
    %s179 = sphi 0, %s178
    %s195 = sphi 0, %s179
  $region4: #{discriminator_wgan_forward.1} parent=0 // loop_header_branch
    %16 = sbr.rel (%p14) target = $region8
  $region5: #{discriminator_wgan_forward.1} parent=0 // loop_body
    %s18 = ssub.s32 %s13, 1
    %s19 = ssub.s32 %s13, 2
    %s20 = sadd.s32 %s13, 1
    %s21 = ssub.s32 %s13, %s20
    %p22 = scmp.eq.s32.totalorder %s21, 0
    %s24 = sadd.s32 %s23, 1
    %s25 = scalar_select %p22, %s23, %s24
    %p28 = pneg %p22
    %p29 = scmp.eq.s32.totalorder %s13, 1
    %p30 = por %p28, %p29
    %p31 = scmp.ne.s32.totalorder %s23, %s26
    %p32 = scmp.eq.s32.totalorder %s13, 0
    %p33 = por %p31, %p32
    %p34 = scmp.ne.s32.totalorder %s23, %s26
    %p35 = scmp.eq.s32.totalorder %s18, 1
    %p36 = por %p34, %p35
    %p37 = scmp.ne.s32.totalorder %s26, %s27
    %p38 = scmp.eq.s32.totalorder %s18, 0
    %p39 = por %p37, %p38
    %p40 = scmp.ne.s32.totalorder %s26, %s27
    %p41 = scmp.eq.s32.totalorder %s19, 1
    %p42 = por %p40, %p41
    %p44 = scmp.ne.s32.totalorder %s27, %s43
    %p45 = scmp.eq.s32.totalorder %s19, 0
    %p46 = por %p44, %p45
    %s48 = sadd.s32 %s47, 1
    %p51 = scmp.eq.s32.totalorder %s13, 1
    %p52 = scmp.ne.s32.totalorder %s47, %s49
    %p53 = scmp.eq.s32.totalorder %s13, 0
    %p54 = por %p52, %p53
    %p55 = scmp.ne.s32.totalorder %s47, %s49
    %p56 = scmp.eq.s32.totalorder %s18, 1
    %p57 = por %p55, %p56
    %p58 = scmp.ne.s32.totalorder %s49, %s50
    %p59 = scmp.eq.s32.totalorder %s18, 0
    %p60 = por %p58, %p59
    %p61 = scmp.ne.s32.totalorder %s49, %s50
    %p62 = scmp.eq.s32.totalorder %s19, 1
    %p63 = por %p61, %p62
    %p65 = scmp.ne.s32.totalorder %s50, %s64
    %p66 = scmp.eq.s32.totalorder %s19, 0
    %p67 = por %p65, %p66
    %s69 = sadd.s32 %s68, 1
    %p72 = scmp.eq.s32.totalorder %s13, 1
    %p73 = scmp.ne.s32.totalorder %s68, %s70
    %p74 = scmp.eq.s32.totalorder %s13, 0
    %p75 = por %p73, %p74
    %p76 = scmp.ne.s32.totalorder %s68, %s70
    %p77 = scmp.eq.s32.totalorder %s18, 1
    %p78 = por %p76, %p77
    %p79 = scmp.ne.s32.totalorder %s70, %s71
    %p80 = scmp.eq.s32.totalorder %s18, 0
    %p81 = por %p79, %p80
    %p82 = scmp.ne.s32.totalorder %s70, %s71
    %p83 = scmp.eq.s32.totalorder %s19, 1
    %p84 = por %p82, %p83
    %p86 = scmp.ne.s32.totalorder %s71, %s85
    %p87 = scmp.eq.s32.totalorder %s19, 0
    %p88 = por %p86, %p87
    %s90 = sadd.s32 %s89, 1
    %p93 = scmp.eq.s32.totalorder %s13, 1
    %p94 = scmp.ne.s32.totalorder %s89, %s91
    %p95 = scmp.eq.s32.totalorder %s13, 0
    %p96 = por %p94, %p95
    %p97 = scmp.ne.s32.totalorder %s89, %s91
    %p98 = scmp.eq.s32.totalorder %s18, 1
    %p99 = por %p97, %p98
    %p100 = scmp.ne.s32.totalorder %s91, %s92
    %p101 = scmp.eq.s32.totalorder %s18, 0
    %p102 = por %p100, %p101
    %p103 = scmp.ne.s32.totalorder %s91, %s92
    %p104 = scmp.eq.s32.totalorder %s19, 1
    %p105 = por %p103, %p104
    %p107 = scmp.ne.s32.totalorder %s92, %s106
    %p108 = scmp.eq.s32.totalorder %s19, 0
    %p109 = por %p107, %p108
    %s111 = sadd.s32 %s110, 1
    %p114 = scmp.eq.s32.totalorder %s13, 1
    %p115 = scmp.ne.s32.totalorder %s110, %s112
    %p116 = scmp.eq.s32.totalorder %s13, 0
    %p117 = por %p115, %p116
    %p118 = scmp.ne.s32.totalorder %s110, %s112
    %p119 = scmp.eq.s32.totalorder %s18, 1
    %p120 = por %p118, %p119
    %p121 = scmp.ne.s32.totalorder %s112, %s113
    %p122 = scmp.eq.s32.totalorder %s18, 0
    %p123 = por %p121, %p122
    %p124 = scmp.ne.s32.totalorder %s112, %s113
    %p125 = scmp.eq.s32.totalorder %s19, 1
    %p126 = por %p124, %p125
    %p128 = scmp.ne.s32.totalorder %s113, %s127
    %p129 = scmp.eq.s32.totalorder %s19, 0
    %p130 = por %p128, %p129
    %s132 = sadd.s32 %s131, 1
    %p135 = scmp.eq.s32.totalorder %s13, 1
    %p136 = scmp.ne.s32.totalorder %s131, %s133
    %p137 = scmp.eq.s32.totalorder %s13, 0
    %p138 = por %p136, %p137
    %p139 = scmp.ne.s32.totalorder %s131, %s133
    %p140 = scmp.eq.s32.totalorder %s18, 1
    %p141 = por %p139, %p140
    %p142 = scmp.ne.s32.totalorder %s133, %s134
    %p143 = scmp.eq.s32.totalorder %s18, 0
    %p144 = por %p142, %p143
    %p145 = scmp.ne.s32.totalorder %s133, %s134
    %p146 = scmp.eq.s32.totalorder %s19, 1
    %p147 = por %p145, %p146
    %p149 = scmp.ne.s32.totalorder %s134, %s148
    %p150 = scmp.eq.s32.totalorder %s19, 0
    %p151 = por %p149, %p150
    %s153 = sadd.s32 %s152, 1
    %p156 = scmp.eq.s32.totalorder %s13, 1
    %p157 = scmp.ne.s32.totalorder %s152, %s154
    %p158 = scmp.eq.s32.totalorder %s13, 0
    %p159 = por %p157, %p158
    %p160 = scmp.ne.s32.totalorder %s152, %s154
    %p161 = scmp.eq.s32.totalorder %s18, 1
    %p162 = por %p160, %p161
    %p163 = scmp.ne.s32.totalorder %s154, %s155
    %p164 = scmp.eq.s32.totalorder %s18, 0
    %p165 = por %p163, %p164
    %p166 = scmp.ne.s32.totalorder %s154, %s155
    %p167 = scmp.eq.s32.totalorder %s19, 1
    %p168 = por %p166, %p167
    %p170 = scmp.ne.s32.totalorder %s155, %s169
    %p171 = scmp.eq.s32.totalorder %s19, 0
    %p172 = por %p170, %p171
    %s173 = ssub.s32 %s13, %s20
    %p174 = scmp.eq.s32.totalorder %s173, 0
    %s176 = sadd.s32 %s175, 1
    %s177 = scalar_select %p174, %s175, %s176
    %p180 = pneg %p174
    %p181 = scmp.eq.s32.totalorder %s13, 1
    %p182 = por %p180, %p181
    %p183 = scmp.ne.s32.totalorder %s175, %s178
    %p184 = scmp.eq.s32.totalorder %s13, 0
    %p185 = por %p183, %p184
    %p186 = scmp.ne.s32.totalorder %s175, %s178
    %p187 = scmp.eq.s32.totalorder %s18, 1
    %p188 = por %p186, %p187
    %p189 = scmp.ne.s32.totalorder %s178, %s179
    %p190 = scmp.eq.s32.totalorder %s18, 0
    %p191 = por %p189, %p190
    %p192 = scmp.ne.s32.totalorder %s178, %s179
    %p193 = scmp.eq.s32.totalorder %s19, 1
    %p194 = por %p192, %p193
    %p196 = scmp.ne.s32.totalorder %s179, %s195
    %p197 = scmp.eq.s32.totalorder %s19, 0
    %p198 = por %p196, %p197
    %p199 = scmp.le.s32.totalorder 1, %s13
    %p200 = scmp.lt.s32.totalorder %s13, 3
    %p201 = pnand %p199, %p200
    %p202 = pneg %p201
    // Predicated region
    $region9: #{discriminator_wgan_forward.1} parent=5 // pred_check
      _
    $region10: #{discriminator_wgan_forward.1} parent=5 // pred_check_branch
      %204 = sbr.rel (%p201) target = $region12
    $region11: #{discriminator_wgan_forward.1} parent=5 // pred_region
      %s205 = ssub.s32 %s13, 1
      // Predicated region
      $region13: #{discriminator_wgan_forward.1} parent=11 // pred_check
        %p206 = pneg %p60
      $region14: #{discriminator_wgan_forward.1} parent=11 // pred_check_branch
        %208 = sbr.rel (%p206) target = $region16
      $region15: #{discriminator_wgan_forward.1} parent=11 // pred_region
        _
      $region16: #{discriminator_wgan_forward.1} parent=11 // pred_fallthru
        _
      // Predicated region
      $region17: #{discriminator_wgan_forward.1} parent=11 // pred_check
        %p209 = pneg %p81
      $region18: #{discriminator_wgan_forward.1} parent=11 // pred_check_branch
        %211 = sbr.rel (%p209) target = $region20
      $region19: #{discriminator_wgan_forward.1} parent=11 // pred_region
        _
      $region20: #{discriminator_wgan_forward.1} parent=11 // pred_fallthru
        _
      // Predicated region
      $region21: #{discriminator_wgan_forward.1} parent=11 // pred_check
        %p212 = pneg %p102
      $region22: #{discriminator_wgan_forward.1} parent=11 // pred_check_branch
        %214 = sbr.rel (%p212) target = $region24
      $region23: #{discriminator_wgan_forward.1} parent=11 // pred_region
        _
      $region24: #{discriminator_wgan_forward.1} parent=11 // pred_fallthru
        _
      // Predicated region
      $region25: #{discriminator_wgan_forward.1} parent=11 // pred_check
        %p215 = pneg %p123
      $region26: #{discriminator_wgan_forward.1} parent=11 // pred_check_branch
        %217 = sbr.rel (%p215) target = $region28
      $region27: #{discriminator_wgan_forward.1} parent=11 // pred_region
        _
      $region28: #{discriminator_wgan_forward.1} parent=11 // pred_fallthru
        _
      // Predicated region
      $region29: #{discriminator_wgan_forward.1} parent=11 // pred_check
        %p218 = pneg %p144
      $region30: #{discriminator_wgan_forward.1} parent=11 // pred_check_branch
        %220 = sbr.rel (%p218) target = $region32
      $region31: #{discriminator_wgan_forward.1} parent=11 // pred_region
        _
      $region32: #{discriminator_wgan_forward.1} parent=11 // pred_fallthru
        _
      // Predicated region
      $region33: #{discriminator_wgan_forward.1} parent=11 // pred_check
        %p221 = pneg %p165
      $region34: #{discriminator_wgan_forward.1} parent=11 // pred_check_branch
        %223 = sbr.rel (%p221) target = $region36
      $region35: #{discriminator_wgan_forward.1} parent=11 // pred_region
        _
      $region36: #{discriminator_wgan_forward.1} parent=11 // pred_fallthru
        _
    $region12: #{discriminator_wgan_forward.1} parent=5 // pred_fallthru
      _
    %p224 = scmp.lt.s32.totalorder %s13, 2
    // Predicated region
    $region37: #{discriminator_wgan_forward.1} parent=5 // pred_check
      %p225 = pneg %p224
    $region38: #{discriminator_wgan_forward.1} parent=5 // pred_check_branch
      %227 = sbr.rel (%p225) target = $region40
    $region39: #{discriminator_wgan_forward.1} parent=5 // pred_region
      // Predicated region
      $region41: #{discriminator_wgan_forward.1} parent=39 // pred_check
        %p228 = pneg %p33
      $region42: #{discriminator_wgan_forward.1} parent=39 // pred_check_branch
        %230 = sbr.rel (%p228) target = $region44
      $region43: #{discriminator_wgan_forward.1} parent=39 // pred_region
        %p231 = scmp.lt.s32.totalorder %s13, 1
        %s232 = scalar_select %p231, %s13, 1
        %s233 = smul.addr %s232, 25
        %s234 = smul.addr %s233, 4
        %s235 = scalar_lea.vmem %s0, %s234
      $region44: #{discriminator_wgan_forward.1} parent=39 // pred_fallthru
        _
    $region40: #{discriminator_wgan_forward.1} parent=5 // pred_fallthru
      _
    %p236 = scmp.le.s32.totalorder 1, %s13
    %p237 = scmp.lt.s32.totalorder %s13, 3
    %p238 = pnand %p236, %p237
    %p239 = pneg %p238
    // Predicated region
    $region45: #{discriminator_wgan_forward.1} parent=5 // pred_check
      _
    $region46: #{discriminator_wgan_forward.1} parent=5 // pred_check_branch
      %241 = sbr.rel (%p238) target = $region48
    $region47: #{discriminator_wgan_forward.1} parent=5 // pred_region
      %s242 = ssub.s32 %s13, 1
      %p243 = scmp.lt.s32.totalorder %s18, 1
      %s244 = scalar_select %p243, %s18, 1
      %s245 = smul.addr %s244, 25
      %s246 = smul.addr %s245, 4
      %s247 = scalar_lea.vmem %s0, %s246
      %p248 = pneg %p39
      %p249 = pneg %p36
      %p250 = pneg %p60
      %p251 = pneg %p57
      %p252 = pneg %p81
      %p253 = pneg %p78
      %p254 = pneg %p102
      %p255 = pneg %p99
      %p256 = pneg %p123
      %p257 = pneg %p120
      %p258 = pneg %p144
      %p259 = pneg %p141
      %p260 = pneg %p165
      %p261 = pneg %p162
      %p262 = pneg %p191
      %p263 = pneg %p188
      %p264 = scmp.lt.s32.totalorder %s18, 1
      %s265 = scalar_select %p264, %s18, 1
      %s266 = scalar_lea.vmem %s7, %s265
      %p267 = scmp.lt.s32.totalorder %s18, 1
      %s268 = scalar_select %p267, %s18, 1
      %s269 = smul.addr %s268, 25
      %s270 = smul.addr %s269, 4
      %s271 = scalar_lea.vmem %s0, %s270
      %p272 = scmp.lt.s32.totalorder %s18, 1
      %s273 = scalar_select %p272, %s18, 1
      %s274 = scalar_lea.vmem %s7, %s273
      %v276 = vld [vmem:[%s271] sm:$0xf]
      %v277 = vld [vmem:[%s271 + $0x4] sm:$0xf]
      %v278 = vld [vmem:[%s271 + $0x8] sm:$0xf]
      %v279 = vld [vmem:[%s271 + $0xc] sm:$0xf]
      %v280 = vld [vmem:[%s271 + $0x10] sm:$0xf]
      %v281 = vld [vmem:[%s271 + $0x14] sm:$0xf]
      %v282 = vld [vmem:[%s271 + $0x18] sm:$0xf]
      %v283 = vld [vmem:[%s271 + $0x1c] sm:$0xf]
      %v284 = vld [vmem:[%s271 + $0x20] sm:$0xf]
      %v285 = vld [vmem:[%s271 + $0x24] sm:$0xf]
      %v286 = vld [vmem:[%s271 + $0x28] sm:$0xf]
      %v287 = vld [vmem:[%s271 + $0x2c] sm:$0xf]
      %v288 = vld [vmem:[%s271 + $0x30] sm:$0xf]
      %v289 = vld [vmem:[%s271 + $0x34] sm:$0xf]
      %v290 = vld [vmem:[%s271 + $0x38] sm:$0xf]
      %v291 = vld [vmem:[%s271 + $0x3c] sm:$0xf]
      %v292 = vld [vmem:[%s271 + $0x40] sm:$0xf]
      %v293 = vld [vmem:[%s271 + $0x44] sm:$0xf]
      %v294 = vld [vmem:[%s271 + $0x48] sm:$0xf]
      %v295 = vld [vmem:[%s271 + $0x4c] sm:$0xf]
      %v296 = vld [vmem:[%s271 + $0x50] sm:$0xf]
      %v297 = vld [vmem:[%s271 + $0x54] sm:$0xf]
      %v298 = vld [vmem:[%s271 + $0x58] sm:$0xf]
      %v299 = vld [vmem:[%s271 + $0x5c] sm:$0xf]
      %v300 = vld [vmem:[%s271 + $0x60] sm:$0x3]
      %v301 = vld [vmem:[%s1] sm:$0xf]
      %v302 = vld [vmem:[%s1 + $0x4] sm:$0xf]
      %v328 = vunpack.c.l.b16 %v276
      %v329 = vunpack.c.l.b16 %v277
      %v330 = vunpack.c.l.b16 %v278
      %v331 = vunpack.c.l.b16 %v279
      %v332 = vunpack.c.l.b16 %v280
      %v333 = vunpack.c.l.b16 %v281
      %v334 = vunpack.c.l.b16 %v282
      %v335 = vunpack.c.l.b16 %v283
      %v336 = vunpack.c.l.b16 %v284
      %v337 = vunpack.c.l.b16 %v285
      %v338 = vunpack.c.l.b16 %v286
      %v339 = vunpack.c.l.b16 %v287
      %v340 = vunpack.c.l.b16 %v288
      %v341 = vunpack.c.l.b16 %v289
      %v342 = vunpack.c.l.b16 %v290
      %v343 = vunpack.c.l.b16 %v291
      %v344 = vunpack.c.l.b16 %v292
      %v345 = vunpack.c.l.b16 %v293
      %v346 = vunpack.c.l.b16 %v294
      %v347 = vunpack.c.l.b16 %v295
      %v348 = vunpack.c.l.b16 %v296
      %v349 = vunpack.c.l.b16 %v297
      %v350 = vunpack.c.l.b16 %v298
      %v351 = vunpack.c.l.b16 %v299
      %v352 = vunpack.c.l.b16 %v300
      %v353 = vpack.c.b16 %v329, %v328
      %v354 = vpack.c.b16 %v331, %v330
      %v355 = vpack.c.b16 %v333, %v332
      %v356 = vpack.c.b16 %v335, %v334
      %v357 = vpack.c.b16 %v337, %v336
      %v358 = vpack.c.b16 %v339, %v338
      %v359 = vpack.c.b16 %v341, %v340
      %v360 = vpack.c.b16 %v343, %v342
      %v361 = vpack.c.b16 %v345, %v344
      %v362 = vpack.c.b16 %v347, %v346
      %v363 = vpack.c.b16 %v349, %v348
      %v364 = vpack.c.b16 %v351, %v350
      %v365 = vpack.c.b16 %v352, %v352
      %v368 = vunpack.c.l.b16 %v301
      %v369 = vunpack.c.l.b16 %v302
      %v370 = vpack.c.b16 %v369, %v368
      %vm372 = vcmask 130048
      %v374 = vsel %vm372, %v353, 0
      %v377 = vsel %vm372, %v354, 0
      %v380 = vsel %vm372, %v355, 0
      %v383 = vsel %vm372, %v356, 0
      %v386 = vsel %vm372, %v357, 0
      %v389 = vsel %vm372, %v358, 0
      %v392 = vsel %vm372, %v359, 0
      %v395 = vsel %vm372, %v360, 0
      %v398 = vsel %vm372, %v361, 0
      %v401 = vsel %vm372, %v362, 0
      %v404 = vsel %vm372, %v363, 0
      %v407 = vsel %vm372, %v364, 0
      %v410 = vsel %vm372, %v365, 0
      %412 = vmatprep.subr.bf16.mxu0 0
      %413 = vmatpush1.bf16.msra.mxu0 0
      %414 = vmatprep.subr.bf16.mxu0 0
      %415 = vmatpush1.bf16.msra.mxu0 0
      %416 = vmatprep.subr.bf16.mxu0 0
      %417 = vmatpush1.bf16.msra.mxu0 0
      %418 = vmatprep.subr.bf16.mxu0 0
      %419 = vmatpush1.bf16.msra.mxu0 0
      %420 = vmatprep.subr.bf16.mxu0 0
      %421 = vmatpush1.bf16.msra.mxu0 0
      %422 = vmatprep.subr.bf16.mxu0 0
      %423 = vmatpush1.bf16.msra.mxu0 0
      %424 = vmatprep.subr.bf16.mxu0 0
      %425 = vmatpush1.bf16.msra.mxu0 0
      %426 = vmatprep.subr.bf16.mxu0 0
      %427 = vmatpush1.bf16.msra.mxu0 %v370
      %428 = vmatprep.subr.bf16.mxu0 0
      %429 = vmatpush2.bf16.msra.mxu0 0
      %430 = vmatprep.subr.bf16.mxu0 0
      %431 = vmatpush2.bf16.msra.mxu0 0
      %432 = vmatprep.subr.bf16.mxu0 0
      %433 = vmatpush2.bf16.msra.mxu0 0
      %434 = vmatprep.subr.bf16.mxu0 0
      %435 = vmatpush2.bf16.msra.mxu0 0
      %436 = vmatprep.subr.bf16.mxu0 0
      %437 = vmatpush2.bf16.msra.mxu0 0
      %438 = vmatprep.subr.bf16.mxu0 0
      %439 = vmatpush2.bf16.msra.mxu0 0
      %440 = vmatprep.subr.bf16.mxu0 0
      %441 = vmatpush2.bf16.msra.mxu0 0
      %442 = vmatprep.subr.bf16.mxu0 0
      %443 = vmatpush2.bf16.msra.mxu0 0
      %444 = vmatprep.mubr.bf16.mxu0 0
      %445 = vmatmul.mubr.bf16.gmra.mxu0 %v374
      %v446 = vpop.f32.mrf.mxu0
      %v447 = vadd.f32 0.0, %v446
      %v448 = vpop.f32.mrf.mxu0
      %v449 = vpop.f32.mrf.mxu0
      %v450 = vadd.f32 0.0, %v449
      %v451 = vpop.f32.mrf.mxu0
      %452 = vmatprep.mubr.bf16.mxu0 0
      %453 = vmatmul.mubr.bf16.gmra.mxu0 %v377
      %v454 = vpop.f32.mrf.mxu0
      %v455 = vadd.f32 0.0, %v454
      %v456 = vpop.f32.mrf.mxu0
      %v457 = vpop.f32.mrf.mxu0
      %v458 = vadd.f32 0.0, %v457
      %v459 = vpop.f32.mrf.mxu0
      %460 = vmatprep.mubr.bf16.mxu0 0
      %461 = vmatmul.mubr.bf16.gmra.mxu0 %v380
      %v462 = vpop.f32.mrf.mxu0
      %v463 = vadd.f32 0.0, %v462
      %v464 = vpop.f32.mrf.mxu0
      %v465 = vpop.f32.mrf.mxu0
      %v466 = vadd.f32 0.0, %v465
      %v467 = vpop.f32.mrf.mxu0
      %468 = vmatprep.mubr.bf16.mxu0 0
      %469 = vmatmul.mubr.bf16.gmra.mxu0 %v383
      %v470 = vpop.f32.mrf.mxu0
      %v471 = vadd.f32 0.0, %v470
      %v472 = vpop.f32.mrf.mxu0
      %v473 = vpop.f32.mrf.mxu0
      %v474 = vadd.f32 0.0, %v473
      %v475 = vpop.f32.mrf.mxu0
      %476 = vmatprep.mubr.bf16.mxu0 0
      %477 = vmatmul.mubr.bf16.gmra.mxu0 %v386
      %v478 = vpop.f32.mrf.mxu0
      %v479 = vadd.f32 0.0, %v478
      %v480 = vpop.f32.mrf.mxu0
      %v481 = vpop.f32.mrf.mxu0
      %v482 = vadd.f32 0.0, %v481
      %v483 = vpop.f32.mrf.mxu0
      %484 = vmatprep.mubr.bf16.mxu0 0
      %485 = vmatmul.mubr.bf16.gmra.mxu0 %v389
      %v486 = vpop.f32.mrf.mxu0
      %v487 = vadd.f32 0.0, %v486
      %v488 = vpop.f32.mrf.mxu0
      %v489 = vpop.f32.mrf.mxu0
      %v490 = vadd.f32 0.0, %v489
      %v491 = vpop.f32.mrf.mxu0
      %492 = vmatprep.mubr.bf16.mxu0 0
      %493 = vmatmul.mubr.bf16.gmra.mxu0 %v392
      %v494 = vpop.f32.mrf.mxu0
      %v495 = vadd.f32 0.0, %v494
      %v496 = vpop.f32.mrf.mxu0
      %v497 = vpop.f32.mrf.mxu0
      %v498 = vadd.f32 0.0, %v497
      %v499 = vpop.f32.mrf.mxu0
      %500 = vmatprep.mubr.bf16.mxu0 0
      %501 = vmatmul.mubr.bf16.gmra.mxu0 %v395
      %v502 = vpop.f32.mrf.mxu0
      %v503 = vadd.f32 0.0, %v502
      %v504 = vpop.f32.mrf.mxu0
      %v505 = vpop.f32.mrf.mxu0
      %v506 = vadd.f32 0.0, %v505
      %v507 = vpop.f32.mrf.mxu0
      %508 = vmatprep.mubr.bf16.mxu0 0
      %509 = vmatmul.mubr.bf16.gmra.mxu0 %v398
      %v510 = vpop.f32.mrf.mxu0
      %v511 = vadd.f32 0.0, %v510
      %v512 = vpop.f32.mrf.mxu0
      %v513 = vpop.f32.mrf.mxu0
      %v514 = vadd.f32 0.0, %v513
      %v515 = vpop.f32.mrf.mxu0
      %516 = vmatprep.mubr.bf16.mxu0 0
      %517 = vmatmul.mubr.bf16.gmra.mxu0 %v401
      %v518 = vpop.f32.mrf.mxu0
      %v519 = vadd.f32 0.0, %v518
      %v520 = vpop.f32.mrf.mxu0
      %v521 = vpop.f32.mrf.mxu0
      %v522 = vadd.f32 0.0, %v521
      %v523 = vpop.f32.mrf.mxu0
      %524 = vmatprep.mubr.bf16.mxu0 0
      %525 = vmatmul.mubr.bf16.gmra.mxu0 %v404
      %v526 = vpop.f32.mrf.mxu0
      %v527 = vadd.f32 0.0, %v526
      %v528 = vpop.f32.mrf.mxu0
      %v529 = vpop.f32.mrf.mxu0
      %v530 = vadd.f32 0.0, %v529
      %v531 = vpop.f32.mrf.mxu0
      %532 = vmatprep.mubr.bf16.mxu0 0
      %533 = vmatmul.mubr.bf16.gmra.mxu0 %v407
      %v534 = vpop.f32.mrf.mxu0
      %v535 = vadd.f32 0.0, %v534
      %v536 = vpop.f32.mrf.mxu0
      %v537 = vpop.f32.mrf.mxu0
      %v538 = vadd.f32 0.0, %v537
      %v539 = vpop.f32.mrf.mxu0
      %540 = vmatprep.mubr.bf16.mxu0 0
      %541 = vmatmul.mubr.bf16.gmra.mxu0 %v410
      %v542 = vpop.f32.mrf.mxu0
      %v543 = vadd.f32 0.0, %v542
      %v544 = vpop.f32.mrf.mxu0
      %v545 = vpop.f32.mrf.mxu0
      %v546 = vpop.f32.mrf.mxu0
      %547 = vdwg.mxu0
      %vm548 = vcmp.ge.f32.partialorder %v447, 0.0
      %vm549 = vcmp.ge.f32.partialorder %v450, 0.0
      %vm550 = vcmp.ge.f32.partialorder %v455, 0.0
      %vm551 = vcmp.ge.f32.partialorder %v458, 0.0
      %vm552 = vcmp.ge.f32.partialorder %v463, 0.0
      %vm553 = vcmp.ge.f32.partialorder %v466, 0.0
      %vm554 = vcmp.ge.f32.partialorder %v471, 0.0
      %vm555 = vcmp.ge.f32.partialorder %v474, 0.0
      %vm556 = vcmp.ge.f32.partialorder %v479, 0.0
      %vm557 = vcmp.ge.f32.partialorder %v482, 0.0
      %vm558 = vcmp.ge.f32.partialorder %v487, 0.0
      %vm559 = vcmp.ge.f32.partialorder %v490, 0.0
      %vm560 = vcmp.ge.f32.partialorder %v495, 0.0
      %vm561 = vcmp.ge.f32.partialorder %v498, 0.0
      %vm562 = vcmp.ge.f32.partialorder %v503, 0.0
      %vm563 = vcmp.ge.f32.partialorder %v506, 0.0
      %vm564 = vcmp.ge.f32.partialorder %v511, 0.0
      %vm565 = vcmp.ge.f32.partialorder %v514, 0.0
      %vm566 = vcmp.ge.f32.partialorder %v519, 0.0
      %vm567 = vcmp.ge.f32.partialorder %v522, 0.0
      %vm568 = vcmp.ge.f32.partialorder %v527, 0.0
      %vm569 = vcmp.ge.f32.partialorder %v530, 0.0
      %vm570 = vcmp.ge.f32.partialorder %v535, 0.0
      %vm571 = vcmp.ge.f32.partialorder %v538, 0.0
      %vm572 = vcmp.ge.f32.partialorder %v543, 0.0
      %v573 = vmul.f32 %v447, 0.2
      %v574 = vmul.f32 %v450, 0.2
      %v575 = vmul.f32 %v455, 0.2
      %v576 = vmul.f32 %v458, 0.2
      %v577 = vmul.f32 %v463, 0.2
      %v578 = vmul.f32 %v466, 0.2
      %v579 = vmul.f32 %v471, 0.2
      %v580 = vmul.f32 %v474, 0.2
      %v581 = vmul.f32 %v479, 0.2
      %v582 = vmul.f32 %v482, 0.2
      %v583 = vmul.f32 %v487, 0.2
      %v584 = vmul.f32 %v490, 0.2
      %v585 = vmul.f32 %v495, 0.2
      %v586 = vmul.f32 %v498, 0.2
      %v587 = vmul.f32 %v503, 0.2
      %v588 = vmul.f32 %v506, 0.2
      %v589 = vmul.f32 %v511, 0.2
      %v590 = vmul.f32 %v514, 0.2
      %v591 = vmul.f32 %v519, 0.2
      %v592 = vmul.f32 %v522, 0.2
      %v593 = vmul.f32 %v527, 0.2
      %v594 = vmul.f32 %v530, 0.2
      %v595 = vmul.f32 %v535, 0.2
      %v596 = vmul.f32 %v538, 0.2
      %v597 = vmul.f32 %v543, 0.2
      %v598 = vsel %vm548, %v447, %v573
      %v599 = vsel %vm549, %v450, %v574
      %v600 = vsel %vm550, %v455, %v575
      %v601 = vsel %vm551, %v458, %v576
      %v602 = vsel %vm552, %v463, %v577
      %v603 = vsel %vm553, %v466, %v578
      %v604 = vsel %vm554, %v471, %v579
      %v605 = vsel %vm555, %v474, %v580
      %v606 = vsel %vm556, %v479, %v581
      %v607 = vsel %vm557, %v482, %v582
      %v608 = vsel %vm558, %v487, %v583
      %v609 = vsel %vm559, %v490, %v584
      %v610 = vsel %vm560, %v495, %v585
      %v611 = vsel %vm561, %v498, %v586
      %v612 = vsel %vm562, %v503, %v587
      %v613 = vsel %vm563, %v506, %v588
      %v614 = vsel %vm564, %v511, %v589
      %v615 = vsel %vm565, %v514, %v590
      %v616 = vsel %vm566, %v519, %v591
      %v617 = vsel %vm567, %v522, %v592
      %v618 = vsel %vm568, %v527, %v593
      %v619 = vsel %vm569, %v530, %v594
      %v620 = vsel %vm570, %v535, %v595
      %v621 = vsel %vm571, %v538, %v596
      %v622 = vsel %vm572, %v543, %v597
      %v623 = vpack.c.bf16 %v599, %v598
      %v624 = vpack.c.bf16 %v601, %v600
      %v625 = vpack.c.bf16 %v603, %v602
      %v626 = vpack.c.bf16 %v605, %v604
      %v627 = vpack.c.bf16 %v607, %v606
      %v628 = vpack.c.bf16 %v609, %v608
      %v629 = vpack.c.bf16 %v611, %v610
      %v630 = vpack.c.bf16 %v613, %v612
      %v631 = vpack.c.bf16 %v615, %v614
      %v632 = vpack.c.bf16 %v617, %v616
      %v633 = vpack.c.bf16 %v619, %v618
      %v634 = vpack.c.bf16 %v621, %v620
      %v635 = vpack.c.bf16 %v622, %v622
      %v636 = vld [vmem:[%s2] sm:$0xff]
      %v637 = vld [vmem:[%s2 + $0x8] sm:$0xff]
      %v638 = vld [vmem:[%s2 + $0x10] sm:$0xff]
      %v639 = vld [vmem:[%s2 + $0x18] sm:$0xff]
      %v640 = vld [vmem:[%s2 + $0x20] sm:$0xff]
      %v641 = vld [vmem:[%s2 + $0x28] sm:$0xff]
      %v642 = vld [vmem:[%s2 + $0x30] sm:$0xff]
      %v643 = vld [vmem:[%s2 + $0x38] sm:$0xff]
      %v644 = vld [vmem:[%s2 + $0x40] sm:$0xff]
      %v645 = vld [vmem:[%s2 + $0x48] sm:$0xff]
      %v646 = vld [vmem:[%s2 + $0x50] sm:$0xff]
      %v647 = vld [vmem:[%s2 + $0x58] sm:$0xff]
      %v648 = vld [vmem:[%s2 + $0x60] sm:$0xff]
      %v649 = vld [vmem:[%s2 + $0x68] sm:$0xff]
      %v650 = vld [vmem:[%s2 + $0x70] sm:$0xff]
      %v651 = vld [vmem:[%s2 + $0x78] sm:$0xff]
      %v652 = vld [vmem:[%s2 + $0x80] sm:$0xff]
      %v653 = vld [vmem:[%s2 + $0x88] sm:$0xff]
      %v654 = vld [vmem:[%s2 + $0x90] sm:$0xff]
      %v655 = vld [vmem:[%s2 + $0x98] sm:$0xff]
      %v656 = vld [vmem:[%s2 + $0xa0] sm:$0xff]
      %v657 = vld [vmem:[%s2 + $0xa8] sm:$0xff]
      %v658 = vld [vmem:[%s2 + $0xb0] sm:$0xff]
      %v659 = vld [vmem:[%s2 + $0xb8] sm:$0xff]
      %v660 = vld [vmem:[%s2 + $0xc0] sm:$0xff]
      %v661 = vld [vmem:[%s2 + $0xc8] sm:$0xff]
      %v662 = vld [vmem:[%s2 + $0xd0] sm:$0xff]
      %v663 = vld [vmem:[%s2 + $0xd8] sm:$0xff]
      %v664 = vld [vmem:[%s2 + $0xe0] sm:$0xff]
      %v665 = vld [vmem:[%s2 + $0xe8] sm:$0xff]
      %v666 = vld [vmem:[%s2 + $0xf0] sm:$0xff]
      %v667 = vld [vmem:[%s2 + $0xf8] sm:$0xff]
      %v668 = vld [vmem:[%s2 + $0x100] sm:$0xff]
      %v669 = vld [vmem:[%s2 + $0x108] sm:$0xff]
      %v670 = vld [vmem:[%s2 + $0x110] sm:$0xff]
      %v671 = vld [vmem:[%s2 + $0x118] sm:$0xff]
      %v672 = vld [vmem:[%s2 + $0x120] sm:$0xff]
      %v673 = vld [vmem:[%s2 + $0x128] sm:$0xff]
      %v674 = vld [vmem:[%s2 + $0x130] sm:$0xff]
      %v675 = vld [vmem:[%s2 + $0x138] sm:$0xff]
      %v676 = vld [vmem:[%s2 + $0x140] sm:$0xff]
      %v677 = vld [vmem:[%s2 + $0x148] sm:$0xff]
      %v678 = vld [vmem:[%s2 + $0x150] sm:$0xff]
      %v679 = vld [vmem:[%s2 + $0x158] sm:$0xff]
      %v680 = vld [vmem:[%s2 + $0x160] sm:$0xff]
      %v681 = vld [vmem:[%s2 + $0x168] sm:$0xff]
      %v682 = vld [vmem:[%s2 + $0x170] sm:$0xff]
      %v683 = vld [vmem:[%s2 + $0x178] sm:$0xff]
      %v684 = vld [vmem:[%s2 + $0x180] sm:$0xff]
      %v685 = vld [vmem:[%s2 + $0x188] sm:$0xff]
      %v686 = vld [vmem:[%s2 + $0x190] sm:$0xff]
      %v687 = vld [vmem:[%s2 + $0x198] sm:$0xff]
      %v688 = vld [vmem:[%s2 + $0x1a0] sm:$0xff]
      %v689 = vld [vmem:[%s2 + $0x1a8] sm:$0xff]
      %v690 = vld [vmem:[%s2 + $0x1b0] sm:$0xff]
      %v691 = vld [vmem:[%s2 + $0x1b8] sm:$0xff]
      %v692 = vld [vmem:[%s2 + $0x1c0] sm:$0xff]
      %v693 = vld [vmem:[%s2 + $0x1c8] sm:$0xff]
      %v694 = vld [vmem:[%s2 + $0x1d0] sm:$0xff]
      %v695 = vld [vmem:[%s2 + $0x1d8] sm:$0xff]
      %v696 = vld [vmem:[%s2 + $0x1e0] sm:$0xff]
      %v697 = vld [vmem:[%s2 + $0x1e8] sm:$0xff]
      %v698 = vld [vmem:[%s2 + $0x1f0] sm:$0xff]
      %v699 = vld [vmem:[%s2 + $0x1f8] sm:$0xff]
      %v700 = vld [vmem:[%s2 + $0x200] sm:$0xff]
      %v701 = vld [vmem:[%s2 + $0x208] sm:$0xff]
      %v702 = vld [vmem:[%s2 + $0x210] sm:$0xff]
      %v703 = vld [vmem:[%s2 + $0x218] sm:$0xff]
      %v704 = vld [vmem:[%s2 + $0x220] sm:$0xff]
      %v705 = vld [vmem:[%s2 + $0x228] sm:$0xff]
      %v706 = vld [vmem:[%s2 + $0x230] sm:$0xff]
      %v707 = vld [vmem:[%s2 + $0x238] sm:$0xff]
      %v708 = vld [vmem:[%s2 + $0x240] sm:$0xff]
      %v709 = vld [vmem:[%s2 + $0x248] sm:$0xff]
      %v710 = vld [vmem:[%s2 + $0x250] sm:$0xff]
      %v711 = vld [vmem:[%s2 + $0x258] sm:$0xff]
      %v712 = vld [vmem:[%s2 + $0x260] sm:$0xff]
      %v713 = vld [vmem:[%s2 + $0x268] sm:$0xff]
      %v714 = vld [vmem:[%s2 + $0x270] sm:$0xff]
      %v715 = vld [vmem:[%s2 + $0x278] sm:$0xff]
      %v716 = vld [vmem:[%s2 + $0x280] sm:$0xff]
      %v717 = vld [vmem:[%s2 + $0x288] sm:$0xff]
      %v718 = vld [vmem:[%s2 + $0x290] sm:$0xff]
      %v719 = vld [vmem:[%s2 + $0x298] sm:$0xff]
      %v720 = vld [vmem:[%s2 + $0x2a0] sm:$0xff]
      %v721 = vld [vmem:[%s2 + $0x2a8] sm:$0xff]
      %v722 = vld [vmem:[%s2 + $0x2b0] sm:$0xff]
      %v723 = vld [vmem:[%s2 + $0x2b8] sm:$0xff]
      %v724 = vld [vmem:[%s2 + $0x2c0] sm:$0xff]
      %v725 = vld [vmem:[%s2 + $0x2c8] sm:$0xff]
      %v726 = vld [vmem:[%s2 + $0x2d0] sm:$0xff]
      %v727 = vld [vmem:[%s2 + $0x2d8] sm:$0xff]
      %v728 = vld [vmem:[%s2 + $0x2e0] sm:$0xff]
      %v729 = vld [vmem:[%s2 + $0x2e8] sm:$0xff]
      %v730 = vld [vmem:[%s2 + $0x2f0] sm:$0xff]
      %v731 = vld [vmem:[%s2 + $0x2f8] sm:$0xff]
      %v732 = vld [vmem:[%s2 + $0x300] sm:$0xff]
      %v733 = vld [vmem:[%s2 + $0x308] sm:$0xff]
      %v734 = vld [vmem:[%s2 + $0x310] sm:$0xff]
      %v735 = vld [vmem:[%s2 + $0x318] sm:$0xff]
      %v736 = vld [vmem:[%s2 + $0x320] sm:$0xff]
      %v737 = vld [vmem:[%s2 + $0x328] sm:$0xff]
      %v738 = vld [vmem:[%s2 + $0x330] sm:$0xff]
      %v739 = vld [vmem:[%s2 + $0x338] sm:$0xff]
      %v740 = vld [vmem:[%s2 + $0x340] sm:$0xff]
      %v741 = vld [vmem:[%s2 + $0x348] sm:$0xff]
      %v742 = vld [vmem:[%s2 + $0x350] sm:$0xff]
      %v743 = vld [vmem:[%s2 + $0x358] sm:$0xff]
      %v744 = vld [vmem:[%s2 + $0x360] sm:$0xff]
      %v745 = vld [vmem:[%s2 + $0x368] sm:$0xff]
      %v746 = vld [vmem:[%s2 + $0x370] sm:$0xff]
      %v747 = vld [vmem:[%s2 + $0x378] sm:$0xff]
      %v748 = vld [vmem:[%s2 + $0x380] sm:$0xff]
      %v749 = vld [vmem:[%s2 + $0x388] sm:$0xff]
      %v750 = vld [vmem:[%s2 + $0x390] sm:$0xff]
      %v751 = vld [vmem:[%s2 + $0x398] sm:$0xff]
      %v752 = vld [vmem:[%s2 + $0x3a0] sm:$0xff]
      %v753 = vld [vmem:[%s2 + $0x3a8] sm:$0xff]
      %v754 = vld [vmem:[%s2 + $0x3b0] sm:$0xff]
      %v755 = vld [vmem:[%s2 + $0x3b8] sm:$0xff]
      %v756 = vld [vmem:[%s2 + $0x3c0] sm:$0xff]
      %v757 = vld [vmem:[%s2 + $0x3c8] sm:$0xff]
      %v758 = vld [vmem:[%s2 + $0x3d0] sm:$0xff]
      %v759 = vld [vmem:[%s2 + $0x3d8] sm:$0xff]
      %v760 = vld [vmem:[%s2 + $0x3e0] sm:$0xff]
      %v761 = vld [vmem:[%s2 + $0x3e8] sm:$0xff]
      %v762 = vld [vmem:[%s2 + $0x3f0] sm:$0xff]
      %v763 = vld [vmem:[%s2 + $0x3f8] sm:$0xff]
      %v892 = vunpack.c.l.b16 %v636
      %v893 = vunpack.c.h.b16 %v636
      %v894 = vunpack.c.l.b16 %v637
      %v895 = vunpack.c.h.b16 %v637
      %v896 = vunpack.c.l.b16 %v638
      %v897 = vunpack.c.h.b16 %v638
      %v898 = vunpack.c.l.b16 %v639
      %v899 = vunpack.c.h.b16 %v639
      %v900 = vunpack.c.l.b16 %v640
      %v901 = vunpack.c.h.b16 %v640
      %v902 = vunpack.c.l.b16 %v641
      %v903 = vunpack.c.h.b16 %v641
      %v904 = vunpack.c.l.b16 %v642
      %v905 = vunpack.c.h.b16 %v642
      %v906 = vunpack.c.l.b16 %v643
      %v907 = vunpack.c.h.b16 %v643
      %v908 = vunpack.c.l.b16 %v644
      %v909 = vunpack.c.h.b16 %v644
      %v910 = vunpack.c.l.b16 %v645
      %v911 = vunpack.c.h.b16 %v645
      %v912 = vunpack.c.l.b16 %v646
      %v913 = vunpack.c.h.b16 %v646
      %v914 = vunpack.c.l.b16 %v647
      %v915 = vunpack.c.h.b16 %v647
      %v916 = vunpack.c.l.b16 %v648
      %v917 = vunpack.c.h.b16 %v648
      %v918 = vunpack.c.l.b16 %v649
      %v919 = vunpack.c.h.b16 %v649
      %v920 = vunpack.c.l.b16 %v650
      %v921 = vunpack.c.h.b16 %v650
      %v922 = vunpack.c.l.b16 %v651
      %v923 = vunpack.c.h.b16 %v651
      %v924 = vunpack.c.l.b16 %v652
      %v925 = vunpack.c.h.b16 %v652
      %v926 = vunpack.c.l.b16 %v653
      %v927 = vunpack.c.h.b16 %v653
      %v928 = vunpack.c.l.b16 %v654
      %v929 = vunpack.c.h.b16 %v654
      %v930 = vunpack.c.l.b16 %v655
      %v931 = vunpack.c.h.b16 %v655
      %v932 = vunpack.c.l.b16 %v656
      %v933 = vunpack.c.h.b16 %v656
      %v934 = vunpack.c.l.b16 %v657
      %v935 = vunpack.c.h.b16 %v657
      %v936 = vunpack.c.l.b16 %v658
      %v937 = vunpack.c.h.b16 %v658
      %v938 = vunpack.c.l.b16 %v659
      %v939 = vunpack.c.h.b16 %v659
      %v940 = vunpack.c.l.b16 %v660
      %v941 = vunpack.c.h.b16 %v660
      %v942 = vunpack.c.l.b16 %v661
      %v943 = vunpack.c.h.b16 %v661
      %v944 = vunpack.c.l.b16 %v662
      %v945 = vunpack.c.h.b16 %v662
      %v946 = vunpack.c.l.b16 %v663
      %v947 = vunpack.c.h.b16 %v663
      %v948 = vunpack.c.l.b16 %v664
      %v949 = vunpack.c.h.b16 %v664
      %v950 = vunpack.c.l.b16 %v665
      %v951 = vunpack.c.h.b16 %v665
      %v952 = vunpack.c.l.b16 %v666
      %v953 = vunpack.c.h.b16 %v666
      %v954 = vunpack.c.l.b16 %v667
      %v955 = vunpack.c.h.b16 %v667
      %v956 = vunpack.c.l.b16 %v668
      %v957 = vunpack.c.h.b16 %v668
      %v958 = vunpack.c.l.b16 %v669
      %v959 = vunpack.c.h.b16 %v669
      %v960 = vunpack.c.l.b16 %v670
      %v961 = vunpack.c.h.b16 %v670
      %v962 = vunpack.c.l.b16 %v671
      %v963 = vunpack.c.h.b16 %v671
      %v964 = vunpack.c.l.b16 %v672
      %v965 = vunpack.c.h.b16 %v672
      %v966 = vunpack.c.l.b16 %v673
      %v967 = vunpack.c.h.b16 %v673
      %v968 = vunpack.c.l.b16 %v674
      %v969 = vunpack.c.h.b16 %v674
      %v970 = vunpack.c.l.b16 %v675
      %v971 = vunpack.c.h.b16 %v675
      %v972 = vunpack.c.l.b16 %v676
      %v973 = vunpack.c.h.b16 %v676
      %v974 = vunpack.c.l.b16 %v677
      %v975 = vunpack.c.h.b16 %v677
      %v976 = vunpack.c.l.b16 %v678
      %v977 = vunpack.c.h.b16 %v678
      %v978 = vunpack.c.l.b16 %v679
      %v979 = vunpack.c.h.b16 %v679
      %v980 = vunpack.c.l.b16 %v680
      %v981 = vunpack.c.h.b16 %v680
      %v982 = vunpack.c.l.b16 %v681
      %v983 = vunpack.c.h.b16 %v681
      %v984 = vunpack.c.l.b16 %v682
      %v985 = vunpack.c.h.b16 %v682
      %v986 = vunpack.c.l.b16 %v683
      %v987 = vunpack.c.h.b16 %v683
      %v988 = vunpack.c.l.b16 %v684
      %v989 = vunpack.c.h.b16 %v684
      %v990 = vunpack.c.l.b16 %v685
      %v991 = vunpack.c.h.b16 %v685
      %v992 = vunpack.c.l.b16 %v686
      %v993 = vunpack.c.h.b16 %v686
      %v994 = vunpack.c.l.b16 %v687
      %v995 = vunpack.c.h.b16 %v687
      %v996 = vunpack.c.l.b16 %v688
      %v997 = vunpack.c.h.b16 %v688
      %v998 = vunpack.c.l.b16 %v689
      %v999 = vunpack.c.h.b16 %v689
      %v1000 = vunpack.c.l.b16 %v690
      %v1001 = vunpack.c.h.b16 %v690
      %v1002 = vunpack.c.l.b16 %v691
      %v1003 = vunpack.c.h.b16 %v691
      %v1004 = vunpack.c.l.b16 %v692
      %v1005 = vunpack.c.h.b16 %v692
      %v1006 = vunpack.c.l.b16 %v693
      %v1007 = vunpack.c.h.b16 %v693
      %v1008 = vunpack.c.l.b16 %v694
      %v1009 = vunpack.c.h.b16 %v694
      %v1010 = vunpack.c.l.b16 %v695
      %v1011 = vunpack.c.h.b16 %v695
      %v1012 = vunpack.c.l.b16 %v696
      %v1013 = vunpack.c.h.b16 %v696
      %v1014 = vunpack.c.l.b16 %v697
      %v1015 = vunpack.c.h.b16 %v697
      %v1016 = vunpack.c.l.b16 %v698
      %v1017 = vunpack.c.h.b16 %v698
      %v1018 = vunpack.c.l.b16 %v699
      %v1019 = vunpack.c.h.b16 %v699
      %v1020 = vunpack.c.l.b16 %v700
      %v1021 = vunpack.c.h.b16 %v700
      %v1022 = vunpack.c.l.b16 %v701
      %v1023 = vunpack.c.h.b16 %v701
      %v1024 = vunpack.c.l.b16 %v702
      %v1025 = vunpack.c.h.b16 %v702
      %v1026 = vunpack.c.l.b16 %v703
      %v1027 = vunpack.c.h.b16 %v703
      %v1028 = vunpack.c.l.b16 %v704
      %v1029 = vunpack.c.h.b16 %v704
      %v1030 = vunpack.c.l.b16 %v705
      %v1031 = vunpack.c.h.b16 %v705
      %v1032 = vunpack.c.l.b16 %v706
      %v1033 = vunpack.c.h.b16 %v706
      %v1034 = vunpack.c.l.b16 %v707
      %v1035 = vunpack.c.h.b16 %v707
      %v1036 = vunpack.c.l.b16 %v708
      %v1037 = vunpack.c.h.b16 %v708
      %v1038 = vunpack.c.l.b16 %v709
      %v1039 = vunpack.c.h.b16 %v709
      %v1040 = vunpack.c.l.b16 %v710
      %v1041 = vunpack.c.h.b16 %v710
      %v1042 = vunpack.c.l.b16 %v711
      %v1043 = vunpack.c.h.b16 %v711
      %v1044 = vunpack.c.l.b16 %v712
      %v1045 = vunpack.c.h.b16 %v712
      %v1046 = vunpack.c.l.b16 %v713
      %v1047 = vunpack.c.h.b16 %v713
      %v1048 = vunpack.c.l.b16 %v714
      %v1049 = vunpack.c.h.b16 %v714
      %v1050 = vunpack.c.l.b16 %v715
      %v1051 = vunpack.c.h.b16 %v715
      %v1052 = vunpack.c.l.b16 %v716
      %v1053 = vunpack.c.h.b16 %v716
      %v1054 = vunpack.c.l.b16 %v717
      %v1055 = vunpack.c.h.b16 %v717
      %v1056 = vunpack.c.l.b16 %v718
      %v1057 = vunpack.c.h.b16 %v718
      %v1058 = vunpack.c.l.b16 %v719
      %v1059 = vunpack.c.h.b16 %v719
      %v1060 = vunpack.c.l.b16 %v720
      %v1061 = vunpack.c.h.b16 %v720
      %v1062 = vunpack.c.l.b16 %v721
      %v1063 = vunpack.c.h.b16 %v721
      %v1064 = vunpack.c.l.b16 %v722
      %v1065 = vunpack.c.h.b16 %v722
      %v1066 = vunpack.c.l.b16 %v723
      %v1067 = vunpack.c.h.b16 %v723
      %v1068 = vunpack.c.l.b16 %v724
      %v1069 = vunpack.c.h.b16 %v724
      %v1070 = vunpack.c.l.b16 %v725
      %v1071 = vunpack.c.h.b16 %v725
      %v1072 = vunpack.c.l.b16 %v726
      %v1073 = vunpack.c.h.b16 %v726
      %v1074 = vunpack.c.l.b16 %v727
      %v1075 = vunpack.c.h.b16 %v727
      %v1076 = vunpack.c.l.b16 %v728
      %v1077 = vunpack.c.h.b16 %v728
      %v1078 = vunpack.c.l.b16 %v729
      %v1079 = vunpack.c.h.b16 %v729
      %v1080 = vunpack.c.l.b16 %v730
      %v1081 = vunpack.c.h.b16 %v730
      %v1082 = vunpack.c.l.b16 %v731
      %v1083 = vunpack.c.h.b16 %v731
      %v1084 = vunpack.c.l.b16 %v732
      %v1085 = vunpack.c.h.b16 %v732
      %v1086 = vunpack.c.l.b16 %v733
      %v1087 = vunpack.c.h.b16 %v733
      %v1088 = vunpack.c.l.b16 %v734
      %v1089 = vunpack.c.h.b16 %v734
      %v1090 = vunpack.c.l.b16 %v735
      %v1091 = vunpack.c.h.b16 %v735
      %v1092 = vunpack.c.l.b16 %v736
      %v1093 = vunpack.c.h.b16 %v736
      %v1094 = vunpack.c.l.b16 %v737
      %v1095 = vunpack.c.h.b16 %v737
      %v1096 = vunpack.c.l.b16 %v738
      %v1097 = vunpack.c.h.b16 %v738
      %v1098 = vunpack.c.l.b16 %v739
      %v1099 = vunpack.c.h.b16 %v739
      %v1100 = vunpack.c.l.b16 %v740
      %v1101 = vunpack.c.h.b16 %v740
      %v1102 = vunpack.c.l.b16 %v741
      %v1103 = vunpack.c.h.b16 %v741
      %v1104 = vunpack.c.l.b16 %v742
      %v1105 = vunpack.c.h.b16 %v742
      %v1106 = vunpack.c.l.b16 %v743
      %v1107 = vunpack.c.h.b16 %v743
      %v1108 = vunpack.c.l.b16 %v744
      %v1109 = vunpack.c.h.b16 %v744
      %v1110 = vunpack.c.l.b16 %v745
      %v1111 = vunpack.c.h.b16 %v745
      %v1112 = vunpack.c.l.b16 %v746
      %v1113 = vunpack.c.h.b16 %v746
      %v1114 = vunpack.c.l.b16 %v747
      %v1115 = vunpack.c.h.b16 %v747
      %v1116 = vunpack.c.l.b16 %v748
      %v1117 = vunpack.c.h.b16 %v748
      %v1118 = vunpack.c.l.b16 %v749
      %v1119 = vunpack.c.h.b16 %v749
      %v1120 = vunpack.c.l.b16 %v750
      %v1121 = vunpack.c.h.b16 %v750
      %v1122 = vunpack.c.l.b16 %v751
      %v1123 = vunpack.c.h.b16 %v751
      %v1124 = vunpack.c.l.b16 %v752
      %v1125 = vunpack.c.h.b16 %v752
      %v1126 = vunpack.c.l.b16 %v753
      %v1127 = vunpack.c.h.b16 %v753
      %v1128 = vunpack.c.l.b16 %v754
      %v1129 = vunpack.c.h.b16 %v754
      %v1130 = vunpack.c.l.b16 %v755
      %v1131 = vunpack.c.h.b16 %v755
      %v1132 = vunpack.c.l.b16 %v756
      %v1133 = vunpack.c.h.b16 %v756
      %v1134 = vunpack.c.l.b16 %v757
      %v1135 = vunpack.c.h.b16 %v757
      %v1136 = vunpack.c.l.b16 %v758
      %v1137 = vunpack.c.h.b16 %v758
      %v1138 = vunpack.c.l.b16 %v759
      %v1139 = vunpack.c.h.b16 %v759
      %v1140 = vunpack.c.l.b16 %v760
      %v1141 = vunpack.c.h.b16 %v760
      %v1142 = vunpack.c.l.b16 %v761
      %v1143 = vunpack.c.h.b16 %v761
      %v1144 = vunpack.c.l.b16 %v762
      %v1145 = vunpack.c.h.b16 %v762
      %v1146 = vunpack.c.l.b16 %v763
      %v1147 = vunpack.c.h.b16 %v763
      %v1148 = vpack.c.b16 %v894, %v892
      %v1149 = vpack.c.b16 %v895, %v893
      %v1150 = vpack.c.b16 %v898, %v896
      %v1151 = vpack.c.b16 %v899, %v897
      %v1152 = vpack.c.b16 %v902, %v900
      %v1153 = vpack.c.b16 %v903, %v901
      %v1154 = vpack.c.b16 %v906, %v904
      %v1155 = vpack.c.b16 %v907, %v905
      %v1156 = vpack.c.b16 %v910, %v908
      %v1157 = vpack.c.b16 %v911, %v909
      %v1158 = vpack.c.b16 %v914, %v912
      %v1159 = vpack.c.b16 %v915, %v913
      %v1160 = vpack.c.b16 %v918, %v916
      %v1161 = vpack.c.b16 %v919, %v917
      %v1162 = vpack.c.b16 %v922, %v920
      %v1163 = vpack.c.b16 %v923, %v921
      %v1164 = vpack.c.b16 %v926, %v924
      %v1165 = vpack.c.b16 %v927, %v925
      %v1166 = vpack.c.b16 %v930, %v928
      %v1167 = vpack.c.b16 %v931, %v929
      %v1168 = vpack.c.b16 %v934, %v932
      %v1169 = vpack.c.b16 %v935, %v933
      %v1170 = vpack.c.b16 %v938, %v936
      %v1171 = vpack.c.b16 %v939, %v937
      %v1172 = vpack.c.b16 %v942, %v940
      %v1173 = vpack.c.b16 %v943, %v941
      %v1174 = vpack.c.b16 %v946, %v944
      %v1175 = vpack.c.b16 %v947, %v945
      %v1176 = vpack.c.b16 %v950, %v948
      %v1177 = vpack.c.b16 %v951, %v949
      %v1178 = vpack.c.b16 %v954, %v952
      %v1179 = vpack.c.b16 %v955, %v953
      %v1180 = vpack.c.b16 %v958, %v956
      %v1181 = vpack.c.b16 %v959, %v957
      %v1182 = vpack.c.b16 %v962, %v960
      %v1183 = vpack.c.b16 %v963, %v961
      %v1184 = vpack.c.b16 %v966, %v964
      %v1185 = vpack.c.b16 %v967, %v965
      %v1186 = vpack.c.b16 %v970, %v968
      %v1187 = vpack.c.b16 %v971, %v969
      %v1188 = vpack.c.b16 %v974, %v972
      %v1189 = vpack.c.b16 %v975, %v973
      %v1190 = vpack.c.b16 %v978, %v976
      %v1191 = vpack.c.b16 %v979, %v977
      %v1192 = vpack.c.b16 %v982, %v980
      %v1193 = vpack.c.b16 %v983, %v981
      %v1194 = vpack.c.b16 %v986, %v984
      %v1195 = vpack.c.b16 %v987, %v985
      %v1196 = vpack.c.b16 %v990, %v988
      %v1197 = vpack.c.b16 %v991, %v989
      %v1198 = vpack.c.b16 %v994, %v992
      %v1199 = vpack.c.b16 %v995, %v993
      %v1200 = vpack.c.b16 %v998, %v996
      %v1201 = vpack.c.b16 %v999, %v997
      %v1202 = vpack.c.b16 %v1002, %v1000
      %v1203 = vpack.c.b16 %v1003, %v1001
      %v1204 = vpack.c.b16 %v1006, %v1004
      %v1205 = vpack.c.b16 %v1007, %v1005
      %v1206 = vpack.c.b16 %v1010, %v1008
      %v1207 = vpack.c.b16 %v1011, %v1009
      %v1208 = vpack.c.b16 %v1014, %v1012
      %v1209 = vpack.c.b16 %v1015, %v1013
      %v1210 = vpack.c.b16 %v1018, %v1016
      %v1211 = vpack.c.b16 %v1019, %v1017
      %v1212 = vpack.c.b16 %v1022, %v1020
      %v1213 = vpack.c.b16 %v1023, %v1021
      %v1214 = vpack.c.b16 %v1026, %v1024
      %v1215 = vpack.c.b16 %v1027, %v1025
      %v1216 = vpack.c.b16 %v1030, %v1028
      %v1217 = vpack.c.b16 %v1031, %v1029
      %v1218 = vpack.c.b16 %v1034, %v1032
      %v1219 = vpack.c.b16 %v1035, %v1033
      %v1220 = vpack.c.b16 %v1038, %v1036
      %v1221 = vpack.c.b16 %v1039, %v1037
      %v1222 = vpack.c.b16 %v1042, %v1040
      %v1223 = vpack.c.b16 %v1043, %v1041
      %v1224 = vpack.c.b16 %v1046, %v1044
      %v1225 = vpack.c.b16 %v1047, %v1045
      %v1226 = vpack.c.b16 %v1050, %v1048
      %v1227 = vpack.c.b16 %v1051, %v1049
      %v1228 = vpack.c.b16 %v1054, %v1052
      %v1229 = vpack.c.b16 %v1055, %v1053
      %v1230 = vpack.c.b16 %v1058, %v1056
      %v1231 = vpack.c.b16 %v1059, %v1057
      %v1232 = vpack.c.b16 %v1062, %v1060
      %v1233 = vpack.c.b16 %v1063, %v1061
      %v1234 = vpack.c.b16 %v1066, %v1064
      %v1235 = vpack.c.b16 %v1067, %v1065
      %v1236 = vpack.c.b16 %v1070, %v1068
      %v1237 = vpack.c.b16 %v1071, %v1069
      %v1238 = vpack.c.b16 %v1074, %v1072
      %v1239 = vpack.c.b16 %v1075, %v1073
      %v1240 = vpack.c.b16 %v1078, %v1076
      %v1241 = vpack.c.b16 %v1079, %v1077
      %v1242 = vpack.c.b16 %v1082, %v1080
      %v1243 = vpack.c.b16 %v1083, %v1081
      %v1244 = vpack.c.b16 %v1086, %v1084
      %v1245 = vpack.c.b16 %v1087, %v1085
      %v1246 = vpack.c.b16 %v1090, %v1088
      %v1247 = vpack.c.b16 %v1091, %v1089
      %v1248 = vpack.c.b16 %v1094, %v1092
      %v1249 = vpack.c.b16 %v1095, %v1093
      %v1250 = vpack.c.b16 %v1098, %v1096
      %v1251 = vpack.c.b16 %v1099, %v1097
      %v1252 = vpack.c.b16 %v1102, %v1100
      %v1253 = vpack.c.b16 %v1103, %v1101
      %v1254 = vpack.c.b16 %v1106, %v1104
      %v1255 = vpack.c.b16 %v1107, %v1105
      %v1256 = vpack.c.b16 %v1110, %v1108
      %v1257 = vpack.c.b16 %v1111, %v1109
      %v1258 = vpack.c.b16 %v1114, %v1112
      %v1259 = vpack.c.b16 %v1115, %v1113
      %v1260 = vpack.c.b16 %v1118, %v1116
      %v1261 = vpack.c.b16 %v1119, %v1117
      %v1262 = vpack.c.b16 %v1122, %v1120
      %v1263 = vpack.c.b16 %v1123, %v1121
      %v1264 = vpack.c.b16 %v1126, %v1124
      %v1265 = vpack.c.b16 %v1127, %v1125
      %v1266 = vpack.c.b16 %v1130, %v1128
      %v1267 = vpack.c.b16 %v1131, %v1129
      %v1268 = vpack.c.b16 %v1134, %v1132
      %v1269 = vpack.c.b16 %v1135, %v1133
      %v1270 = vpack.c.b16 %v1138, %v1136
      %v1271 = vpack.c.b16 %v1139, %v1137
      %v1272 = vpack.c.b16 %v1142, %v1140
      %v1273 = vpack.c.b16 %v1143, %v1141
      %v1274 = vpack.c.b16 %v1146, %v1144
      %v1275 = vpack.c.b16 %v1147, %v1145
      %vm1340 = vcmask 556032
      %v1342 = vsel %vm1340, %v1149, 0
      %v1345 = vsel %vm1340, %v1151, 0
      %v1348 = vsel %vm1340, %v1153, 0
      %v1351 = vsel %vm1340, %v1155, 0
      %v1354 = vsel %vm1340, %v1157, 0
      %v1357 = vsel %vm1340, %v1159, 0
      %v1360 = vsel %vm1340, %v1161, 0
      %v1363 = vsel %vm1340, %v1163, 0
      %v1366 = vsel %vm1340, %v1165, 0
      %v1369 = vsel %vm1340, %v1167, 0
      %v1372 = vsel %vm1340, %v1169, 0
      %v1375 = vsel %vm1340, %v1171, 0
      %v1378 = vsel %vm1340, %v1173, 0
      %v1381 = vsel %vm1340, %v1175, 0
      %v1384 = vsel %vm1340, %v1177, 0
      %v1387 = vsel %vm1340, %v1179, 0
      %v1390 = vsel %vm1340, %v1181, 0
      %v1393 = vsel %vm1340, %v1183, 0
      %v1396 = vsel %vm1340, %v1185, 0
      %v1399 = vsel %vm1340, %v1187, 0
      %v1402 = vsel %vm1340, %v1189, 0
      %v1405 = vsel %vm1340, %v1191, 0
      %v1408 = vsel %vm1340, %v1193, 0
      %v1411 = vsel %vm1340, %v1195, 0
      %v1414 = vsel %vm1340, %v1197, 0
      %v1417 = vsel %vm1340, %v1199, 0
      %v1420 = vsel %vm1340, %v1201, 0
      %v1423 = vsel %vm1340, %v1203, 0
      %v1426 = vsel %vm1340, %v1205, 0
      %v1429 = vsel %vm1340, %v1207, 0
      %v1432 = vsel %vm1340, %v1209, 0
      %v1435 = vsel %vm1340, %v1211, 0
      %v1438 = vsel %vm1340, %v1213, 0
      %v1441 = vsel %vm1340, %v1215, 0
      %v1444 = vsel %vm1340, %v1217, 0
      %v1447 = vsel %vm1340, %v1219, 0
      %v1450 = vsel %vm1340, %v1221, 0
      %v1453 = vsel %vm1340, %v1223, 0
      %v1456 = vsel %vm1340, %v1225, 0
      %v1459 = vsel %vm1340, %v1227, 0
      %v1462 = vsel %vm1340, %v1229, 0
      %v1465 = vsel %vm1340, %v1231, 0
      %v1468 = vsel %vm1340, %v1233, 0
      %v1471 = vsel %vm1340, %v1235, 0
      %v1474 = vsel %vm1340, %v1237, 0
      %v1477 = vsel %vm1340, %v1239, 0
      %v1480 = vsel %vm1340, %v1241, 0
      %v1483 = vsel %vm1340, %v1243, 0
      %v1486 = vsel %vm1340, %v1245, 0
      %v1489 = vsel %vm1340, %v1247, 0
      %v1492 = vsel %vm1340, %v1249, 0
      %v1495 = vsel %vm1340, %v1251, 0
      %v1498 = vsel %vm1340, %v1253, 0
      %v1501 = vsel %vm1340, %v1255, 0
      %v1504 = vsel %vm1340, %v1257, 0
      %v1507 = vsel %vm1340, %v1259, 0
      %v1510 = vsel %vm1340, %v1261, 0
      %v1513 = vsel %vm1340, %v1263, 0
      %v1516 = vsel %vm1340, %v1265, 0
      %v1519 = vsel %vm1340, %v1267, 0
      %v1522 = vsel %vm1340, %v1269, 0
      %v1525 = vsel %vm1340, %v1271, 0
      %v1528 = vsel %vm1340, %v1273, 0
      %v1531 = vsel %vm1340, %v1275, 0
      %vm1533 = vcmask 1041408
      %v1535 = vsel %vm1533, %v635, 0
      %1537 = vmatprep.subr.bf16.mxu0 0
      %1538 = vmatpush1.bf16.msra.mxu0 %v630
      %1539 = vmatprep.subr.bf16.mxu0 0
      %1540 = vmatpush1.bf16.msra.mxu0 %v629
      %1541 = vmatprep.subr.bf16.mxu0 0
      %1542 = vmatpush1.bf16.msra.mxu0 %v628
      %1543 = vmatprep.subr.bf16.mxu0 0
      %1544 = vmatpush1.bf16.msra.mxu0 %v627
      %1545 = vmatprep.subr.bf16.mxu0 0
      %1546 = vmatpush1.bf16.msra.mxu0 %v626
      %1547 = vmatprep.subr.bf16.mxu0 0
      %1548 = vmatpush1.bf16.msra.mxu0 %v625
      %1549 = vmatprep.subr.bf16.mxu0 0
      %1550 = vmatpush1.bf16.msra.mxu0 %v624
      %1551 = vmatprep.subr.bf16.mxu0 0
      %1552 = vmatpush1.bf16.msra.mxu0 %v623
      %1553 = vmatprep.subr.bf16.mxu0 0
      %1554 = vmatpush2.bf16.msra.mxu0 0
      %1555 = vmatprep.subr.bf16.mxu0 0
      %1556 = vmatpush2.bf16.msra.mxu0 0
      %1557 = vmatprep.subr.bf16.mxu0 0
      %1558 = vmatpush2.bf16.msra.mxu0 0
      %1559 = vmatprep.subr.bf16.mxu0 0
      %1560 = vmatpush2.bf16.msra.mxu0 %v1535
      %1561 = vmatprep.subr.bf16.mxu0 0
      %1562 = vmatpush2.bf16.msra.mxu0 %v634
      %1563 = vmatprep.subr.bf16.mxu0 0
      %1564 = vmatpush2.bf16.msra.mxu0 %v633
      %1565 = vmatprep.subr.bf16.mxu0 0
      %1566 = vmatpush2.bf16.msra.mxu0 %v632
      %1567 = vmatprep.subr.bf16.mxu0 0
      %1568 = vmatpush2.bf16.msra.mxu0 %v631
      %1569 = vmatprep.mubr.bf16.mxu0 %v1342
      %1570 = vmatmul.mubr.bf16.gmra.mxu0 %v1148
      %v1571 = vpop.f32.mrf.mxu0
      %v1572 = vadd.f32 0.0, %v1571
      %v1573 = vpop.f32.mrf.mxu0
      %v1574 = vpop.f32.mrf.mxu0
      %v1575 = vadd.f32 0.0, %v1574
      %v1576 = vpop.f32.mrf.mxu0
      %1577 = vmatprep.mubr.bf16.mxu0 %v1345
      %1578 = vmatmul.mubr.bf16.gmra.mxu0 %v1150
      %v1579 = vpop.f32.mrf.mxu0
      %v1580 = vadd.f32 0.0, %v1579
      %v1581 = vpop.f32.mrf.mxu0
      %v1582 = vpop.f32.mrf.mxu0
      %v1583 = vadd.f32 0.0, %v1582
      %v1584 = vpop.f32.mrf.mxu0
      %1585 = vmatprep.mubr.bf16.mxu0 %v1348
      %1586 = vmatmul.mubr.bf16.gmra.mxu0 %v1152
      %v1587 = vpop.f32.mrf.mxu0
      %v1588 = vadd.f32 0.0, %v1587
      %v1589 = vpop.f32.mrf.mxu0
      %v1590 = vpop.f32.mrf.mxu0
      %v1591 = vadd.f32 0.0, %v1590
      %v1592 = vpop.f32.mrf.mxu0
      %1593 = vmatprep.mubr.bf16.mxu0 %v1351
      %1594 = vmatmul.mubr.bf16.gmra.mxu0 %v1154
      %v1595 = vpop.f32.mrf.mxu0
      %v1596 = vadd.f32 0.0, %v1595
      %v1597 = vpop.f32.mrf.mxu0
      %v1598 = vpop.f32.mrf.mxu0
      %v1599 = vadd.f32 0.0, %v1598
      %v1600 = vpop.f32.mrf.mxu0
      %1601 = vmatprep.mubr.bf16.mxu0 %v1354
      %1602 = vmatmul.mubr.bf16.gmra.mxu0 %v1156
      %v1603 = vpop.f32.mrf.mxu0
      %v1604 = vadd.f32 0.0, %v1603
      %v1605 = vpop.f32.mrf.mxu0
      %v1606 = vpop.f32.mrf.mxu0
      %v1607 = vadd.f32 0.0, %v1606
      %v1608 = vpop.f32.mrf.mxu0
      %1609 = vmatprep.mubr.bf16.mxu0 %v1357
      %1610 = vmatmul.mubr.bf16.gmra.mxu0 %v1158
      %v1611 = vpop.f32.mrf.mxu0
      %v1612 = vadd.f32 0.0, %v1611
      %v1613 = vpop.f32.mrf.mxu0
      %v1614 = vpop.f32.mrf.mxu0
      %v1615 = vadd.f32 0.0, %v1614
      %v1616 = vpop.f32.mrf.mxu0
      %1617 = vmatprep.mubr.bf16.mxu0 %v1360
      %1618 = vmatmul.mubr.bf16.gmra.mxu0 %v1160
      %v1619 = vpop.f32.mrf.mxu0
      %v1620 = vadd.f32 0.0, %v1619
      %v1621 = vpop.f32.mrf.mxu0
      %v1622 = vpop.f32.mrf.mxu0
      %v1623 = vadd.f32 0.0, %v1622
      %v1624 = vpop.f32.mrf.mxu0
      %1625 = vmatprep.mubr.bf16.mxu0 %v1363
      %1626 = vmatmul.mubr.bf16.gmra.mxu0 %v1162
      %v1627 = vpop.f32.mrf.mxu0
      %v1628 = vadd.f32 0.0, %v1627
      %v1629 = vpop.f32.mrf.mxu0
      %v1630 = vpop.f32.mrf.mxu0
      %v1631 = vadd.f32 0.0, %v1630
      %v1632 = vpop.f32.mrf.mxu0
      %1633 = vmatprep.mubr.bf16.mxu0 %v1366
      %1634 = vmatmul.mubr.bf16.gmra.mxu0 %v1164
      %v1635 = vpop.f32.mrf.mxu0
      %v1636 = vadd.f32 0.0, %v1635
      %v1637 = vpop.f32.mrf.mxu0
      %v1638 = vpop.f32.mrf.mxu0
      %v1639 = vadd.f32 0.0, %v1638
      %v1640 = vpop.f32.mrf.mxu0
      %1641 = vmatprep.mubr.bf16.mxu0 %v1369
      %1642 = vmatmul.mubr.bf16.gmra.mxu0 %v1166
      %v1643 = vpop.f32.mrf.mxu0
      %v1644 = vadd.f32 0.0, %v1643
      %v1645 = vpop.f32.mrf.mxu0
      %v1646 = vpop.f32.mrf.mxu0
      %v1647 = vadd.f32 0.0, %v1646
      %v1648 = vpop.f32.mrf.mxu0
      %1649 = vmatprep.mubr.bf16.mxu0 %v1372
      %1650 = vmatmul.mubr.bf16.gmra.mxu0 %v1168
      %v1651 = vpop.f32.mrf.mxu0
      %v1652 = vadd.f32 0.0, %v1651
      %v1653 = vpop.f32.mrf.mxu0
      %v1654 = vpop.f32.mrf.mxu0
      %v1655 = vadd.f32 0.0, %v1654
      %v1656 = vpop.f32.mrf.mxu0
      %1657 = vmatprep.mubr.bf16.mxu0 %v1375
      %1658 = vmatmul.mubr.bf16.gmra.mxu0 %v1170
      %v1659 = vpop.f32.mrf.mxu0
      %v1660 = vadd.f32 0.0, %v1659
      %v1661 = vpop.f32.mrf.mxu0
      %v1662 = vpop.f32.mrf.mxu0
      %v1663 = vadd.f32 0.0, %v1662
      %v1664 = vpop.f32.mrf.mxu0
      %1665 = vmatprep.mubr.bf16.mxu0 %v1378
      %1666 = vmatmul.mubr.bf16.gmra.mxu0 %v1172
      %v1667 = vpop.f32.mrf.mxu0
      %v1668 = vadd.f32 0.0, %v1667
      %v1669 = vpop.f32.mrf.mxu0
      %v1670 = vpop.f32.mrf.mxu0
      %v1671 = vadd.f32 0.0, %v1670
      %v1672 = vpop.f32.mrf.mxu0
      %1673 = vmatprep.mubr.bf16.mxu0 %v1381
      %1674 = vmatmul.mubr.bf16.gmra.mxu0 %v1174
      %v1675 = vpop.f32.mrf.mxu0
      %v1676 = vadd.f32 0.0, %v1675
      %v1677 = vpop.f32.mrf.mxu0
      %v1678 = vpop.f32.mrf.mxu0
      %v1679 = vadd.f32 0.0, %v1678
      %v1680 = vpop.f32.mrf.mxu0
      %1681 = vmatprep.mubr.bf16.mxu0 %v1384
      %1682 = vmatmul.mubr.bf16.gmra.mxu0 %v1176
      %v1683 = vpop.f32.mrf.mxu0
      %v1684 = vadd.f32 0.0, %v1683
      %v1685 = vpop.f32.mrf.mxu0
      %v1686 = vpop.f32.mrf.mxu0
      %v1687 = vadd.f32 0.0, %v1686
      %v1688 = vpop.f32.mrf.mxu0
      %1689 = vmatprep.mubr.bf16.mxu0 %v1387
      %1690 = vmatmul.mubr.bf16.gmra.mxu0 %v1178
      %v1691 = vpop.f32.mrf.mxu0
      %v1692 = vadd.f32 0.0, %v1691
      %v1693 = vpop.f32.mrf.mxu0
      %v1694 = vpop.f32.mrf.mxu0
      %v1695 = vadd.f32 0.0, %v1694
      %v1696 = vpop.f32.mrf.mxu0
      %1697 = vmatprep.mubr.bf16.mxu0 %v1390
      %1698 = vmatmul.mubr.bf16.gmra.mxu0 %v1180
      %v1699 = vpop.f32.mrf.mxu0
      %v1700 = vadd.f32 0.0, %v1699
      %v1701 = vpop.f32.mrf.mxu0
      %v1702 = vpop.f32.mrf.mxu0
      %v1703 = vadd.f32 0.0, %v1702
      %v1704 = vpop.f32.mrf.mxu0
      %1705 = vmatprep.mubr.bf16.mxu0 %v1393
      %1706 = vmatmul.mubr.bf16.gmra.mxu0 %v1182
      %v1707 = vpop.f32.mrf.mxu0
      %v1708 = vadd.f32 0.0, %v1707
      %v1709 = vpop.f32.mrf.mxu0
      %v1710 = vpop.f32.mrf.mxu0
      %v1711 = vadd.f32 0.0, %v1710
      %v1712 = vpop.f32.mrf.mxu0
      %1713 = vmatprep.mubr.bf16.mxu0 %v1396
      %1714 = vmatmul.mubr.bf16.gmra.mxu0 %v1184
      %v1715 = vpop.f32.mrf.mxu0
      %v1716 = vadd.f32 0.0, %v1715
      %v1717 = vpop.f32.mrf.mxu0
      %v1718 = vpop.f32.mrf.mxu0
      %v1719 = vadd.f32 0.0, %v1718
      %v1720 = vpop.f32.mrf.mxu0
      %1721 = vmatprep.mubr.bf16.mxu0 %v1399
      %1722 = vmatmul.mubr.bf16.gmra.mxu0 %v1186
      %v1723 = vpop.f32.mrf.mxu0
      %v1724 = vadd.f32 0.0, %v1723
      %v1725 = vpop.f32.mrf.mxu0
      %v1726 = vpop.f32.mrf.mxu0
      %v1727 = vadd.f32 0.0, %v1726
      %v1728 = vpop.f32.mrf.mxu0
      %1729 = vmatprep.mubr.bf16.mxu0 %v1402
      %1730 = vmatmul.mubr.bf16.gmra.mxu0 %v1188
      %v1731 = vpop.f32.mrf.mxu0
      %v1732 = vadd.f32 0.0, %v1731
      %v1733 = vpop.f32.mrf.mxu0
      %v1734 = vpop.f32.mrf.mxu0
      %v1735 = vadd.f32 0.0, %v1734
      %v1736 = vpop.f32.mrf.mxu0
      %1737 = vmatprep.mubr.bf16.mxu0 %v1405
      %1738 = vmatmul.mubr.bf16.gmra.mxu0 %v1190
      %v1739 = vpop.f32.mrf.mxu0
      %v1740 = vadd.f32 0.0, %v1739
      %v1741 = vpop.f32.mrf.mxu0
      %v1742 = vpop.f32.mrf.mxu0
      %v1743 = vadd.f32 0.0, %v1742
      %v1744 = vpop.f32.mrf.mxu0
      %1745 = vmatprep.mubr.bf16.mxu0 %v1408
      %1746 = vmatmul.mubr.bf16.gmra.mxu0 %v1192
      %v1747 = vpop.f32.mrf.mxu0
      %v1748 = vadd.f32 0.0, %v1747
      %v1749 = vpop.f32.mrf.mxu0
      %v1750 = vpop.f32.mrf.mxu0
      %v1751 = vadd.f32 0.0, %v1750
      %v1752 = vpop.f32.mrf.mxu0
      %1753 = vmatprep.mubr.bf16.mxu0 %v1411
      %1754 = vmatmul.mubr.bf16.gmra.mxu0 %v1194
      %v1755 = vpop.f32.mrf.mxu0
      %v1756 = vadd.f32 0.0, %v1755
      %v1757 = vpop.f32.mrf.mxu0
      %v1758 = vpop.f32.mrf.mxu0
      %v1759 = vadd.f32 0.0, %v1758
      %v1760 = vpop.f32.mrf.mxu0
      %1761 = vmatprep.mubr.bf16.mxu0 %v1414
      %1762 = vmatmul.mubr.bf16.gmra.mxu0 %v1196
      %v1763 = vpop.f32.mrf.mxu0
      %v1764 = vadd.f32 0.0, %v1763
      %v1765 = vpop.f32.mrf.mxu0
      %v1766 = vpop.f32.mrf.mxu0
      %v1767 = vadd.f32 0.0, %v1766
      %v1768 = vpop.f32.mrf.mxu0
      %1769 = vmatprep.mubr.bf16.mxu0 %v1417
      %1770 = vmatmul.mubr.bf16.gmra.mxu0 %v1198
      %v1771 = vpop.f32.mrf.mxu0
      %v1772 = vadd.f32 0.0, %v1771
      %v1773 = vpop.f32.mrf.mxu0
      %v1774 = vpop.f32.mrf.mxu0
      %v1775 = vadd.f32 0.0, %v1774
      %v1776 = vpop.f32.mrf.mxu0
      %1777 = vmatprep.mubr.bf16.mxu0 %v1420
      %1778 = vmatmul.mubr.bf16.gmra.mxu0 %v1200
      %v1779 = vpop.f32.mrf.mxu0
      %v1780 = vadd.f32 0.0, %v1779
      %v1781 = vpop.f32.mrf.mxu0
      %v1782 = vpop.f32.mrf.mxu0
      %v1783 = vadd.f32 0.0, %v1782
      %v1784 = vpop.f32.mrf.mxu0
      %1785 = vmatprep.mubr.bf16.mxu0 %v1423
      %1786 = vmatmul.mubr.bf16.gmra.mxu0 %v1202
      %v1787 = vpop.f32.mrf.mxu0
      %v1788 = vadd.f32 0.0, %v1787
      %v1789 = vpop.f32.mrf.mxu0
      %v1790 = vpop.f32.mrf.mxu0
      %v1791 = vadd.f32 0.0, %v1790
      %v1792 = vpop.f32.mrf.mxu0
      %1793 = vmatprep.mubr.bf16.mxu0 %v1426
      %1794 = vmatmul.mubr.bf16.gmra.mxu0 %v1204
      %v1795 = vpop.f32.mrf.mxu0
      %v1796 = vadd.f32 0.0, %v1795
      %v1797 = vpop.f32.mrf.mxu0
      %v1798 = vpop.f32.mrf.mxu0
      %v1799 = vadd.f32 0.0, %v1798
      %v1800 = vpop.f32.mrf.mxu0
      %1801 = vmatprep.mubr.bf16.mxu0 %v1429
      %1802 = vmatmul.mubr.bf16.gmra.mxu0 %v1206
      %v1803 = vpop.f32.mrf.mxu0
      %v1804 = vadd.f32 0.0, %v1803
      %v1805 = vpop.f32.mrf.mxu0
      %v1806 = vpop.f32.mrf.mxu0
      %v1807 = vadd.f32 0.0, %v1806
      %v1808 = vpop.f32.mrf.mxu0
      %1809 = vmatprep.mubr.bf16.mxu0 %v1432
      %1810 = vmatmul.mubr.bf16.gmra.mxu0 %v1208
      %v1811 = vpop.f32.mrf.mxu0
      %v1812 = vadd.f32 0.0, %v1811
      %v1813 = vpop.f32.mrf.mxu0
      %v1814 = vpop.f32.mrf.mxu0
      %v1815 = vadd.f32 0.0, %v1814
      %v1816 = vpop.f32.mrf.mxu0
      %1817 = vmatprep.mubr.bf16.mxu0 %v1435
      %1818 = vmatmul.mubr.bf16.gmra.mxu0 %v1210
      %v1819 = vpop.f32.mrf.mxu0
      %v1820 = vadd.f32 0.0, %v1819
      %v1821 = vpop.f32.mrf.mxu0
      %v1822 = vpop.f32.mrf.mxu0
      %v1823 = vadd.f32 0.0, %v1822
      %v1824 = vpop.f32.mrf.mxu0
      %1825 = vmatprep.mubr.bf16.mxu0 %v1438
      %1826 = vmatmul.mubr.bf16.gmra.mxu0 %v1212
      %v1827 = vpop.f32.mrf.mxu0
      %v1828 = vadd.f32 0.0, %v1827
      %v1829 = vpop.f32.mrf.mxu0
      %v1830 = vpop.f32.mrf.mxu0
      %v1831 = vadd.f32 0.0, %v1830
      %v1832 = vpop.f32.mrf.mxu0
      %1833 = vmatprep.mubr.bf16.mxu0 %v1441
      %1834 = vmatmul.mubr.bf16.gmra.mxu0 %v1214
      %v1835 = vpop.f32.mrf.mxu0
      %v1836 = vadd.f32 0.0, %v1835
      %v1837 = vpop.f32.mrf.mxu0
      %v1838 = vpop.f32.mrf.mxu0
      %v1839 = vadd.f32 0.0, %v1838
      %v1840 = vpop.f32.mrf.mxu0
      %1841 = vmatprep.mubr.bf16.mxu0 %v1444
      %1842 = vmatmul.mubr.bf16.gmra.mxu0 %v1216
      %v1843 = vpop.f32.mrf.mxu0
      %v1844 = vadd.f32 0.0, %v1843
      %v1845 = vpop.f32.mrf.mxu0
      %v1846 = vpop.f32.mrf.mxu0
      %v1847 = vadd.f32 0.0, %v1846
      %v1848 = vpop.f32.mrf.mxu0
      %1849 = vmatprep.mubr.bf16.mxu0 %v1447
      %1850 = vmatmul.mubr.bf16.gmra.mxu0 %v1218
      %v1851 = vpop.f32.mrf.mxu0
      %v1852 = vadd.f32 0.0, %v1851
      %v1853 = vpop.f32.mrf.mxu0
      %v1854 = vpop.f32.mrf.mxu0
      %v1855 = vadd.f32 0.0, %v1854
      %v1856 = vpop.f32.mrf.mxu0
      %1857 = vmatprep.mubr.bf16.mxu0 %v1450
      %1858 = vmatmul.mubr.bf16.gmra.mxu0 %v1220
      %v1859 = vpop.f32.mrf.mxu0
      %v1860 = vadd.f32 0.0, %v1859
      %v1861 = vpop.f32.mrf.mxu0
      %v1862 = vpop.f32.mrf.mxu0
      %v1863 = vadd.f32 0.0, %v1862
      %v1864 = vpop.f32.mrf.mxu0
      %1865 = vmatprep.mubr.bf16.mxu0 %v1453
      %1866 = vmatmul.mubr.bf16.gmra.mxu0 %v1222
      %v1867 = vpop.f32.mrf.mxu0
      %v1868 = vadd.f32 0.0, %v1867
      %v1869 = vpop.f32.mrf.mxu0
      %v1870 = vpop.f32.mrf.mxu0
      %v1871 = vadd.f32 0.0, %v1870
      %v1872 = vpop.f32.mrf.mxu0
      %1873 = vmatprep.mubr.bf16.mxu0 %v1456
      %1874 = vmatmul.mubr.bf16.gmra.mxu0 %v1224
      %v1875 = vpop.f32.mrf.mxu0
      %v1876 = vadd.f32 0.0, %v1875
      %v1877 = vpop.f32.mrf.mxu0
      %v1878 = vpop.f32.mrf.mxu0
      %v1879 = vadd.f32 0.0, %v1878
      %v1880 = vpop.f32.mrf.mxu0
      %1881 = vmatprep.mubr.bf16.mxu0 %v1459
      %1882 = vmatmul.mubr.bf16.gmra.mxu0 %v1226
      %v1883 = vpop.f32.mrf.mxu0
      %v1884 = vadd.f32 0.0, %v1883
      %v1885 = vpop.f32.mrf.mxu0
      %v1886 = vpop.f32.mrf.mxu0
      %v1887 = vadd.f32 0.0, %v1886
      %v1888 = vpop.f32.mrf.mxu0
      %1889 = vmatprep.mubr.bf16.mxu0 %v1462
      %1890 = vmatmul.mubr.bf16.gmra.mxu0 %v1228
      %v1891 = vpop.f32.mrf.mxu0
      %v1892 = vadd.f32 0.0, %v1891
      %v1893 = vpop.f32.mrf.mxu0
      %v1894 = vpop.f32.mrf.mxu0
      %v1895 = vadd.f32 0.0, %v1894
      %v1896 = vpop.f32.mrf.mxu0
      %1897 = vmatprep.mubr.bf16.mxu0 %v1465
      %1898 = vmatmul.mubr.bf16.gmra.mxu0 %v1230
      %v1899 = vpop.f32.mrf.mxu0
      %v1900 = vadd.f32 0.0, %v1899
      %v1901 = vpop.f32.mrf.mxu0
      %v1902 = vpop.f32.mrf.mxu0
      %v1903 = vadd.f32 0.0, %v1902
      %v1904 = vpop.f32.mrf.mxu0
      %1905 = vmatprep.mubr.bf16.mxu0 %v1468
      %1906 = vmatmul.mubr.bf16.gmra.mxu0 %v1232
      %v1907 = vpop.f32.mrf.mxu0
      %v1908 = vadd.f32 0.0, %v1907
      %v1909 = vpop.f32.mrf.mxu0
      %v1910 = vpop.f32.mrf.mxu0
      %v1911 = vadd.f32 0.0, %v1910
      %v1912 = vpop.f32.mrf.mxu0
      %1913 = vmatprep.mubr.bf16.mxu0 %v1471
      %1914 = vmatmul.mubr.bf16.gmra.mxu0 %v1234
      %v1915 = vpop.f32.mrf.mxu0
      %v1916 = vadd.f32 0.0, %v1915
      %v1917 = vpop.f32.mrf.mxu0
      %v1918 = vpop.f32.mrf.mxu0
      %v1919 = vadd.f32 0.0, %v1918
      %v1920 = vpop.f32.mrf.mxu0
      %1921 = vmatprep.mubr.bf16.mxu0 %v1474
      %1922 = vmatmul.mubr.bf16.gmra.mxu0 %v1236
      %v1923 = vpop.f32.mrf.mxu0
      %v1924 = vadd.f32 0.0, %v1923
      %v1925 = vpop.f32.mrf.mxu0
      %v1926 = vpop.f32.mrf.mxu0
      %v1927 = vadd.f32 0.0, %v1926
      %v1928 = vpop.f32.mrf.mxu0
      %1929 = vmatprep.mubr.bf16.mxu0 %v1477
      %1930 = vmatmul.mubr.bf16.gmra.mxu0 %v1238
      %v1931 = vpop.f32.mrf.mxu0
      %v1932 = vadd.f32 0.0, %v1931
      %v1933 = vpop.f32.mrf.mxu0
      %v1934 = vpop.f32.mrf.mxu0
      %v1935 = vadd.f32 0.0, %v1934
      %v1936 = vpop.f32.mrf.mxu0
      %1937 = vmatprep.mubr.bf16.mxu0 %v1480
      %1938 = vmatmul.mubr.bf16.gmra.mxu0 %v1240
      %v1939 = vpop.f32.mrf.mxu0
      %v1940 = vadd.f32 0.0, %v1939
      %v1941 = vpop.f32.mrf.mxu0
      %v1942 = vpop.f32.mrf.mxu0
      %v1943 = vadd.f32 0.0, %v1942
      %v1944 = vpop.f32.mrf.mxu0
      %1945 = vmatprep.mubr.bf16.mxu0 %v1483
      %1946 = vmatmul.mubr.bf16.gmra.mxu0 %v1242
      %v1947 = vpop.f32.mrf.mxu0
      %v1948 = vadd.f32 0.0, %v1947
      %v1949 = vpop.f32.mrf.mxu0
      %v1950 = vpop.f32.mrf.mxu0
      %v1951 = vadd.f32 0.0, %v1950
      %v1952 = vpop.f32.mrf.mxu0
      %1953 = vmatprep.mubr.bf16.mxu0 %v1486
      %1954 = vmatmul.mubr.bf16.gmra.mxu0 %v1244
      %v1955 = vpop.f32.mrf.mxu0
      %v1956 = vadd.f32 0.0, %v1955
      %v1957 = vpop.f32.mrf.mxu0
      %v1958 = vpop.f32.mrf.mxu0
      %v1959 = vadd.f32 0.0, %v1958
      %v1960 = vpop.f32.mrf.mxu0
      %1961 = vmatprep.mubr.bf16.mxu0 %v1489
      %1962 = vmatmul.mubr.bf16.gmra.mxu0 %v1246
      %v1963 = vpop.f32.mrf.mxu0
      %v1964 = vadd.f32 0.0, %v1963
      %v1965 = vpop.f32.mrf.mxu0
      %v1966 = vpop.f32.mrf.mxu0
      %v1967 = vadd.f32 0.0, %v1966
      %v1968 = vpop.f32.mrf.mxu0
      %1969 = vmatprep.mubr.bf16.mxu0 %v1492
      %1970 = vmatmul.mubr.bf16.gmra.mxu0 %v1248
      %v1971 = vpop.f32.mrf.mxu0
      %v1972 = vadd.f32 0.0, %v1971
      %v1973 = vpop.f32.mrf.mxu0
      %v1974 = vpop.f32.mrf.mxu0
      %v1975 = vadd.f32 0.0, %v1974
      %v1976 = vpop.f32.mrf.mxu0
      %1977 = vmatprep.mubr.bf16.mxu0 %v1495
      %1978 = vmatmul.mubr.bf16.gmra.mxu0 %v1250
      %v1979 = vpop.f32.mrf.mxu0
      %v1980 = vadd.f32 0.0, %v1979
      %v1981 = vpop.f32.mrf.mxu0
      %v1982 = vpop.f32.mrf.mxu0
      %v1983 = vadd.f32 0.0, %v1982
      %v1984 = vpop.f32.mrf.mxu0
      %1985 = vmatprep.mubr.bf16.mxu0 %v1498
      %1986 = vmatmul.mubr.bf16.gmra.mxu0 %v1252
      %v1987 = vpop.f32.mrf.mxu0
      %v1988 = vadd.f32 0.0, %v1987
      %v1989 = vpop.f32.mrf.mxu0
      %v1990 = vpop.f32.mrf.mxu0
      %v1991 = vadd.f32 0.0, %v1990
      %v1992 = vpop.f32.mrf.mxu0
      %1993 = vmatprep.mubr.bf16.mxu0 %v1501
      %1994 = vmatmul.mubr.bf16.gmra.mxu0 %v1254
      %v1995 = vpop.f32.mrf.mxu0
      %v1996 = vadd.f32 0.0, %v1995
      %v1997 = vpop.f32.mrf.mxu0
      %v1998 = vpop.f32.mrf.mxu0
      %v1999 = vadd.f32 0.0, %v1998
      %v2000 = vpop.f32.mrf.mxu0
      %2001 = vmatprep.mubr.bf16.mxu0 %v1504
      %2002 = vmatmul.mubr.bf16.gmra.mxu0 %v1256
      %v2003 = vpop.f32.mrf.mxu0
      %v2004 = vadd.f32 0.0, %v2003
      %v2005 = vpop.f32.mrf.mxu0
      %v2006 = vpop.f32.mrf.mxu0
      %v2007 = vadd.f32 0.0, %v2006
      %v2008 = vpop.f32.mrf.mxu0
      %2009 = vmatprep.mubr.bf16.mxu0 %v1507
      %2010 = vmatmul.mubr.bf16.gmra.mxu0 %v1258
      %v2011 = vpop.f32.mrf.mxu0
      %v2012 = vadd.f32 0.0, %v2011
      %v2013 = vpop.f32.mrf.mxu0
      %v2014 = vpop.f32.mrf.mxu0
      %v2015 = vadd.f32 0.0, %v2014
      %v2016 = vpop.f32.mrf.mxu0
      %2017 = vmatprep.mubr.bf16.mxu0 %v1510
      %2018 = vmatmul.mubr.bf16.gmra.mxu0 %v1260
      %v2019 = vpop.f32.mrf.mxu0
      %v2020 = vadd.f32 0.0, %v2019
      %v2021 = vpop.f32.mrf.mxu0
      %v2022 = vpop.f32.mrf.mxu0
      %v2023 = vadd.f32 0.0, %v2022
      %v2024 = vpop.f32.mrf.mxu0
      %2025 = vmatprep.mubr.bf16.mxu0 %v1513
      %2026 = vmatmul.mubr.bf16.gmra.mxu0 %v1262
      %v2027 = vpop.f32.mrf.mxu0
      %v2028 = vadd.f32 0.0, %v2027
      %v2029 = vpop.f32.mrf.mxu0
      %v2030 = vpop.f32.mrf.mxu0
      %v2031 = vadd.f32 0.0, %v2030
      %v2032 = vpop.f32.mrf.mxu0
      %2033 = vmatprep.mubr.bf16.mxu0 %v1516
      %2034 = vmatmul.mubr.bf16.gmra.mxu0 %v1264
      %v2035 = vpop.f32.mrf.mxu0
      %v2036 = vadd.f32 0.0, %v2035
      %v2037 = vpop.f32.mrf.mxu0
      %v2038 = vpop.f32.mrf.mxu0
      %v2039 = vadd.f32 0.0, %v2038
      %v2040 = vpop.f32.mrf.mxu0
      %2041 = vmatprep.mubr.bf16.mxu0 %v1519
      %2042 = vmatmul.mubr.bf16.gmra.mxu0 %v1266
      %v2043 = vpop.f32.mrf.mxu0
      %v2044 = vadd.f32 0.0, %v2043
      %v2045 = vpop.f32.mrf.mxu0
      %v2046 = vpop.f32.mrf.mxu0
      %v2047 = vadd.f32 0.0, %v2046
      %v2048 = vpop.f32.mrf.mxu0
      %2049 = vmatprep.mubr.bf16.mxu0 %v1522
      %2050 = vmatmul.mubr.bf16.gmra.mxu0 %v1268
      %v2051 = vpop.f32.mrf.mxu0
      %v2052 = vadd.f32 0.0, %v2051
      %v2053 = vpop.f32.mrf.mxu0
      %v2054 = vpop.f32.mrf.mxu0
      %v2055 = vadd.f32 0.0, %v2054
      %v2056 = vpop.f32.mrf.mxu0
      %2057 = vmatprep.mubr.bf16.mxu0 %v1525
      %2058 = vmatmul.mubr.bf16.gmra.mxu0 %v1270
      %v2059 = vpop.f32.mrf.mxu0
      %v2060 = vadd.f32 0.0, %v2059
      %v2061 = vpop.f32.mrf.mxu0
      %v2062 = vpop.f32.mrf.mxu0
      %v2063 = vadd.f32 0.0, %v2062
      %v2064 = vpop.f32.mrf.mxu0
      %2065 = vmatprep.mubr.bf16.mxu0 %v1528
      %2066 = vmatmul.mubr.bf16.gmra.mxu0 %v1272
      %v2067 = vpop.f32.mrf.mxu0
      %v2068 = vadd.f32 0.0, %v2067
      %v2069 = vpop.f32.mrf.mxu0
      %v2070 = vpop.f32.mrf.mxu0
      %v2071 = vadd.f32 0.0, %v2070
      %v2072 = vpop.f32.mrf.mxu0
      %2073 = vmatprep.mubr.bf16.mxu0 %v1531
      %2074 = vmatmul.mubr.bf16.gmra.mxu0 %v1274
      %v2075 = vpop.f32.mrf.mxu0
      %v2076 = vadd.f32 0.0, %v2075
      %v2077 = vpop.f32.mrf.mxu0
      %v2078 = vpop.f32.mrf.mxu0
      %v2079 = vadd.f32 0.0, %v2078
      %v2080 = vpop.f32.mrf.mxu0
      %2081 = vdwg.mxu0
      %v2082 = vpack.c.bf16 %v1575, %v1572
      %v2083 = vpack.c.bf16 %v1583, %v1580
      %v2084 = vpack.c.bf16 %v1591, %v1588
      %v2085 = vpack.c.bf16 %v1599, %v1596
      %v2086 = vpack.c.bf16 %v1607, %v1604
      %v2087 = vpack.c.bf16 %v1615, %v1612
      %v2088 = vpack.c.bf16 %v1623, %v1620
      %v2089 = vpack.c.bf16 %v1631, %v1628
      %v2090 = vpack.c.bf16 %v1639, %v1636
      %v2091 = vpack.c.bf16 %v1647, %v1644
      %v2092 = vpack.c.bf16 %v1655, %v1652
      %v2093 = vpack.c.bf16 %v1663, %v1660
      %v2094 = vpack.c.bf16 %v1671, %v1668
      %v2095 = vpack.c.bf16 %v1679, %v1676
      %v2096 = vpack.c.bf16 %v1687, %v1684
      %v2097 = vpack.c.bf16 %v1695, %v1692
      %v2098 = vpack.c.bf16 %v1703, %v1700
      %v2099 = vpack.c.bf16 %v1711, %v1708
      %v2100 = vpack.c.bf16 %v1719, %v1716
      %v2101 = vpack.c.bf16 %v1727, %v1724
      %v2102 = vpack.c.bf16 %v1735, %v1732
      %v2103 = vpack.c.bf16 %v1743, %v1740
      %v2104 = vpack.c.bf16 %v1751, %v1748
      %v2105 = vpack.c.bf16 %v1759, %v1756
      %v2106 = vpack.c.bf16 %v1767, %v1764
      %v2107 = vpack.c.bf16 %v1775, %v1772
      %v2108 = vpack.c.bf16 %v1783, %v1780
      %v2109 = vpack.c.bf16 %v1791, %v1788
      %v2110 = vpack.c.bf16 %v1799, %v1796
      %v2111 = vpack.c.bf16 %v1807, %v1804
      %v2112 = vpack.c.bf16 %v1815, %v1812
      %v2113 = vpack.c.bf16 %v1823, %v1820
      %v2114 = vpack.c.bf16 %v1831, %v1828
      %v2115 = vpack.c.bf16 %v1839, %v1836
      %v2116 = vpack.c.bf16 %v1847, %v1844
      %v2117 = vpack.c.bf16 %v1855, %v1852
      %v2118 = vpack.c.bf16 %v1863, %v1860
      %v2119 = vpack.c.bf16 %v1871, %v1868
      %v2120 = vpack.c.bf16 %v1879, %v1876
      %v2121 = vpack.c.bf16 %v1887, %v1884
      %v2122 = vpack.c.bf16 %v1895, %v1892
      %v2123 = vpack.c.bf16 %v1903, %v1900
      %v2124 = vpack.c.bf16 %v1911, %v1908
      %v2125 = vpack.c.bf16 %v1919, %v1916
      %v2126 = vpack.c.bf16 %v1927, %v1924
      %v2127 = vpack.c.bf16 %v1935, %v1932
      %v2128 = vpack.c.bf16 %v1943, %v1940
      %v2129 = vpack.c.bf16 %v1951, %v1948
      %v2130 = vpack.c.bf16 %v1959, %v1956
      %v2131 = vpack.c.bf16 %v1967, %v1964
      %v2132 = vpack.c.bf16 %v1975, %v1972
      %v2133 = vpack.c.bf16 %v1983, %v1980
      %v2134 = vpack.c.bf16 %v1991, %v1988
      %v2135 = vpack.c.bf16 %v1999, %v1996
      %v2136 = vpack.c.bf16 %v2007, %v2004
      %v2137 = vpack.c.bf16 %v2015, %v2012
      %v2138 = vpack.c.bf16 %v2023, %v2020
      %v2139 = vpack.c.bf16 %v2031, %v2028
      %v2140 = vpack.c.bf16 %v2039, %v2036
      %v2141 = vpack.c.bf16 %v2047, %v2044
      %v2142 = vpack.c.bf16 %v2055, %v2052
      %v2143 = vpack.c.bf16 %v2063, %v2060
      %v2144 = vpack.c.bf16 %v2071, %v2068
      %v2145 = vpack.c.bf16 %v2079, %v2076
      %v2146 = vld [vmem:[%s3] sm:$0xf]
      %v2147 = vld [vmem:[%s3 + $0x4] sm:$0xf]
      %v2148 = vld [vmem:[%s3 + $0x8] sm:$0xf]
      %v2149 = vld [vmem:[%s3 + $0xc] sm:$0xf]
      %s2150 = scalar_lea.vmem %s3, 16
      %v2151 = vld [vmem:[%s2150] sm:$0xf]
      %v2152 = vld [vmem:[%s2150 + $0x4] sm:$0xf]
      %v2153 = vld [vmem:[%s2150 + $0x8] sm:$0xf]
      %v2154 = vld [vmem:[%s2150 + $0xc] sm:$0xf]
      %v2159 = vunpack.c.l.b16 %v2151
      %v2160 = vunpack.c.l.b16 %v2152
      %v2161 = vunpack.c.l.b16 %v2153
      %v2162 = vunpack.c.l.b16 %v2154
      %v2163 = vpack.c.b16 %v2160, %v2159
      %v2164 = vpack.c.b16 %v2162, %v2161
      %vm2167 = vcmask 261120
      %v2169 = vsel %vm2167, %v2086, 0
      %v2172 = vsel %vm2167, %v2087, 0
      %v2175 = vsel %vm2167, %v2088, 0
      %v2178 = vsel %vm2167, %v2089, 0
      %2180 = vmatprep.subr.bf16.mxu0 0
      %2181 = vmatpush1.bf16.msra.mxu0 0
      %2182 = vmatprep.subr.bf16.mxu0 0
      %2183 = vmatpush1.bf16.msra.mxu0 0
      %2184 = vmatprep.subr.bf16.mxu0 0
      %2185 = vmatpush1.bf16.msra.mxu0 0
      %2186 = vmatprep.subr.bf16.mxu0 0
      %2187 = vmatpush1.bf16.msra.mxu0 0
      %2188 = vmatprep.subr.bf16.mxu0 0
      %2189 = vmatpush1.bf16.msra.mxu0 0
      %2190 = vmatprep.subr.bf16.mxu0 0
      %2191 = vmatpush1.bf16.msra.mxu0 0
      %2192 = vmatprep.subr.bf16.mxu0 0
      %2193 = vmatpush1.bf16.msra.mxu0 %v2164
      %2194 = vmatprep.subr.bf16.mxu0 0
      %2195 = vmatpush1.bf16.msra.mxu0 %v2163
      %2196 = vmatprep.subr.bf16.mxu0 0
      %2197 = vmatpush2.bf16.msra.mxu0 0
      %2198 = vmatprep.subr.bf16.mxu0 0
      %2199 = vmatpush2.bf16.msra.mxu0 0
      %2200 = vmatprep.subr.bf16.mxu0 0
      %2201 = vmatpush2.bf16.msra.mxu0 0
      %2202 = vmatprep.subr.bf16.mxu0 0
      %2203 = vmatpush2.bf16.msra.mxu0 0
      %2204 = vmatprep.subr.bf16.mxu0 0
      %2205 = vmatpush2.bf16.msra.mxu0 0
      %2206 = vmatprep.subr.bf16.mxu0 0
      %2207 = vmatpush2.bf16.msra.mxu0 0
      %2208 = vmatprep.subr.bf16.mxu0 0
      %2209 = vmatpush2.bf16.msra.mxu0 0
      %2210 = vmatprep.subr.bf16.mxu0 0
      %2211 = vmatpush2.bf16.msra.mxu0 0
      %2212 = vmatprep.mubr.bf16.mxu0 0
      %2213 = vmatmul.mubr.bf16.gmra.mxu0 %v2169
      %v2214 = vpop.f32.mrf.mxu0
      %v2215 = vadd.f32 0.0, %v2214
      %v2216 = vpop.f32.mrf.mxu0
      %v2217 = vpop.f32.mrf.mxu0
      %v2218 = vadd.f32 0.0, %v2217
      %v2219 = vpop.f32.mrf.mxu0
      %2220 = vmatprep.mubr.bf16.mxu0 0
      %2221 = vmatmul.mubr.bf16.gmra.mxu0 %v2172
      %v2222 = vpop.f32.mrf.mxu0
      %v2223 = vadd.f32 0.0, %v2222
      %v2224 = vpop.f32.mrf.mxu0
      %v2225 = vpop.f32.mrf.mxu0
      %v2226 = vadd.f32 0.0, %v2225
      %v2227 = vpop.f32.mrf.mxu0
      %2228 = vmatprep.mubr.bf16.mxu0 0
      %2229 = vmatmul.mubr.bf16.gmra.mxu0 %v2175
      %v2230 = vpop.f32.mrf.mxu0
      %v2231 = vadd.f32 0.0, %v2230
      %v2232 = vpop.f32.mrf.mxu0
      %v2233 = vpop.f32.mrf.mxu0
      %v2234 = vadd.f32 0.0, %v2233
      %v2235 = vpop.f32.mrf.mxu0
      %2236 = vmatprep.mubr.bf16.mxu0 0
      %2237 = vmatmul.mubr.bf16.gmra.mxu0 %v2178
      %v2238 = vpop.f32.mrf.mxu0
      %v2239 = vadd.f32 0.0, %v2238
      %v2240 = vpop.f32.mrf.mxu0
      %v2241 = vpop.f32.mrf.mxu0
      %v2242 = vpop.f32.mrf.mxu0
      %2243 = vdwg.mxu0
      %v2248 = vunpack.c.l.b16 %v2146
      %v2249 = vunpack.c.l.b16 %v2147
      %v2250 = vunpack.c.l.b16 %v2148
      %v2251 = vunpack.c.l.b16 %v2149
      %v2252 = vpack.c.b16 %v2249, %v2248
      %v2253 = vpack.c.b16 %v2251, %v2250
      %v2257 = vsel %vm2167, %v2082, 0
      %v2260 = vsel %vm2167, %v2083, 0
      %v2263 = vsel %vm2167, %v2084, 0
      %v2266 = vsel %vm2167, %v2085, 0
      %2268 = vmatprep.subr.bf16.mxu0 0
      %2269 = vmatpush1.bf16.msra.mxu0 0
      %2270 = vmatprep.subr.bf16.mxu0 0
      %2271 = vmatpush1.bf16.msra.mxu0 0
      %2272 = vmatprep.subr.bf16.mxu0 0
      %2273 = vmatpush1.bf16.msra.mxu0 0
      %2274 = vmatprep.subr.bf16.mxu0 0
      %2275 = vmatpush1.bf16.msra.mxu0 0
      %2276 = vmatprep.subr.bf16.mxu0 0
      %2277 = vmatpush1.bf16.msra.mxu0 0
      %2278 = vmatprep.subr.bf16.mxu0 0
      %2279 = vmatpush1.bf16.msra.mxu0 0
      %2280 = vmatprep.subr.bf16.mxu0 0
      %2281 = vmatpush1.bf16.msra.mxu0 %v2253
      %2282 = vmatprep.subr.bf16.mxu0 0
      %2283 = vmatpush1.bf16.msra.mxu0 %v2252
      %2284 = vmatprep.subr.bf16.mxu0 0
      %2285 = vmatpush2.bf16.msra.mxu0 0
      %2286 = vmatprep.subr.bf16.mxu0 0
      %2287 = vmatpush2.bf16.msra.mxu0 0
      %2288 = vmatprep.subr.bf16.mxu0 0
      %2289 = vmatpush2.bf16.msra.mxu0 0
      %2290 = vmatprep.subr.bf16.mxu0 0
      %2291 = vmatpush2.bf16.msra.mxu0 0
      %2292 = vmatprep.subr.bf16.mxu0 0
      %2293 = vmatpush2.bf16.msra.mxu0 0
      %2294 = vmatprep.subr.bf16.mxu0 0
      %2295 = vmatpush2.bf16.msra.mxu0 0
      %2296 = vmatprep.subr.bf16.mxu0 0
      %2297 = vmatpush2.bf16.msra.mxu0 0
      %2298 = vmatprep.subr.bf16.mxu0 0
      %2299 = vmatpush2.bf16.msra.mxu0 0
      %2300 = vmatprep.mubr.bf16.mxu0 0
      %2301 = vmatmul.mubr.bf16.gmra.mxu0 %v2257
      %v2302 = vpop.f32.mrf.mxu0
      %v2303 = vadd.f32 %v2215, %v2302
      %v2304 = vpop.f32.mrf.mxu0
      %v2305 = vpop.f32.mrf.mxu0
      %v2306 = vadd.f32 %v2218, %v2305
      %v2307 = vpop.f32.mrf.mxu0
      %2308 = vmatprep.mubr.bf16.mxu0 0
      %2309 = vmatmul.mubr.bf16.gmra.mxu0 %v2260
      %v2310 = vpop.f32.mrf.mxu0
      %v2311 = vadd.f32 %v2223, %v2310
      %v2312 = vpop.f32.mrf.mxu0
      %v2313 = vpop.f32.mrf.mxu0
      %v2314 = vadd.f32 %v2226, %v2313
      %v2315 = vpop.f32.mrf.mxu0
      %2316 = vmatprep.mubr.bf16.mxu0 0
      %2317 = vmatmul.mubr.bf16.gmra.mxu0 %v2263
      %v2318 = vpop.f32.mrf.mxu0
      %v2319 = vadd.f32 %v2231, %v2318
      %v2320 = vpop.f32.mrf.mxu0
      %v2321 = vpop.f32.mrf.mxu0
      %v2322 = vadd.f32 %v2234, %v2321
      %v2323 = vpop.f32.mrf.mxu0
      %2324 = vmatprep.mubr.bf16.mxu0 0
      %2325 = vmatmul.mubr.bf16.gmra.mxu0 %v2266
      %v2326 = vpop.f32.mrf.mxu0
      %v2327 = vadd.f32 %v2239, %v2326
      %v2328 = vpop.f32.mrf.mxu0
      %v2329 = vpop.f32.mrf.mxu0
      %v2330 = vpop.f32.mrf.mxu0
      %2331 = vdwg.mxu0
      %s2332 = scalar_lea.vmem %s3, 32
      %v2333 = vld [vmem:[%s2332] sm:$0xf]
      %v2334 = vld [vmem:[%s2332 + $0x4] sm:$0xf]
      %v2335 = vld [vmem:[%s2332 + $0x8] sm:$0xf]
      %v2336 = vld [vmem:[%s2332 + $0xc] sm:$0xf]
      %v2341 = vunpack.c.l.b16 %v2333
      %v2342 = vunpack.c.l.b16 %v2334
      %v2343 = vunpack.c.l.b16 %v2335
      %v2344 = vunpack.c.l.b16 %v2336
      %v2345 = vpack.c.b16 %v2342, %v2341
      %v2346 = vpack.c.b16 %v2344, %v2343
      %v2350 = vsel %vm2167, %v2090, 0
      %v2353 = vsel %vm2167, %v2091, 0
      %v2356 = vsel %vm2167, %v2092, 0
      %v2359 = vsel %vm2167, %v2093, 0
      %2361 = vmatprep.subr.bf16.mxu0 0
      %2362 = vmatpush1.bf16.msra.mxu0 0
      %2363 = vmatprep.subr.bf16.mxu0 0
      %2364 = vmatpush1.bf16.msra.mxu0 0
      %2365 = vmatprep.subr.bf16.mxu0 0
      %2366 = vmatpush1.bf16.msra.mxu0 0
      %2367 = vmatprep.subr.bf16.mxu0 0
      %2368 = vmatpush1.bf16.msra.mxu0 0
      %2369 = vmatprep.subr.bf16.mxu0 0
      %2370 = vmatpush1.bf16.msra.mxu0 0
      %2371 = vmatprep.subr.bf16.mxu0 0
      %2372 = vmatpush1.bf16.msra.mxu0 0
      %2373 = vmatprep.subr.bf16.mxu0 0
      %2374 = vmatpush1.bf16.msra.mxu0 %v2346
      %2375 = vmatprep.subr.bf16.mxu0 0
      %2376 = vmatpush1.bf16.msra.mxu0 %v2345
      %2377 = vmatprep.subr.bf16.mxu0 0
      %2378 = vmatpush2.bf16.msra.mxu0 0
      %2379 = vmatprep.subr.bf16.mxu0 0
      %2380 = vmatpush2.bf16.msra.mxu0 0
      %2381 = vmatprep.subr.bf16.mxu0 0
      %2382 = vmatpush2.bf16.msra.mxu0 0
      %2383 = vmatprep.subr.bf16.mxu0 0
      %2384 = vmatpush2.bf16.msra.mxu0 0
      %2385 = vmatprep.subr.bf16.mxu0 0
      %2386 = vmatpush2.bf16.msra.mxu0 0
      %2387 = vmatprep.subr.bf16.mxu0 0
      %2388 = vmatpush2.bf16.msra.mxu0 0
      %2389 = vmatprep.subr.bf16.mxu0 0
      %2390 = vmatpush2.bf16.msra.mxu0 0
      %2391 = vmatprep.subr.bf16.mxu0 0
      %2392 = vmatpush2.bf16.msra.mxu0 0
      %2393 = vmatprep.mubr.bf16.mxu0 0
      %2394 = vmatmul.mubr.bf16.gmra.mxu0 %v2350
      %v2395 = vpop.f32.mrf.mxu0
      %v2396 = vadd.f32 0.0, %v2395
      %v2397 = vpop.f32.mrf.mxu0
      %v2398 = vpop.f32.mrf.mxu0
      %v2399 = vadd.f32 0.0, %v2398
      %v2400 = vpop.f32.mrf.mxu0
      %2401 = vmatprep.mubr.bf16.mxu0 0
      %2402 = vmatmul.mubr.bf16.gmra.mxu0 %v2353
      %v2403 = vpop.f32.mrf.mxu0
      %v2404 = vadd.f32 0.0, %v2403
      %v2405 = vpop.f32.mrf.mxu0
      %v2406 = vpop.f32.mrf.mxu0
      %v2407 = vadd.f32 0.0, %v2406
      %v2408 = vpop.f32.mrf.mxu0
      %2409 = vmatprep.mubr.bf16.mxu0 0
      %2410 = vmatmul.mubr.bf16.gmra.mxu0 %v2356
      %v2411 = vpop.f32.mrf.mxu0
      %v2412 = vadd.f32 0.0, %v2411
      %v2413 = vpop.f32.mrf.mxu0
      %v2414 = vpop.f32.mrf.mxu0
      %v2415 = vadd.f32 0.0, %v2414
      %v2416 = vpop.f32.mrf.mxu0
      %2417 = vmatprep.mubr.bf16.mxu0 0
      %2418 = vmatmul.mubr.bf16.gmra.mxu0 %v2359
      %v2419 = vpop.f32.mrf.mxu0
      %v2420 = vadd.f32 0.0, %v2419
      %v2421 = vpop.f32.mrf.mxu0
      %v2422 = vpop.f32.mrf.mxu0
      %v2423 = vpop.f32.mrf.mxu0
      %2424 = vdwg.mxu0
      %v2425 = vadd.f32 %v2303, %v2396
      %v2426 = vadd.f32 %v2306, %v2399
      %v2427 = vadd.f32 %v2311, %v2404
      %v2428 = vadd.f32 %v2314, %v2407
      %v2429 = vadd.f32 %v2319, %v2412
      %v2430 = vadd.f32 %v2322, %v2415
      %v2431 = vadd.f32 %v2327, %v2420
      %s2432 = scalar_lea.vmem %s3, 48
      %v2433 = vld [vmem:[%s2432] sm:$0xf]
      %v2434 = vld [vmem:[%s2432 + $0x4] sm:$0xf]
      %v2435 = vld [vmem:[%s2432 + $0x8] sm:$0xf]
      %v2436 = vld [vmem:[%s2432 + $0xc] sm:$0xf]
      %v2441 = vunpack.c.l.b16 %v2433
      %v2442 = vunpack.c.l.b16 %v2434
      %v2443 = vunpack.c.l.b16 %v2435
      %v2444 = vunpack.c.l.b16 %v2436
      %v2445 = vpack.c.b16 %v2442, %v2441
      %v2446 = vpack.c.b16 %v2444, %v2443
      %v2450 = vsel %vm2167, %v2094, 0
      %v2453 = vsel %vm2167, %v2095, 0
      %v2456 = vsel %vm2167, %v2096, 0
      %v2459 = vsel %vm2167, %v2097, 0
      %2461 = vmatprep.subr.bf16.mxu0 0
      %2462 = vmatpush1.bf16.msra.mxu0 0
      %2463 = vmatprep.subr.bf16.mxu0 0
      %2464 = vmatpush1.bf16.msra.mxu0 0
      %2465 = vmatprep.subr.bf16.mxu0 0
      %2466 = vmatpush1.bf16.msra.mxu0 0
      %2467 = vmatprep.subr.bf16.mxu0 0
      %2468 = vmatpush1.bf16.msra.mxu0 0
      %2469 = vmatprep.subr.bf16.mxu0 0
      %2470 = vmatpush1.bf16.msra.mxu0 0
      %2471 = vmatprep.subr.bf16.mxu0 0
      %2472 = vmatpush1.bf16.msra.mxu0 0
      %2473 = vmatprep.subr.bf16.mxu0 0
      %2474 = vmatpush1.bf16.msra.mxu0 %v2446
      %2475 = vmatprep.subr.bf16.mxu0 0
      %2476 = vmatpush1.bf16.msra.mxu0 %v2445
      %2477 = vmatprep.subr.bf16.mxu0 0
      %2478 = vmatpush2.bf16.msra.mxu0 0
      %2479 = vmatprep.subr.bf16.mxu0 0
      %2480 = vmatpush2.bf16.msra.mxu0 0
      %2481 = vmatprep.subr.bf16.mxu0 0
      %2482 = vmatpush2.bf16.msra.mxu0 0
      %2483 = vmatprep.subr.bf16.mxu0 0
      %2484 = vmatpush2.bf16.msra.mxu0 0
      %2485 = vmatprep.subr.bf16.mxu0 0
      %2486 = vmatpush2.bf16.msra.mxu0 0
      %2487 = vmatprep.subr.bf16.mxu0 0
      %2488 = vmatpush2.bf16.msra.mxu0 0
      %2489 = vmatprep.subr.bf16.mxu0 0
      %2490 = vmatpush2.bf16.msra.mxu0 0
      %2491 = vmatprep.subr.bf16.mxu0 0
      %2492 = vmatpush2.bf16.msra.mxu0 0
      %2493 = vmatprep.mubr.bf16.mxu0 0
      %2494 = vmatmul.mubr.bf16.gmra.mxu0 %v2450
      %v2495 = vpop.f32.mrf.mxu0
      %v2496 = vadd.f32 0.0, %v2495
      %v2497 = vpop.f32.mrf.mxu0
      %v2498 = vpop.f32.mrf.mxu0
      %v2499 = vadd.f32 0.0, %v2498
      %v2500 = vpop.f32.mrf.mxu0
      %2501 = vmatprep.mubr.bf16.mxu0 0
      %2502 = vmatmul.mubr.bf16.gmra.mxu0 %v2453
      %v2503 = vpop.f32.mrf.mxu0
      %v2504 = vadd.f32 0.0, %v2503
      %v2505 = vpop.f32.mrf.mxu0
      %v2506 = vpop.f32.mrf.mxu0
      %v2507 = vadd.f32 0.0, %v2506
      %v2508 = vpop.f32.mrf.mxu0
      %2509 = vmatprep.mubr.bf16.mxu0 0
      %2510 = vmatmul.mubr.bf16.gmra.mxu0 %v2456
      %v2511 = vpop.f32.mrf.mxu0
      %v2512 = vadd.f32 0.0, %v2511
      %v2513 = vpop.f32.mrf.mxu0
      %v2514 = vpop.f32.mrf.mxu0
      %v2515 = vadd.f32 0.0, %v2514
      %v2516 = vpop.f32.mrf.mxu0
      %2517 = vmatprep.mubr.bf16.mxu0 0
      %2518 = vmatmul.mubr.bf16.gmra.mxu0 %v2459
      %v2519 = vpop.f32.mrf.mxu0
      %v2520 = vadd.f32 0.0, %v2519
      %v2521 = vpop.f32.mrf.mxu0
      %v2522 = vpop.f32.mrf.mxu0
      %v2523 = vpop.f32.mrf.mxu0
      %2524 = vdwg.mxu0
      %v2525 = vadd.f32 %v2425, %v2496
      %v2526 = vadd.f32 %v2426, %v2499
      %v2527 = vadd.f32 %v2427, %v2504
      %v2528 = vadd.f32 %v2428, %v2507
      %v2529 = vadd.f32 %v2429, %v2512
      %v2530 = vadd.f32 %v2430, %v2515
      %v2531 = vadd.f32 %v2431, %v2520
      %s2532 = scalar_lea.vmem %s3, 64
      %v2533 = vld [vmem:[%s2532] sm:$0xf]
      %v2534 = vld [vmem:[%s2532 + $0x4] sm:$0xf]
      %v2535 = vld [vmem:[%s2532 + $0x8] sm:$0xf]
      %v2536 = vld [vmem:[%s2532 + $0xc] sm:$0xf]
      %v2541 = vunpack.c.l.b16 %v2533
      %v2542 = vunpack.c.l.b16 %v2534
      %v2543 = vunpack.c.l.b16 %v2535
      %v2544 = vunpack.c.l.b16 %v2536
      %v2545 = vpack.c.b16 %v2542, %v2541
      %v2546 = vpack.c.b16 %v2544, %v2543
      %v2550 = vsel %vm2167, %v2098, 0
      %v2553 = vsel %vm2167, %v2099, 0
      %v2556 = vsel %vm2167, %v2100, 0
      %v2559 = vsel %vm2167, %v2101, 0
      %2561 = vmatprep.subr.bf16.mxu0 0
      %2562 = vmatpush1.bf16.msra.mxu0 0
      %2563 = vmatprep.subr.bf16.mxu0 0
      %2564 = vmatpush1.bf16.msra.mxu0 0
      %2565 = vmatprep.subr.bf16.mxu0 0
      %2566 = vmatpush1.bf16.msra.mxu0 0
      %2567 = vmatprep.subr.bf16.mxu0 0
      %2568 = vmatpush1.bf16.msra.mxu0 0
      %2569 = vmatprep.subr.bf16.mxu0 0
      %2570 = vmatpush1.bf16.msra.mxu0 0
      %2571 = vmatprep.subr.bf16.mxu0 0
      %2572 = vmatpush1.bf16.msra.mxu0 0
      %2573 = vmatprep.subr.bf16.mxu0 0
      %2574 = vmatpush1.bf16.msra.mxu0 %v2546
      %2575 = vmatprep.subr.bf16.mxu0 0
      %2576 = vmatpush1.bf16.msra.mxu0 %v2545
      %2577 = vmatprep.subr.bf16.mxu0 0
      %2578 = vmatpush2.bf16.msra.mxu0 0
      %2579 = vmatprep.subr.bf16.mxu0 0
      %2580 = vmatpush2.bf16.msra.mxu0 0
      %2581 = vmatprep.subr.bf16.mxu0 0
      %2582 = vmatpush2.bf16.msra.mxu0 0
      %2583 = vmatprep.subr.bf16.mxu0 0
      %2584 = vmatpush2.bf16.msra.mxu0 0
      %2585 = vmatprep.subr.bf16.mxu0 0
      %2586 = vmatpush2.bf16.msra.mxu0 0
      %2587 = vmatprep.subr.bf16.mxu0 0
      %2588 = vmatpush2.bf16.msra.mxu0 0
      %2589 = vmatprep.subr.bf16.mxu0 0
      %2590 = vmatpush2.bf16.msra.mxu0 0
      %2591 = vmatprep.subr.bf16.mxu0 0
      %2592 = vmatpush2.bf16.msra.mxu0 0
      %2593 = vmatprep.mubr.bf16.mxu0 0
      %2594 = vmatmul.mubr.bf16.gmra.mxu0 %v2550
      %v2595 = vpop.f32.mrf.mxu0
      %v2596 = vadd.f32 0.0, %v2595
      %v2597 = vpop.f32.mrf.mxu0
      %v2598 = vpop.f32.mrf.mxu0
      %v2599 = vadd.f32 0.0, %v2598
      %v2600 = vpop.f32.mrf.mxu0
      %2601 = vmatprep.mubr.bf16.mxu0 0
      %2602 = vmatmul.mubr.bf16.gmra.mxu0 %v2553
      %v2603 = vpop.f32.mrf.mxu0
      %v2604 = vadd.f32 0.0, %v2603
      %v2605 = vpop.f32.mrf.mxu0
      %v2606 = vpop.f32.mrf.mxu0
      %v2607 = vadd.f32 0.0, %v2606
      %v2608 = vpop.f32.mrf.mxu0
      %2609 = vmatprep.mubr.bf16.mxu0 0
      %2610 = vmatmul.mubr.bf16.gmra.mxu0 %v2556
      %v2611 = vpop.f32.mrf.mxu0
      %v2612 = vadd.f32 0.0, %v2611
      %v2613 = vpop.f32.mrf.mxu0
      %v2614 = vpop.f32.mrf.mxu0
      %v2615 = vadd.f32 0.0, %v2614
      %v2616 = vpop.f32.mrf.mxu0
      %2617 = vmatprep.mubr.bf16.mxu0 0
      %2618 = vmatmul.mubr.bf16.gmra.mxu0 %v2559
      %v2619 = vpop.f32.mrf.mxu0
      %v2620 = vadd.f32 0.0, %v2619
      %v2621 = vpop.f32.mrf.mxu0
      %v2622 = vpop.f32.mrf.mxu0
      %v2623 = vpop.f32.mrf.mxu0
      %2624 = vdwg.mxu0
      %v2625 = vadd.f32 %v2525, %v2596
      %v2626 = vadd.f32 %v2526, %v2599
      %v2627 = vadd.f32 %v2527, %v2604
      %v2628 = vadd.f32 %v2528, %v2607
      %v2629 = vadd.f32 %v2529, %v2612
      %v2630 = vadd.f32 %v2530, %v2615
      %v2631 = vadd.f32 %v2531, %v2620
      %s2632 = scalar_lea.vmem %s3, 80
      %v2633 = vld [vmem:[%s2632] sm:$0xf]
      %v2634 = vld [vmem:[%s2632 + $0x4] sm:$0xf]
      %v2635 = vld [vmem:[%s2632 + $0x8] sm:$0xf]
      %v2636 = vld [vmem:[%s2632 + $0xc] sm:$0xf]
      %v2641 = vunpack.c.l.b16 %v2633
      %v2642 = vunpack.c.l.b16 %v2634
      %v2643 = vunpack.c.l.b16 %v2635
      %v2644 = vunpack.c.l.b16 %v2636
      %v2645 = vpack.c.b16 %v2642, %v2641
      %v2646 = vpack.c.b16 %v2644, %v2643
      %v2650 = vsel %vm2167, %v2102, 0
      %v2653 = vsel %vm2167, %v2103, 0
      %v2656 = vsel %vm2167, %v2104, 0
      %v2659 = vsel %vm2167, %v2105, 0
      %2661 = vmatprep.subr.bf16.mxu0 0
      %2662 = vmatpush1.bf16.msra.mxu0 0
      %2663 = vmatprep.subr.bf16.mxu0 0
      %2664 = vmatpush1.bf16.msra.mxu0 0
      %2665 = vmatprep.subr.bf16.mxu0 0
      %2666 = vmatpush1.bf16.msra.mxu0 0
      %2667 = vmatprep.subr.bf16.mxu0 0
      %2668 = vmatpush1.bf16.msra.mxu0 0
      %2669 = vmatprep.subr.bf16.mxu0 0
      %2670 = vmatpush1.bf16.msra.mxu0 0
      %2671 = vmatprep.subr.bf16.mxu0 0
      %2672 = vmatpush1.bf16.msra.mxu0 0
      %2673 = vmatprep.subr.bf16.mxu0 0
      %2674 = vmatpush1.bf16.msra.mxu0 %v2646
      %2675 = vmatprep.subr.bf16.mxu0 0
      %2676 = vmatpush1.bf16.msra.mxu0 %v2645
      %2677 = vmatprep.subr.bf16.mxu0 0
      %2678 = vmatpush2.bf16.msra.mxu0 0
      %2679 = vmatprep.subr.bf16.mxu0 0
      %2680 = vmatpush2.bf16.msra.mxu0 0
      %2681 = vmatprep.subr.bf16.mxu0 0
      %2682 = vmatpush2.bf16.msra.mxu0 0
      %2683 = vmatprep.subr.bf16.mxu0 0
      %2684 = vmatpush2.bf16.msra.mxu0 0
      %2685 = vmatprep.subr.bf16.mxu0 0
      %2686 = vmatpush2.bf16.msra.mxu0 0
      %2687 = vmatprep.subr.bf16.mxu0 0
      %2688 = vmatpush2.bf16.msra.mxu0 0
      %2689 = vmatprep.subr.bf16.mxu0 0
      %2690 = vmatpush2.bf16.msra.mxu0 0
      %2691 = vmatprep.subr.bf16.mxu0 0
      %2692 = vmatpush2.bf16.msra.mxu0 0
      %2693 = vmatprep.mubr.bf16.mxu0 0
      %2694 = vmatmul.mubr.bf16.gmra.mxu0 %v2650
      %v2695 = vpop.f32.mrf.mxu0
      %v2696 = vadd.f32 0.0, %v2695
      %v2697 = vpop.f32.mrf.mxu0
      %v2698 = vpop.f32.mrf.mxu0
      %v2699 = vadd.f32 0.0, %v2698
      %v2700 = vpop.f32.mrf.mxu0
      %2701 = vmatprep.mubr.bf16.mxu0 0
      %2702 = vmatmul.mubr.bf16.gmra.mxu0 %v2653
      %v2703 = vpop.f32.mrf.mxu0
      %v2704 = vadd.f32 0.0, %v2703
      %v2705 = vpop.f32.mrf.mxu0
      %v2706 = vpop.f32.mrf.mxu0
      %v2707 = vadd.f32 0.0, %v2706
      %v2708 = vpop.f32.mrf.mxu0
      %2709 = vmatprep.mubr.bf16.mxu0 0
      %2710 = vmatmul.mubr.bf16.gmra.mxu0 %v2656
      %v2711 = vpop.f32.mrf.mxu0
      %v2712 = vadd.f32 0.0, %v2711
      %v2713 = vpop.f32.mrf.mxu0
      %v2714 = vpop.f32.mrf.mxu0
      %v2715 = vadd.f32 0.0, %v2714
      %v2716 = vpop.f32.mrf.mxu0
      %2717 = vmatprep.mubr.bf16.mxu0 0
      %2718 = vmatmul.mubr.bf16.gmra.mxu0 %v2659
      %v2719 = vpop.f32.mrf.mxu0
      %v2720 = vadd.f32 0.0, %v2719
      %v2721 = vpop.f32.mrf.mxu0
      %v2722 = vpop.f32.mrf.mxu0
      %v2723 = vpop.f32.mrf.mxu0
      %2724 = vdwg.mxu0
      %v2725 = vadd.f32 %v2625, %v2696
      %v2726 = vadd.f32 %v2626, %v2699
      %v2727 = vadd.f32 %v2627, %v2704
      %v2728 = vadd.f32 %v2628, %v2707
      %v2729 = vadd.f32 %v2629, %v2712
      %v2730 = vadd.f32 %v2630, %v2715
      %v2731 = vadd.f32 %v2631, %v2720
      %s2732 = scalar_lea.vmem %s3, 96
      %v2733 = vld [vmem:[%s2732] sm:$0xf]
      %v2734 = vld [vmem:[%s2732 + $0x4] sm:$0xf]
      %v2735 = vld [vmem:[%s2732 + $0x8] sm:$0xf]
      %v2736 = vld [vmem:[%s2732 + $0xc] sm:$0xf]
      %v2741 = vunpack.c.l.b16 %v2733
      %v2742 = vunpack.c.l.b16 %v2734
      %v2743 = vunpack.c.l.b16 %v2735
      %v2744 = vunpack.c.l.b16 %v2736
      %v2745 = vpack.c.b16 %v2742, %v2741
      %v2746 = vpack.c.b16 %v2744, %v2743
      %v2750 = vsel %vm2167, %v2106, 0
      %v2753 = vsel %vm2167, %v2107, 0
      %v2756 = vsel %vm2167, %v2108, 0
      %v2759 = vsel %vm2167, %v2109, 0
      %2761 = vmatprep.subr.bf16.mxu0 0
      %2762 = vmatpush1.bf16.msra.mxu0 0
      %2763 = vmatprep.subr.bf16.mxu0 0
      %2764 = vmatpush1.bf16.msra.mxu0 0
      %2765 = vmatprep.subr.bf16.mxu0 0
      %2766 = vmatpush1.bf16.msra.mxu0 0
      %2767 = vmatprep.subr.bf16.mxu0 0
      %2768 = vmatpush1.bf16.msra.mxu0 0
      %2769 = vmatprep.subr.bf16.mxu0 0
      %2770 = vmatpush1.bf16.msra.mxu0 0
      %2771 = vmatprep.subr.bf16.mxu0 0
      %2772 = vmatpush1.bf16.msra.mxu0 0
      %2773 = vmatprep.subr.bf16.mxu0 0
      %2774 = vmatpush1.bf16.msra.mxu0 %v2746
      %2775 = vmatprep.subr.bf16.mxu0 0
      %2776 = vmatpush1.bf16.msra.mxu0 %v2745
      %2777 = vmatprep.subr.bf16.mxu0 0
      %2778 = vmatpush2.bf16.msra.mxu0 0
      %2779 = vmatprep.subr.bf16.mxu0 0
      %2780 = vmatpush2.bf16.msra.mxu0 0
      %2781 = vmatprep.subr.bf16.mxu0 0
      %2782 = vmatpush2.bf16.msra.mxu0 0
      %2783 = vmatprep.subr.bf16.mxu0 0
      %2784 = vmatpush2.bf16.msra.mxu0 0
      %2785 = vmatprep.subr.bf16.mxu0 0
      %2786 = vmatpush2.bf16.msra.mxu0 0
      %2787 = vmatprep.subr.bf16.mxu0 0
      %2788 = vmatpush2.bf16.msra.mxu0 0
      %2789 = vmatprep.subr.bf16.mxu0 0
      %2790 = vmatpush2.bf16.msra.mxu0 0
      %2791 = vmatprep.subr.bf16.mxu0 0
      %2792 = vmatpush2.bf16.msra.mxu0 0
      %2793 = vmatprep.mubr.bf16.mxu0 0
      %2794 = vmatmul.mubr.bf16.gmra.mxu0 %v2750
      %v2795 = vpop.f32.mrf.mxu0
      %v2796 = vadd.f32 0.0, %v2795
      %v2797 = vpop.f32.mrf.mxu0
      %v2798 = vpop.f32.mrf.mxu0
      %v2799 = vadd.f32 0.0, %v2798
      %v2800 = vpop.f32.mrf.mxu0
      %2801 = vmatprep.mubr.bf16.mxu0 0
      %2802 = vmatmul.mubr.bf16.gmra.mxu0 %v2753
      %v2803 = vpop.f32.mrf.mxu0
      %v2804 = vadd.f32 0.0, %v2803
      %v2805 = vpop.f32.mrf.mxu0
      %v2806 = vpop.f32.mrf.mxu0
      %v2807 = vadd.f32 0.0, %v2806
      %v2808 = vpop.f32.mrf.mxu0
      %2809 = vmatprep.mubr.bf16.mxu0 0
      %2810 = vmatmul.mubr.bf16.gmra.mxu0 %v2756
      %v2811 = vpop.f32.mrf.mxu0
      %v2812 = vadd.f32 0.0, %v2811
      %v2813 = vpop.f32.mrf.mxu0
      %v2814 = vpop.f32.mrf.mxu0
      %v2815 = vadd.f32 0.0, %v2814
      %v2816 = vpop.f32.mrf.mxu0
      %2817 = vmatprep.mubr.bf16.mxu0 0
      %2818 = vmatmul.mubr.bf16.gmra.mxu0 %v2759
      %v2819 = vpop.f32.mrf.mxu0
      %v2820 = vadd.f32 0.0, %v2819
      %v2821 = vpop.f32.mrf.mxu0
      %v2822 = vpop.f32.mrf.mxu0
      %v2823 = vpop.f32.mrf.mxu0
      %2824 = vdwg.mxu0
      %v2825 = vadd.f32 %v2725, %v2796
      %v2826 = vadd.f32 %v2726, %v2799
      %v2827 = vadd.f32 %v2727, %v2804
      %v2828 = vadd.f32 %v2728, %v2807
      %v2829 = vadd.f32 %v2729, %v2812
      %v2830 = vadd.f32 %v2730, %v2815
      %v2831 = vadd.f32 %v2731, %v2820
      %s2832 = scalar_lea.vmem %s3, 112
      %v2833 = vld [vmem:[%s2832] sm:$0xf]
      %v2834 = vld [vmem:[%s2832 + $0x4] sm:$0xf]
      %v2835 = vld [vmem:[%s2832 + $0x8] sm:$0xf]
      %v2836 = vld [vmem:[%s2832 + $0xc] sm:$0xf]
      %v2841 = vunpack.c.l.b16 %v2833
      %v2842 = vunpack.c.l.b16 %v2834
      %v2843 = vunpack.c.l.b16 %v2835
      %v2844 = vunpack.c.l.b16 %v2836
      %v2845 = vpack.c.b16 %v2842, %v2841
      %v2846 = vpack.c.b16 %v2844, %v2843
      %v2850 = vsel %vm2167, %v2110, 0
      %v2853 = vsel %vm2167, %v2111, 0
      %v2856 = vsel %vm2167, %v2112, 0
      %v2859 = vsel %vm2167, %v2113, 0
      %2861 = vmatprep.subr.bf16.mxu0 0
      %2862 = vmatpush1.bf16.msra.mxu0 0
      %2863 = vmatprep.subr.bf16.mxu0 0
      %2864 = vmatpush1.bf16.msra.mxu0 0
      %2865 = vmatprep.subr.bf16.mxu0 0
      %2866 = vmatpush1.bf16.msra.mxu0 0
      %2867 = vmatprep.subr.bf16.mxu0 0
      %2868 = vmatpush1.bf16.msra.mxu0 0
      %2869 = vmatprep.subr.bf16.mxu0 0
      %2870 = vmatpush1.bf16.msra.mxu0 0
      %2871 = vmatprep.subr.bf16.mxu0 0
      %2872 = vmatpush1.bf16.msra.mxu0 0
      %2873 = vmatprep.subr.bf16.mxu0 0
      %2874 = vmatpush1.bf16.msra.mxu0 %v2846
      %2875 = vmatprep.subr.bf16.mxu0 0
      %2876 = vmatpush1.bf16.msra.mxu0 %v2845
      %2877 = vmatprep.subr.bf16.mxu0 0
      %2878 = vmatpush2.bf16.msra.mxu0 0
      %2879 = vmatprep.subr.bf16.mxu0 0
      %2880 = vmatpush2.bf16.msra.mxu0 0
      %2881 = vmatprep.subr.bf16.mxu0 0
      %2882 = vmatpush2.bf16.msra.mxu0 0
      %2883 = vmatprep.subr.bf16.mxu0 0
      %2884 = vmatpush2.bf16.msra.mxu0 0
      %2885 = vmatprep.subr.bf16.mxu0 0
      %2886 = vmatpush2.bf16.msra.mxu0 0
      %2887 = vmatprep.subr.bf16.mxu0 0
      %2888 = vmatpush2.bf16.msra.mxu0 0
      %2889 = vmatprep.subr.bf16.mxu0 0
      %2890 = vmatpush2.bf16.msra.mxu0 0
      %2891 = vmatprep.subr.bf16.mxu0 0
      %2892 = vmatpush2.bf16.msra.mxu0 0
      %2893 = vmatprep.mubr.bf16.mxu0 0
      %2894 = vmatmul.mubr.bf16.gmra.mxu0 %v2850
      %v2895 = vpop.f32.mrf.mxu0
      %v2896 = vadd.f32 0.0, %v2895
      %v2897 = vpop.f32.mrf.mxu0
      %v2898 = vpop.f32.mrf.mxu0
      %v2899 = vadd.f32 0.0, %v2898
      %v2900 = vpop.f32.mrf.mxu0
      %2901 = vmatprep.mubr.bf16.mxu0 0
      %2902 = vmatmul.mubr.bf16.gmra.mxu0 %v2853
      %v2903 = vpop.f32.mrf.mxu0
      %v2904 = vadd.f32 0.0, %v2903
      %v2905 = vpop.f32.mrf.mxu0
      %v2906 = vpop.f32.mrf.mxu0
      %v2907 = vadd.f32 0.0, %v2906
      %v2908 = vpop.f32.mrf.mxu0
      %2909 = vmatprep.mubr.bf16.mxu0 0
      %2910 = vmatmul.mubr.bf16.gmra.mxu0 %v2856
      %v2911 = vpop.f32.mrf.mxu0
      %v2912 = vadd.f32 0.0, %v2911
      %v2913 = vpop.f32.mrf.mxu0
      %v2914 = vpop.f32.mrf.mxu0
      %v2915 = vadd.f32 0.0, %v2914
      %v2916 = vpop.f32.mrf.mxu0
      %2917 = vmatprep.mubr.bf16.mxu0 0
      %2918 = vmatmul.mubr.bf16.gmra.mxu0 %v2859
      %v2919 = vpop.f32.mrf.mxu0
      %v2920 = vadd.f32 0.0, %v2919
      %v2921 = vpop.f32.mrf.mxu0
      %v2922 = vpop.f32.mrf.mxu0
      %v2923 = vpop.f32.mrf.mxu0
      %2924 = vdwg.mxu0
      %v2925 = vadd.f32 %v2825, %v2896
      %v2926 = vadd.f32 %v2826, %v2899
      %v2927 = vadd.f32 %v2827, %v2904
      %v2928 = vadd.f32 %v2828, %v2907
      %v2929 = vadd.f32 %v2829, %v2912
      %v2930 = vadd.f32 %v2830, %v2915
      %v2931 = vadd.f32 %v2831, %v2920
      %s2932 = scalar_lea.vmem %s3, 128
      %v2933 = vld [vmem:[%s2932] sm:$0xf]
      %v2934 = vld [vmem:[%s2932 + $0x4] sm:$0xf]
      %v2935 = vld [vmem:[%s2932 + $0x8] sm:$0xf]
      %v2936 = vld [vmem:[%s2932 + $0xc] sm:$0xf]
      %v2941 = vunpack.c.l.b16 %v2933
      %v2942 = vunpack.c.l.b16 %v2934
      %v2943 = vunpack.c.l.b16 %v2935
      %v2944 = vunpack.c.l.b16 %v2936
      %v2945 = vpack.c.b16 %v2942, %v2941
      %v2946 = vpack.c.b16 %v2944, %v2943
      %v2950 = vsel %vm2167, %v2114, 0
      %v2953 = vsel %vm2167, %v2115, 0
      %v2956 = vsel %vm2167, %v2116, 0
      %v2959 = vsel %vm2167, %v2117, 0
      %2961 = vmatprep.subr.bf16.mxu0 0
      %2962 = vmatpush1.bf16.msra.mxu0 0
      %2963 = vmatprep.subr.bf16.mxu0 0
      %2964 = vmatpush1.bf16.msra.mxu0 0
      %2965 = vmatprep.subr.bf16.mxu0 0
      %2966 = vmatpush1.bf16.msra.mxu0 0
      %2967 = vmatprep.subr.bf16.mxu0 0
      %2968 = vmatpush1.bf16.msra.mxu0 0
      %2969 = vmatprep.subr.bf16.mxu0 0
      %2970 = vmatpush1.bf16.msra.mxu0 0
      %2971 = vmatprep.subr.bf16.mxu0 0
      %2972 = vmatpush1.bf16.msra.mxu0 0
      %2973 = vmatprep.subr.bf16.mxu0 0
      %2974 = vmatpush1.bf16.msra.mxu0 %v2946
      %2975 = vmatprep.subr.bf16.mxu0 0
      %2976 = vmatpush1.bf16.msra.mxu0 %v2945
      %2977 = vmatprep.subr.bf16.mxu0 0
      %2978 = vmatpush2.bf16.msra.mxu0 0
      %2979 = vmatprep.subr.bf16.mxu0 0
      %2980 = vmatpush2.bf16.msra.mxu0 0
      %2981 = vmatprep.subr.bf16.mxu0 0
      %2982 = vmatpush2.bf16.msra.mxu0 0
      %2983 = vmatprep.subr.bf16.mxu0 0
      %2984 = vmatpush2.bf16.msra.mxu0 0
      %2985 = vmatprep.subr.bf16.mxu0 0
      %2986 = vmatpush2.bf16.msra.mxu0 0
      %2987 = vmatprep.subr.bf16.mxu0 0
      %2988 = vmatpush2.bf16.msra.mxu0 0
      %2989 = vmatprep.subr.bf16.mxu0 0
      %2990 = vmatpush2.bf16.msra.mxu0 0
      %2991 = vmatprep.subr.bf16.mxu0 0
      %2992 = vmatpush2.bf16.msra.mxu0 0
      %2993 = vmatprep.mubr.bf16.mxu0 0
      %2994 = vmatmul.mubr.bf16.gmra.mxu0 %v2950
      %v2995 = vpop.f32.mrf.mxu0
      %v2996 = vadd.f32 0.0, %v2995
      %v2997 = vpop.f32.mrf.mxu0
      %v2998 = vpop.f32.mrf.mxu0
      %v2999 = vadd.f32 0.0, %v2998
      %v3000 = vpop.f32.mrf.mxu0
      %3001 = vmatprep.mubr.bf16.mxu0 0
      %3002 = vmatmul.mubr.bf16.gmra.mxu0 %v2953
      %v3003 = vpop.f32.mrf.mxu0
      %v3004 = vadd.f32 0.0, %v3003
      %v3005 = vpop.f32.mrf.mxu0
      %v3006 = vpop.f32.mrf.mxu0
      %v3007 = vadd.f32 0.0, %v3006
      %v3008 = vpop.f32.mrf.mxu0
      %3009 = vmatprep.mubr.bf16.mxu0 0
      %3010 = vmatmul.mubr.bf16.gmra.mxu0 %v2956
      %v3011 = vpop.f32.mrf.mxu0
      %v3012 = vadd.f32 0.0, %v3011
      %v3013 = vpop.f32.mrf.mxu0
      %v3014 = vpop.f32.mrf.mxu0
      %v3015 = vadd.f32 0.0, %v3014
      %v3016 = vpop.f32.mrf.mxu0
      %3017 = vmatprep.mubr.bf16.mxu0 0
      %3018 = vmatmul.mubr.bf16.gmra.mxu0 %v2959
      %v3019 = vpop.f32.mrf.mxu0
      %v3020 = vadd.f32 0.0, %v3019
      %v3021 = vpop.f32.mrf.mxu0
      %v3022 = vpop.f32.mrf.mxu0
      %v3023 = vpop.f32.mrf.mxu0
      %3024 = vdwg.mxu0
      %v3025 = vadd.f32 %v2925, %v2996
      %v3026 = vadd.f32 %v2926, %v2999
      %v3027 = vadd.f32 %v2927, %v3004
      %v3028 = vadd.f32 %v2928, %v3007
      %v3029 = vadd.f32 %v2929, %v3012
      %v3030 = vadd.f32 %v2930, %v3015
      %v3031 = vadd.f32 %v2931, %v3020
      %s3032 = scalar_lea.vmem %s3, 144
      %v3033 = vld [vmem:[%s3032] sm:$0xf]
      %v3034 = vld [vmem:[%s3032 + $0x4] sm:$0xf]
      %v3035 = vld [vmem:[%s3032 + $0x8] sm:$0xf]
      %v3036 = vld [vmem:[%s3032 + $0xc] sm:$0xf]
      %v3041 = vunpack.c.l.b16 %v3033
      %v3042 = vunpack.c.l.b16 %v3034
      %v3043 = vunpack.c.l.b16 %v3035
      %v3044 = vunpack.c.l.b16 %v3036
      %v3045 = vpack.c.b16 %v3042, %v3041
      %v3046 = vpack.c.b16 %v3044, %v3043
      %v3050 = vsel %vm2167, %v2118, 0
      %v3053 = vsel %vm2167, %v2119, 0
      %v3056 = vsel %vm2167, %v2120, 0
      %v3059 = vsel %vm2167, %v2121, 0
      %3061 = vmatprep.subr.bf16.mxu0 0
      %3062 = vmatpush1.bf16.msra.mxu0 0
      %3063 = vmatprep.subr.bf16.mxu0 0
      %3064 = vmatpush1.bf16.msra.mxu0 0
      %3065 = vmatprep.subr.bf16.mxu0 0
      %3066 = vmatpush1.bf16.msra.mxu0 0
      %3067 = vmatprep.subr.bf16.mxu0 0
      %3068 = vmatpush1.bf16.msra.mxu0 0
      %3069 = vmatprep.subr.bf16.mxu0 0
      %3070 = vmatpush1.bf16.msra.mxu0 0
      %3071 = vmatprep.subr.bf16.mxu0 0
      %3072 = vmatpush1.bf16.msra.mxu0 0
      %3073 = vmatprep.subr.bf16.mxu0 0
      %3074 = vmatpush1.bf16.msra.mxu0 %v3046
      %3075 = vmatprep.subr.bf16.mxu0 0
      %3076 = vmatpush1.bf16.msra.mxu0 %v3045
      %3077 = vmatprep.subr.bf16.mxu0 0
      %3078 = vmatpush2.bf16.msra.mxu0 0
      %3079 = vmatprep.subr.bf16.mxu0 0
      %3080 = vmatpush2.bf16.msra.mxu0 0
      %3081 = vmatprep.subr.bf16.mxu0 0
      %3082 = vmatpush2.bf16.msra.mxu0 0
      %3083 = vmatprep.subr.bf16.mxu0 0
      %3084 = vmatpush2.bf16.msra.mxu0 0
      %3085 = vmatprep.subr.bf16.mxu0 0
      %3086 = vmatpush2.bf16.msra.mxu0 0
      %3087 = vmatprep.subr.bf16.mxu0 0
      %3088 = vmatpush2.bf16.msra.mxu0 0
      %3089 = vmatprep.subr.bf16.mxu0 0
      %3090 = vmatpush2.bf16.msra.mxu0 0
      %3091 = vmatprep.subr.bf16.mxu0 0
      %3092 = vmatpush2.bf16.msra.mxu0 0
      %3093 = vmatprep.mubr.bf16.mxu0 0
      %3094 = vmatmul.mubr.bf16.gmra.mxu0 %v3050
      %v3095 = vpop.f32.mrf.mxu0
      %v3096 = vadd.f32 0.0, %v3095
      %v3097 = vpop.f32.mrf.mxu0
      %v3098 = vpop.f32.mrf.mxu0
      %v3099 = vadd.f32 0.0, %v3098
      %v3100 = vpop.f32.mrf.mxu0
      %3101 = vmatprep.mubr.bf16.mxu0 0
      %3102 = vmatmul.mubr.bf16.gmra.mxu0 %v3053
      %v3103 = vpop.f32.mrf.mxu0
      %v3104 = vadd.f32 0.0, %v3103
      %v3105 = vpop.f32.mrf.mxu0
      %v3106 = vpop.f32.mrf.mxu0
      %v3107 = vadd.f32 0.0, %v3106
      %v3108 = vpop.f32.mrf.mxu0
      %3109 = vmatprep.mubr.bf16.mxu0 0
      %3110 = vmatmul.mubr.bf16.gmra.mxu0 %v3056
      %v3111 = vpop.f32.mrf.mxu0
      %v3112 = vadd.f32 0.0, %v3111
      %v3113 = vpop.f32.mrf.mxu0
      %v3114 = vpop.f32.mrf.mxu0
      %v3115 = vadd.f32 0.0, %v3114
      %v3116 = vpop.f32.mrf.mxu0
      %3117 = vmatprep.mubr.bf16.mxu0 0
      %3118 = vmatmul.mubr.bf16.gmra.mxu0 %v3059
      %v3119 = vpop.f32.mrf.mxu0
      %v3120 = vadd.f32 0.0, %v3119
      %v3121 = vpop.f32.mrf.mxu0
      %v3122 = vpop.f32.mrf.mxu0
      %v3123 = vpop.f32.mrf.mxu0
      %3124 = vdwg.mxu0
      %v3125 = vadd.f32 %v3025, %v3096
      %v3126 = vadd.f32 %v3026, %v3099
      %v3127 = vadd.f32 %v3027, %v3104
      %v3128 = vadd.f32 %v3028, %v3107
      %v3129 = vadd.f32 %v3029, %v3112
      %v3130 = vadd.f32 %v3030, %v3115
      %v3131 = vadd.f32 %v3031, %v3120
      %s3132 = scalar_lea.vmem %s3, 160
      %v3133 = vld [vmem:[%s3132] sm:$0xf]
      %v3134 = vld [vmem:[%s3132 + $0x4] sm:$0xf]
      %v3135 = vld [vmem:[%s3132 + $0x8] sm:$0xf]
      %v3136 = vld [vmem:[%s3132 + $0xc] sm:$0xf]
      %v3141 = vunpack.c.l.b16 %v3133
      %v3142 = vunpack.c.l.b16 %v3134
      %v3143 = vunpack.c.l.b16 %v3135
      %v3144 = vunpack.c.l.b16 %v3136
      %v3145 = vpack.c.b16 %v3142, %v3141
      %v3146 = vpack.c.b16 %v3144, %v3143
      %v3150 = vsel %vm2167, %v2122, 0
      %v3153 = vsel %vm2167, %v2123, 0
      %v3156 = vsel %vm2167, %v2124, 0
      %v3159 = vsel %vm2167, %v2125, 0
      %3161 = vmatprep.subr.bf16.mxu0 0
      %3162 = vmatpush1.bf16.msra.mxu0 0
      %3163 = vmatprep.subr.bf16.mxu0 0
      %3164 = vmatpush1.bf16.msra.mxu0 0
      %3165 = vmatprep.subr.bf16.mxu0 0
      %3166 = vmatpush1.bf16.msra.mxu0 0
      %3167 = vmatprep.subr.bf16.mxu0 0
      %3168 = vmatpush1.bf16.msra.mxu0 0
      %3169 = vmatprep.subr.bf16.mxu0 0
      %3170 = vmatpush1.bf16.msra.mxu0 0
      %3171 = vmatprep.subr.bf16.mxu0 0
      %3172 = vmatpush1.bf16.msra.mxu0 0
      %3173 = vmatprep.subr.bf16.mxu0 0
      %3174 = vmatpush1.bf16.msra.mxu0 %v3146
      %3175 = vmatprep.subr.bf16.mxu0 0
      %3176 = vmatpush1.bf16.msra.mxu0 %v3145
      %3177 = vmatprep.subr.bf16.mxu0 0
      %3178 = vmatpush2.bf16.msra.mxu0 0
      %3179 = vmatprep.subr.bf16.mxu0 0
      %3180 = vmatpush2.bf16.msra.mxu0 0
      %3181 = vmatprep.subr.bf16.mxu0 0
      %3182 = vmatpush2.bf16.msra.mxu0 0
      %3183 = vmatprep.subr.bf16.mxu0 0
      %3184 = vmatpush2.bf16.msra.mxu0 0
      %3185 = vmatprep.subr.bf16.mxu0 0
      %3186 = vmatpush2.bf16.msra.mxu0 0
      %3187 = vmatprep.subr.bf16.mxu0 0
      %3188 = vmatpush2.bf16.msra.mxu0 0
      %3189 = vmatprep.subr.bf16.mxu0 0
      %3190 = vmatpush2.bf16.msra.mxu0 0
      %3191 = vmatprep.subr.bf16.mxu0 0
      %3192 = vmatpush2.bf16.msra.mxu0 0
      %3193 = vmatprep.mubr.bf16.mxu0 0
      %3194 = vmatmul.mubr.bf16.gmra.mxu0 %v3150
      %v3195 = vpop.f32.mrf.mxu0
      %v3196 = vadd.f32 0.0, %v3195
      %v3197 = vpop.f32.mrf.mxu0
      %v3198 = vpop.f32.mrf.mxu0
      %v3199 = vadd.f32 0.0, %v3198
      %v3200 = vpop.f32.mrf.mxu0
      %3201 = vmatprep.mubr.bf16.mxu0 0
      %3202 = vmatmul.mubr.bf16.gmra.mxu0 %v3153
      %v3203 = vpop.f32.mrf.mxu0
      %v3204 = vadd.f32 0.0, %v3203
      %v3205 = vpop.f32.mrf.mxu0
      %v3206 = vpop.f32.mrf.mxu0
      %v3207 = vadd.f32 0.0, %v3206
      %v3208 = vpop.f32.mrf.mxu0
      %3209 = vmatprep.mubr.bf16.mxu0 0
      %3210 = vmatmul.mubr.bf16.gmra.mxu0 %v3156
      %v3211 = vpop.f32.mrf.mxu0
      %v3212 = vadd.f32 0.0, %v3211
      %v3213 = vpop.f32.mrf.mxu0
      %v3214 = vpop.f32.mrf.mxu0
      %v3215 = vadd.f32 0.0, %v3214
      %v3216 = vpop.f32.mrf.mxu0
      %3217 = vmatprep.mubr.bf16.mxu0 0
      %3218 = vmatmul.mubr.bf16.gmra.mxu0 %v3159
      %v3219 = vpop.f32.mrf.mxu0
      %v3220 = vadd.f32 0.0, %v3219
      %v3221 = vpop.f32.mrf.mxu0
      %v3222 = vpop.f32.mrf.mxu0
      %v3223 = vpop.f32.mrf.mxu0
      %3224 = vdwg.mxu0
      %v3225 = vadd.f32 %v3125, %v3196
      %v3226 = vadd.f32 %v3126, %v3199
      %v3227 = vadd.f32 %v3127, %v3204
      %v3228 = vadd.f32 %v3128, %v3207
      %v3229 = vadd.f32 %v3129, %v3212
      %v3230 = vadd.f32 %v3130, %v3215
      %v3231 = vadd.f32 %v3131, %v3220
      %s3232 = scalar_lea.vmem %s3, 176
      %v3233 = vld [vmem:[%s3232] sm:$0xf]
      %v3234 = vld [vmem:[%s3232 + $0x4] sm:$0xf]
      %v3235 = vld [vmem:[%s3232 + $0x8] sm:$0xf]
      %v3236 = vld [vmem:[%s3232 + $0xc] sm:$0xf]
      %v3241 = vunpack.c.l.b16 %v3233
      %v3242 = vunpack.c.l.b16 %v3234
      %v3243 = vunpack.c.l.b16 %v3235
      %v3244 = vunpack.c.l.b16 %v3236
      %v3245 = vpack.c.b16 %v3242, %v3241
      %v3246 = vpack.c.b16 %v3244, %v3243
      %v3250 = vsel %vm2167, %v2126, 0
      %v3253 = vsel %vm2167, %v2127, 0
      %v3256 = vsel %vm2167, %v2128, 0
      %v3259 = vsel %vm2167, %v2129, 0
      %3261 = vmatprep.subr.bf16.mxu0 0
      %3262 = vmatpush1.bf16.msra.mxu0 0
      %3263 = vmatprep.subr.bf16.mxu0 0
      %3264 = vmatpush1.bf16.msra.mxu0 0
      %3265 = vmatprep.subr.bf16.mxu0 0
      %3266 = vmatpush1.bf16.msra.mxu0 0
      %3267 = vmatprep.subr.bf16.mxu0 0
      %3268 = vmatpush1.bf16.msra.mxu0 0
      %3269 = vmatprep.subr.bf16.mxu0 0
      %3270 = vmatpush1.bf16.msra.mxu0 0
      %3271 = vmatprep.subr.bf16.mxu0 0
      %3272 = vmatpush1.bf16.msra.mxu0 0
      %3273 = vmatprep.subr.bf16.mxu0 0
      %3274 = vmatpush1.bf16.msra.mxu0 %v3246
      %3275 = vmatprep.subr.bf16.mxu0 0
      %3276 = vmatpush1.bf16.msra.mxu0 %v3245
      %3277 = vmatprep.subr.bf16.mxu0 0
      %3278 = vmatpush2.bf16.msra.mxu0 0
      %3279 = vmatprep.subr.bf16.mxu0 0
      %3280 = vmatpush2.bf16.msra.mxu0 0
      %3281 = vmatprep.subr.bf16.mxu0 0
      %3282 = vmatpush2.bf16.msra.mxu0 0
      %3283 = vmatprep.subr.bf16.mxu0 0
      %3284 = vmatpush2.bf16.msra.mxu0 0
      %3285 = vmatprep.subr.bf16.mxu0 0
      %3286 = vmatpush2.bf16.msra.mxu0 0
      %3287 = vmatprep.subr.bf16.mxu0 0
      %3288 = vmatpush2.bf16.msra.mxu0 0
      %3289 = vmatprep.subr.bf16.mxu0 0
      %3290 = vmatpush2.bf16.msra.mxu0 0
      %3291 = vmatprep.subr.bf16.mxu0 0
      %3292 = vmatpush2.bf16.msra.mxu0 0
      %3293 = vmatprep.mubr.bf16.mxu0 0
      %3294 = vmatmul.mubr.bf16.gmra.mxu0 %v3250
      %v3295 = vpop.f32.mrf.mxu0
      %v3296 = vadd.f32 0.0, %v3295
      %v3297 = vpop.f32.mrf.mxu0
      %v3298 = vpop.f32.mrf.mxu0
      %v3299 = vadd.f32 0.0, %v3298
      %v3300 = vpop.f32.mrf.mxu0
      %3301 = vmatprep.mubr.bf16.mxu0 0
      %3302 = vmatmul.mubr.bf16.gmra.mxu0 %v3253
      %v3303 = vpop.f32.mrf.mxu0
      %v3304 = vadd.f32 0.0, %v3303
      %v3305 = vpop.f32.mrf.mxu0
      %v3306 = vpop.f32.mrf.mxu0
      %v3307 = vadd.f32 0.0, %v3306
      %v3308 = vpop.f32.mrf.mxu0
      %3309 = vmatprep.mubr.bf16.mxu0 0
      %3310 = vmatmul.mubr.bf16.gmra.mxu0 %v3256
      %v3311 = vpop.f32.mrf.mxu0
      %v3312 = vadd.f32 0.0, %v3311
      %v3313 = vpop.f32.mrf.mxu0
      %v3314 = vpop.f32.mrf.mxu0
      %v3315 = vadd.f32 0.0, %v3314
      %v3316 = vpop.f32.mrf.mxu0
      %3317 = vmatprep.mubr.bf16.mxu0 0
      %3318 = vmatmul.mubr.bf16.gmra.mxu0 %v3259
      %v3319 = vpop.f32.mrf.mxu0
      %v3320 = vadd.f32 0.0, %v3319
      %v3321 = vpop.f32.mrf.mxu0
      %v3322 = vpop.f32.mrf.mxu0
      %v3323 = vpop.f32.mrf.mxu0
      %3324 = vdwg.mxu0
      %v3325 = vadd.f32 %v3225, %v3296
      %v3326 = vadd.f32 %v3226, %v3299
      %v3327 = vadd.f32 %v3227, %v3304
      %v3328 = vadd.f32 %v3228, %v3307
      %v3329 = vadd.f32 %v3229, %v3312
      %v3330 = vadd.f32 %v3230, %v3315
      %v3331 = vadd.f32 %v3231, %v3320
      %s3332 = scalar_lea.vmem %s3, 192
      %v3333 = vld [vmem:[%s3332] sm:$0xf]
      %v3334 = vld [vmem:[%s3332 + $0x4] sm:$0xf]
      %v3335 = vld [vmem:[%s3332 + $0x8] sm:$0xf]
      %v3336 = vld [vmem:[%s3332 + $0xc] sm:$0xf]
      %v3341 = vunpack.c.l.b16 %v3333
      %v3342 = vunpack.c.l.b16 %v3334
      %v3343 = vunpack.c.l.b16 %v3335
      %v3344 = vunpack.c.l.b16 %v3336
      %v3345 = vpack.c.b16 %v3342, %v3341
      %v3346 = vpack.c.b16 %v3344, %v3343
      %v3350 = vsel %vm2167, %v2130, 0
      %v3353 = vsel %vm2167, %v2131, 0
      %v3356 = vsel %vm2167, %v2132, 0
      %v3359 = vsel %vm2167, %v2133, 0
      %3361 = vmatprep.subr.bf16.mxu0 0
      %3362 = vmatpush1.bf16.msra.mxu0 0
      %3363 = vmatprep.subr.bf16.mxu0 0
      %3364 = vmatpush1.bf16.msra.mxu0 0
      %3365 = vmatprep.subr.bf16.mxu0 0
      %3366 = vmatpush1.bf16.msra.mxu0 0
      %3367 = vmatprep.subr.bf16.mxu0 0
      %3368 = vmatpush1.bf16.msra.mxu0 0
      %3369 = vmatprep.subr.bf16.mxu0 0
      %3370 = vmatpush1.bf16.msra.mxu0 0
      %3371 = vmatprep.subr.bf16.mxu0 0
      %3372 = vmatpush1.bf16.msra.mxu0 0
      %3373 = vmatprep.subr.bf16.mxu0 0
      %3374 = vmatpush1.bf16.msra.mxu0 %v3346
      %3375 = vmatprep.subr.bf16.mxu0 0
      %3376 = vmatpush1.bf16.msra.mxu0 %v3345
      %3377 = vmatprep.subr.bf16.mxu0 0
      %3378 = vmatpush2.bf16.msra.mxu0 0
      %3379 = vmatprep.subr.bf16.mxu0 0
      %3380 = vmatpush2.bf16.msra.mxu0 0
      %3381 = vmatprep.subr.bf16.mxu0 0
      %3382 = vmatpush2.bf16.msra.mxu0 0
      %3383 = vmatprep.subr.bf16.mxu0 0
      %3384 = vmatpush2.bf16.msra.mxu0 0
      %3385 = vmatprep.subr.bf16.mxu0 0
      %3386 = vmatpush2.bf16.msra.mxu0 0
      %3387 = vmatprep.subr.bf16.mxu0 0
      %3388 = vmatpush2.bf16.msra.mxu0 0
      %3389 = vmatprep.subr.bf16.mxu0 0
      %3390 = vmatpush2.bf16.msra.mxu0 0
      %3391 = vmatprep.subr.bf16.mxu0 0
      %3392 = vmatpush2.bf16.msra.mxu0 0
      %3393 = vmatprep.mubr.bf16.mxu0 0
      %3394 = vmatmul.mubr.bf16.gmra.mxu0 %v3350
      %v3395 = vpop.f32.mrf.mxu0
      %v3396 = vadd.f32 0.0, %v3395
      %v3397 = vpop.f32.mrf.mxu0
      %v3398 = vpop.f32.mrf.mxu0
      %v3399 = vadd.f32 0.0, %v3398
      %v3400 = vpop.f32.mrf.mxu0
      %3401 = vmatprep.mubr.bf16.mxu0 0
      %3402 = vmatmul.mubr.bf16.gmra.mxu0 %v3353
      %v3403 = vpop.f32.mrf.mxu0
      %v3404 = vadd.f32 0.0, %v3403
      %v3405 = vpop.f32.mrf.mxu0
      %v3406 = vpop.f32.mrf.mxu0
      %v3407 = vadd.f32 0.0, %v3406
      %v3408 = vpop.f32.mrf.mxu0
      %3409 = vmatprep.mubr.bf16.mxu0 0
      %3410 = vmatmul.mubr.bf16.gmra.mxu0 %v3356
      %v3411 = vpop.f32.mrf.mxu0
      %v3412 = vadd.f32 0.0, %v3411
      %v3413 = vpop.f32.mrf.mxu0
      %v3414 = vpop.f32.mrf.mxu0
      %v3415 = vadd.f32 0.0, %v3414
      %v3416 = vpop.f32.mrf.mxu0
      %3417 = vmatprep.mubr.bf16.mxu0 0
      %3418 = vmatmul.mubr.bf16.gmra.mxu0 %v3359
      %v3419 = vpop.f32.mrf.mxu0
      %v3420 = vadd.f32 0.0, %v3419
      %v3421 = vpop.f32.mrf.mxu0
      %v3422 = vpop.f32.mrf.mxu0
      %v3423 = vpop.f32.mrf.mxu0
      %3424 = vdwg.mxu0
      %v3425 = vadd.f32 %v3325, %v3396
      %v3426 = vadd.f32 %v3326, %v3399
      %v3427 = vadd.f32 %v3327, %v3404
      %v3428 = vadd.f32 %v3328, %v3407
      %v3429 = vadd.f32 %v3329, %v3412
      %v3430 = vadd.f32 %v3330, %v3415
      %v3431 = vadd.f32 %v3331, %v3420
      %s3432 = scalar_lea.vmem %s3, 208
      %v3433 = vld [vmem:[%s3432] sm:$0xf]
      %v3434 = vld [vmem:[%s3432 + $0x4] sm:$0xf]
      %v3435 = vld [vmem:[%s3432 + $0x8] sm:$0xf]
      %v3436 = vld [vmem:[%s3432 + $0xc] sm:$0xf]
      %v3441 = vunpack.c.l.b16 %v3433
      %v3442 = vunpack.c.l.b16 %v3434
      %v3443 = vunpack.c.l.b16 %v3435
      %v3444 = vunpack.c.l.b16 %v3436
      %v3445 = vpack.c.b16 %v3442, %v3441
      %v3446 = vpack.c.b16 %v3444, %v3443
      %v3450 = vsel %vm2167, %v2134, 0
      %v3453 = vsel %vm2167, %v2135, 0
      %v3456 = vsel %vm2167, %v2136, 0
      %v3459 = vsel %vm2167, %v2137, 0
      %3461 = vmatprep.subr.bf16.mxu0 0
      %3462 = vmatpush1.bf16.msra.mxu0 0
      %3463 = vmatprep.subr.bf16.mxu0 0
      %3464 = vmatpush1.bf16.msra.mxu0 0
      %3465 = vmatprep.subr.bf16.mxu0 0
      %3466 = vmatpush1.bf16.msra.mxu0 0
      %3467 = vmatprep.subr.bf16.mxu0 0
      %3468 = vmatpush1.bf16.msra.mxu0 0
      %3469 = vmatprep.subr.bf16.mxu0 0
      %3470 = vmatpush1.bf16.msra.mxu0 0
      %3471 = vmatprep.subr.bf16.mxu0 0
      %3472 = vmatpush1.bf16.msra.mxu0 0
      %3473 = vmatprep.subr.bf16.mxu0 0
      %3474 = vmatpush1.bf16.msra.mxu0 %v3446
      %3475 = vmatprep.subr.bf16.mxu0 0
      %3476 = vmatpush1.bf16.msra.mxu0 %v3445
      %3477 = vmatprep.subr.bf16.mxu0 0
      %3478 = vmatpush2.bf16.msra.mxu0 0
      %3479 = vmatprep.subr.bf16.mxu0 0
      %3480 = vmatpush2.bf16.msra.mxu0 0
      %3481 = vmatprep.subr.bf16.mxu0 0
      %3482 = vmatpush2.bf16.msra.mxu0 0
      %3483 = vmatprep.subr.bf16.mxu0 0
      %3484 = vmatpush2.bf16.msra.mxu0 0
      %3485 = vmatprep.subr.bf16.mxu0 0
      %3486 = vmatpush2.bf16.msra.mxu0 0
      %3487 = vmatprep.subr.bf16.mxu0 0
      %3488 = vmatpush2.bf16.msra.mxu0 0
      %3489 = vmatprep.subr.bf16.mxu0 0
      %3490 = vmatpush2.bf16.msra.mxu0 0
      %3491 = vmatprep.subr.bf16.mxu0 0
      %3492 = vmatpush2.bf16.msra.mxu0 0
      %3493 = vmatprep.mubr.bf16.mxu0 0
      %3494 = vmatmul.mubr.bf16.gmra.mxu0 %v3450
      %v3495 = vpop.f32.mrf.mxu0
      %v3496 = vadd.f32 0.0, %v3495
      %v3497 = vpop.f32.mrf.mxu0
      %v3498 = vpop.f32.mrf.mxu0
      %v3499 = vadd.f32 0.0, %v3498
      %v3500 = vpop.f32.mrf.mxu0
      %3501 = vmatprep.mubr.bf16.mxu0 0
      %3502 = vmatmul.mubr.bf16.gmra.mxu0 %v3453
      %v3503 = vpop.f32.mrf.mxu0
      %v3504 = vadd.f32 0.0, %v3503
      %v3505 = vpop.f32.mrf.mxu0
      %v3506 = vpop.f32.mrf.mxu0
      %v3507 = vadd.f32 0.0, %v3506
      %v3508 = vpop.f32.mrf.mxu0
      %3509 = vmatprep.mubr.bf16.mxu0 0
      %3510 = vmatmul.mubr.bf16.gmra.mxu0 %v3456
      %v3511 = vpop.f32.mrf.mxu0
      %v3512 = vadd.f32 0.0, %v3511
      %v3513 = vpop.f32.mrf.mxu0
      %v3514 = vpop.f32.mrf.mxu0
      %v3515 = vadd.f32 0.0, %v3514
      %v3516 = vpop.f32.mrf.mxu0
      %3517 = vmatprep.mubr.bf16.mxu0 0
      %3518 = vmatmul.mubr.bf16.gmra.mxu0 %v3459
      %v3519 = vpop.f32.mrf.mxu0
      %v3520 = vadd.f32 0.0, %v3519
      %v3521 = vpop.f32.mrf.mxu0
      %v3522 = vpop.f32.mrf.mxu0
      %v3523 = vpop.f32.mrf.mxu0
      %3524 = vdwg.mxu0
      %v3525 = vadd.f32 %v3425, %v3496
      %v3526 = vadd.f32 %v3426, %v3499
      %v3527 = vadd.f32 %v3427, %v3504
      %v3528 = vadd.f32 %v3428, %v3507
      %v3529 = vadd.f32 %v3429, %v3512
      %v3530 = vadd.f32 %v3430, %v3515
      %v3531 = vadd.f32 %v3431, %v3520
      %s3532 = scalar_lea.vmem %s3, 224
      %v3533 = vld [vmem:[%s3532] sm:$0xf]
      %v3534 = vld [vmem:[%s3532 + $0x4] sm:$0xf]
      %v3535 = vld [vmem:[%s3532 + $0x8] sm:$0xf]
      %v3536 = vld [vmem:[%s3532 + $0xc] sm:$0xf]
      %v3541 = vunpack.c.l.b16 %v3533
      %v3542 = vunpack.c.l.b16 %v3534
      %v3543 = vunpack.c.l.b16 %v3535
      %v3544 = vunpack.c.l.b16 %v3536
      %v3545 = vpack.c.b16 %v3542, %v3541
      %v3546 = vpack.c.b16 %v3544, %v3543
      %v3550 = vsel %vm2167, %v2138, 0
      %v3553 = vsel %vm2167, %v2139, 0
      %v3556 = vsel %vm2167, %v2140, 0
      %v3559 = vsel %vm2167, %v2141, 0
      %3561 = vmatprep.subr.bf16.mxu0 0
      %3562 = vmatpush1.bf16.msra.mxu0 0
      %3563 = vmatprep.subr.bf16.mxu0 0
      %3564 = vmatpush1.bf16.msra.mxu0 0
      %3565 = vmatprep.subr.bf16.mxu0 0
      %3566 = vmatpush1.bf16.msra.mxu0 0
      %3567 = vmatprep.subr.bf16.mxu0 0
      %3568 = vmatpush1.bf16.msra.mxu0 0
      %3569 = vmatprep.subr.bf16.mxu0 0
      %3570 = vmatpush1.bf16.msra.mxu0 0
      %3571 = vmatprep.subr.bf16.mxu0 0
      %3572 = vmatpush1.bf16.msra.mxu0 0
      %3573 = vmatprep.subr.bf16.mxu0 0
      %3574 = vmatpush1.bf16.msra.mxu0 %v3546
      %3575 = vmatprep.subr.bf16.mxu0 0
      %3576 = vmatpush1.bf16.msra.mxu0 %v3545
      %3577 = vmatprep.subr.bf16.mxu0 0
      %3578 = vmatpush2.bf16.msra.mxu0 0
      %3579 = vmatprep.subr.bf16.mxu0 0
      %3580 = vmatpush2.bf16.msra.mxu0 0
      %3581 = vmatprep.subr.bf16.mxu0 0
      %3582 = vmatpush2.bf16.msra.mxu0 0
      %3583 = vmatprep.subr.bf16.mxu0 0
      %3584 = vmatpush2.bf16.msra.mxu0 0
      %3585 = vmatprep.subr.bf16.mxu0 0
      %3586 = vmatpush2.bf16.msra.mxu0 0
      %3587 = vmatprep.subr.bf16.mxu0 0
      %3588 = vmatpush2.bf16.msra.mxu0 0
      %3589 = vmatprep.subr.bf16.mxu0 0
      %3590 = vmatpush2.bf16.msra.mxu0 0
      %3591 = vmatprep.subr.bf16.mxu0 0
      %3592 = vmatpush2.bf16.msra.mxu0 0
      %3593 = vmatprep.mubr.bf16.mxu0 0
      %3594 = vmatmul.mubr.bf16.gmra.mxu0 %v3550
      %v3595 = vpop.f32.mrf.mxu0
      %v3596 = vadd.f32 0.0, %v3595
      %v3597 = vpop.f32.mrf.mxu0
      %v3598 = vpop.f32.mrf.mxu0
      %v3599 = vadd.f32 0.0, %v3598
      %v3600 = vpop.f32.mrf.mxu0
      %3601 = vmatprep.mubr.bf16.mxu0 0
      %3602 = vmatmul.mubr.bf16.gmra.mxu0 %v3553
      %v3603 = vpop.f32.mrf.mxu0
      %v3604 = vadd.f32 0.0, %v3603
      %v3605 = vpop.f32.mrf.mxu0
      %v3606 = vpop.f32.mrf.mxu0
      %v3607 = vadd.f32 0.0, %v3606
      %v3608 = vpop.f32.mrf.mxu0
      %3609 = vmatprep.mubr.bf16.mxu0 0
      %3610 = vmatmul.mubr.bf16.gmra.mxu0 %v3556
      %v3611 = vpop.f32.mrf.mxu0
      %v3612 = vadd.f32 0.0, %v3611
      %v3613 = vpop.f32.mrf.mxu0
      %v3614 = vpop.f32.mrf.mxu0
      %v3615 = vadd.f32 0.0, %v3614
      %v3616 = vpop.f32.mrf.mxu0
      %3617 = vmatprep.mubr.bf16.mxu0 0
      %3618 = vmatmul.mubr.bf16.gmra.mxu0 %v3559
      %v3619 = vpop.f32.mrf.mxu0
      %v3620 = vadd.f32 0.0, %v3619
      %v3621 = vpop.f32.mrf.mxu0
      %v3622 = vpop.f32.mrf.mxu0
      %v3623 = vpop.f32.mrf.mxu0
      %3624 = vdwg.mxu0
      %v3625 = vadd.f32 %v3525, %v3596
      %v3626 = vadd.f32 %v3526, %v3599
      %v3627 = vadd.f32 %v3527, %v3604
      %v3628 = vadd.f32 %v3528, %v3607
      %v3629 = vadd.f32 %v3529, %v3612
      %v3630 = vadd.f32 %v3530, %v3615
      %v3631 = vadd.f32 %v3531, %v3620
      %s3632 = scalar_lea.vmem %s3, 240
      %v3633 = vld [vmem:[%s3632] sm:$0xf]
      %v3634 = vld [vmem:[%s3632 + $0x4] sm:$0xf]
      %v3635 = vld [vmem:[%s3632 + $0x8] sm:$0xf]
      %v3636 = vld [vmem:[%s3632 + $0xc] sm:$0xf]
      %v3641 = vunpack.c.l.b16 %v3633
      %v3642 = vunpack.c.l.b16 %v3634
      %v3643 = vunpack.c.l.b16 %v3635
      %v3644 = vunpack.c.l.b16 %v3636
      %v3645 = vpack.c.b16 %v3642, %v3641
      %v3646 = vpack.c.b16 %v3644, %v3643
      %v3650 = vsel %vm2167, %v2142, 0
      %v3653 = vsel %vm2167, %v2143, 0
      %v3656 = vsel %vm2167, %v2144, 0
      %v3659 = vsel %vm2167, %v2145, 0
      %3661 = vmatprep.subr.bf16.mxu0 0
      %3662 = vmatpush1.bf16.msra.mxu0 0
      %3663 = vmatprep.subr.bf16.mxu0 0
      %3664 = vmatpush1.bf16.msra.mxu0 0
      %3665 = vmatprep.subr.bf16.mxu0 0
      %3666 = vmatpush1.bf16.msra.mxu0 0
      %3667 = vmatprep.subr.bf16.mxu0 0
      %3668 = vmatpush1.bf16.msra.mxu0 0
      %3669 = vmatprep.subr.bf16.mxu0 0
      %3670 = vmatpush1.bf16.msra.mxu0 0
      %3671 = vmatprep.subr.bf16.mxu0 0
      %3672 = vmatpush1.bf16.msra.mxu0 0
      %3673 = vmatprep.subr.bf16.mxu0 0
      %3674 = vmatpush1.bf16.msra.mxu0 %v3646
      %3675 = vmatprep.subr.bf16.mxu0 0
      %3676 = vmatpush1.bf16.msra.mxu0 %v3645
      %3677 = vmatprep.subr.bf16.mxu0 0
      %3678 = vmatpush2.bf16.msra.mxu0 0
      %3679 = vmatprep.subr.bf16.mxu0 0
      %3680 = vmatpush2.bf16.msra.mxu0 0
      %3681 = vmatprep.subr.bf16.mxu0 0
      %3682 = vmatpush2.bf16.msra.mxu0 0
      %3683 = vmatprep.subr.bf16.mxu0 0
      %3684 = vmatpush2.bf16.msra.mxu0 0
      %3685 = vmatprep.subr.bf16.mxu0 0
      %3686 = vmatpush2.bf16.msra.mxu0 0
      %3687 = vmatprep.subr.bf16.mxu0 0
      %3688 = vmatpush2.bf16.msra.mxu0 0
      %3689 = vmatprep.subr.bf16.mxu0 0
      %3690 = vmatpush2.bf16.msra.mxu0 0
      %3691 = vmatprep.subr.bf16.mxu0 0
      %3692 = vmatpush2.bf16.msra.mxu0 0
      %3693 = vmatprep.mubr.bf16.mxu0 0
      %3694 = vmatmul.mubr.bf16.gmra.mxu0 %v3650
      %v3695 = vpop.f32.mrf.mxu0
      %v3696 = vadd.f32 0.0, %v3695
      %v3697 = vpop.f32.mrf.mxu0
      %v3698 = vpop.f32.mrf.mxu0
      %v3699 = vadd.f32 0.0, %v3698
      %v3700 = vpop.f32.mrf.mxu0
      %3701 = vmatprep.mubr.bf16.mxu0 0
      %3702 = vmatmul.mubr.bf16.gmra.mxu0 %v3653
      %v3703 = vpop.f32.mrf.mxu0
      %v3704 = vadd.f32 0.0, %v3703
      %v3705 = vpop.f32.mrf.mxu0
      %v3706 = vpop.f32.mrf.mxu0
      %v3707 = vadd.f32 0.0, %v3706
      %v3708 = vpop.f32.mrf.mxu0
      %3709 = vmatprep.mubr.bf16.mxu0 0
      %3710 = vmatmul.mubr.bf16.gmra.mxu0 %v3656
      %v3711 = vpop.f32.mrf.mxu0
      %v3712 = vadd.f32 0.0, %v3711
      %v3713 = vpop.f32.mrf.mxu0
      %v3714 = vpop.f32.mrf.mxu0
      %v3715 = vadd.f32 0.0, %v3714
      %v3716 = vpop.f32.mrf.mxu0
      %3717 = vmatprep.mubr.bf16.mxu0 0
      %3718 = vmatmul.mubr.bf16.gmra.mxu0 %v3659
      %v3719 = vpop.f32.mrf.mxu0
      %v3720 = vadd.f32 0.0, %v3719
      %v3721 = vpop.f32.mrf.mxu0
      %v3722 = vpop.f32.mrf.mxu0
      %v3723 = vpop.f32.mrf.mxu0
      %3724 = vdwg.mxu0
      %v3725 = vadd.f32 %v3625, %v3696
      %v3726 = vadd.f32 %v3626, %v3699
      %v3727 = vadd.f32 %v3627, %v3704
      %v3728 = vadd.f32 %v3628, %v3707
      %v3729 = vadd.f32 %v3629, %v3712
      %v3730 = vadd.f32 %v3630, %v3715
      %v3731 = vadd.f32 %v3631, %v3720
      %vm3732 = vcmask 523264
      %v3733 = vsel %vm3732, %v3725, 0.0
      %v3734 = vsel %vm3732, %v3726, 0.0
      %v3735 = vadd.f32 %v3733, %v3734
      %v3736 = vsel %vm3732, %v3727, 0.0
      %v3737 = vadd.f32 %v3735, %v3736
      %v3738 = vsel %vm3732, %v3728, 0.0
      %v3739 = vadd.f32 %v3737, %v3738
      %v3740 = vsel %vm3732, %v3729, 0.0
      %v3741 = vadd.f32 %v3739, %v3740
      %v3742 = vsel %vm3732, %v3730, 0.0
      %v3743 = vadd.f32 %v3741, %v3742
      %vm3744 = vcmask 516096
      %v3745 = vsel %vm3744, %v3731, 0.0
      %v3746 = vadd.f32 %v3743, %v3745
      %v3747 = vrot.slane %v3746, 4
      %v3748 = vadd.f32 %v3746, %v3747
      %v3749 = vrot.slane %v3748, 2
      %v3750 = vadd.f32 %v3748, %v3749
      %v3751 = vrot.slane %v3750, 1
      %v3752 = vadd.f32 %v3750, %v3751
      %v3753 = vrcp.pop 49.0
      %v3754 = vmul.f32 %v3752, %v3753
      %v3755 = vsub.f32 %v3725, %v3754
      %v3756 = vsub.f32 %v3726, %v3754
      %v3757 = vsub.f32 %v3727, %v3754
      %v3758 = vsub.f32 %v3728, %v3754
      %v3759 = vsub.f32 %v3729, %v3754
      %v3760 = vsub.f32 %v3730, %v3754
      %v3761 = vsub.f32 %v3731, %v3754
      %v3762 = vmul.f32 %v3755, %v3755
      %v3763 = vmul.f32 %v3756, %v3756
      %v3764 = vmul.f32 %v3757, %v3757
      %v3765 = vmul.f32 %v3758, %v3758
      %v3766 = vmul.f32 %v3759, %v3759
      %v3767 = vmul.f32 %v3760, %v3760
      %v3768 = vmul.f32 %v3761, %v3761
      %v3769 = vsel %vm3732, %v3762, 0.0
      %v3770 = vsel %vm3732, %v3763, 0.0
      %v3771 = vadd.f32 %v3769, %v3770
      %v3772 = vsel %vm3732, %v3764, 0.0
      %v3773 = vadd.f32 %v3771, %v3772
      %v3774 = vsel %vm3732, %v3765, 0.0
      %v3775 = vadd.f32 %v3773, %v3774
      %v3776 = vsel %vm3732, %v3766, 0.0
      %v3777 = vadd.f32 %v3775, %v3776
      %v3778 = vsel %vm3732, %v3767, 0.0
      %v3779 = vadd.f32 %v3777, %v3778
      %v3780 = vsel %vm3744, %v3768, 0.0
      %v3781 = vadd.f32 %v3779, %v3780
      %v3782 = vrot.slane %v3781, 4
      %v3783 = vadd.f32 %v3781, %v3782
      %v3784 = vrot.slane %v3783, 2
      %v3785 = vadd.f32 %v3783, %v3784
      %v3786 = vrot.slane %v3785, 1
      %v3787 = vadd.f32 %v3785, %v3786
      %v3788 = vmul.f32 %v3787, %v3753
      %v3789 = vadd.f32 %v3788, 1e-05
      %v3790 = vrsqrt.pop %v3789
      %v3791 = vmul.f32 %v3755, %v3790
      %v3792 = vmul.f32 %v3756, %v3790
      %v3793 = vmul.f32 %v3757, %v3790
      %v3794 = vmul.f32 %v3758, %v3790
      %v3795 = vmul.f32 %v3759, %v3790
      %v3796 = vmul.f32 %v3760, %v3790
      %v3797 = vmul.f32 %v3761, %v3790
      %vm3798 = vcmp.ge.f32.partialorder %v3791, 0.0
      %vm3799 = vcmp.ge.f32.partialorder %v3792, 0.0
      %vm3800 = vcmp.ge.f32.partialorder %v3793, 0.0
      %vm3801 = vcmp.ge.f32.partialorder %v3794, 0.0
      %vm3802 = vcmp.ge.f32.partialorder %v3795, 0.0
      %vm3803 = vcmp.ge.f32.partialorder %v3796, 0.0
      %vm3804 = vcmp.ge.f32.partialorder %v3797, 0.0
      %v3805 = vmul.f32 %v3791, 0.2
      %v3806 = vmul.f32 %v3792, 0.2
      %v3807 = vmul.f32 %v3793, 0.2
      %v3808 = vmul.f32 %v3794, 0.2
      %v3809 = vmul.f32 %v3795, 0.2
      %v3810 = vmul.f32 %v3796, 0.2
      %v3811 = vmul.f32 %v3797, 0.2
      %v3812 = vsel %vm3798, %v3791, %v3805
      %v3813 = vsel %vm3799, %v3792, %v3806
      %v3814 = vsel %vm3800, %v3793, %v3807
      %v3815 = vsel %vm3801, %v3794, %v3808
      %v3816 = vsel %vm3802, %v3795, %v3809
      %v3817 = vsel %vm3803, %v3796, %v3810
      %v3818 = vsel %vm3804, %v3797, %v3811
      %v3819 = vpack.c.bf16 %v3813, %v3812
      %v3820 = vpack.c.bf16 %v3815, %v3814
      %v3821 = vpack.c.bf16 %v3817, %v3816
      %v3822 = vpack.c.bf16 %v3818, %v3818
      %v3823 = vld [vmem:[%s4] sm:$0xf]
      %v3824 = vld [vmem:[%s4 + $0x4] sm:$0xf]
      %v3825 = vld [vmem:[%s4 + $0x8] sm:$0xf]
      %v3826 = vld [vmem:[%s4 + $0xc] sm:$0xf]
      %v3827 = vld [vmem:[%s4 + $0x10] sm:$0xf]
      %v3828 = vld [vmem:[%s4 + $0x14] sm:$0xf]
      %v3829 = vld [vmem:[%s4 + $0x18] sm:$0xf]
      %v3830 = vld [vmem:[%s4 + $0x1c] sm:$0xf]
      %v3831 = vld [vmem:[%s4 + $0x20] sm:$0xf]
      %v3832 = vld [vmem:[%s4 + $0x24] sm:$0xf]
      %v3833 = vld [vmem:[%s4 + $0x28] sm:$0xf]
      %v3834 = vld [vmem:[%s4 + $0x2c] sm:$0xf]
      %v3835 = vld [vmem:[%s4 + $0x30] sm:$0xf]
      %v3836 = vld [vmem:[%s4 + $0x34] sm:$0xf]
      %v3837 = vld [vmem:[%s4 + $0x38] sm:$0xf]
      %v3838 = vld [vmem:[%s4 + $0x3c] sm:$0xf]
      %v3839 = vld [vmem:[%s4 + $0x40] sm:$0xf]
      %v3840 = vld [vmem:[%s4 + $0x44] sm:$0xf]
      %v3859 = vunpack.c.l.b16 %v3823
      %v3860 = vunpack.c.l.b16 %v3824
      %v3861 = vunpack.c.l.b16 %v3825
      %v3862 = vunpack.c.l.b16 %v3826
      %v3863 = vunpack.c.l.b16 %v3827
      %v3864 = vunpack.c.l.b16 %v3828
      %v3865 = vunpack.c.l.b16 %v3829
      %v3866 = vunpack.c.l.b16 %v3830
      %v3867 = vunpack.c.l.b16 %v3831
      %v3868 = vunpack.c.l.b16 %v3832
      %v3869 = vunpack.c.l.b16 %v3833
      %v3870 = vunpack.c.l.b16 %v3834
      %v3871 = vunpack.c.l.b16 %v3835
      %v3872 = vunpack.c.l.b16 %v3836
      %v3873 = vunpack.c.l.b16 %v3837
      %v3874 = vunpack.c.l.b16 %v3838
      %v3875 = vunpack.c.l.b16 %v3839
      %v3876 = vunpack.c.l.b16 %v3840
      %v3877 = vpack.c.b16 %v3860, %v3859
      %v3878 = vpack.c.b16 %v3862, %v3861
      %v3879 = vpack.c.b16 %v3864, %v3863
      %v3880 = vpack.c.b16 %v3866, %v3865
      %v3881 = vpack.c.b16 %v3868, %v3867
      %v3882 = vpack.c.b16 %v3870, %v3869
      %v3883 = vpack.c.b16 %v3872, %v3871
      %v3884 = vpack.c.b16 %v3874, %v3873
      %v3885 = vpack.c.b16 %v3876, %v3875
      %vm3886 = vcmask 400384
      %v3888 = vsel %vm3886, %v3877, 0
      %v3891 = vsel %vm3886, %v3878, 0
      %v3894 = vsel %vm3886, %v3879, 0
      %v3897 = vsel %vm3886, %v3880, 0
      %v3900 = vsel %vm3886, %v3881, 0
      %v3903 = vsel %vm3886, %v3882, 0
      %v3906 = vsel %vm3886, %v3883, 0
      %v3909 = vsel %vm3886, %v3884, 0
      %v3912 = vsel %vm3886, %v3885, 0
      %vm3914 = vcmask 1040384
      %v3915 = vsel 0, 4294967295, 65535
      %v3916 = vsel %vm3914, %v3915, 0
      %v3918 = vand.u32 %v3822, %v3916
      %3920 = vmatprep.subr.bf16.mxu0 0
      %3921 = vmatpush1.bf16.msra.mxu0 0
      %3922 = vmatprep.subr.bf16.mxu0 0
      %3923 = vmatpush1.bf16.msra.mxu0 0
      %3924 = vmatprep.subr.bf16.mxu0 0
      %3925 = vmatpush1.bf16.msra.mxu0 0
      %3926 = vmatprep.subr.bf16.mxu0 0
      %3927 = vmatpush1.bf16.msra.mxu0 0
      %3928 = vmatprep.subr.bf16.mxu0 0
      %3929 = vmatpush1.bf16.msra.mxu0 %v3918
      %3930 = vmatprep.subr.bf16.mxu0 0
      %3931 = vmatpush1.bf16.msra.mxu0 %v3821
      %3932 = vmatprep.subr.bf16.mxu0 0
      %3933 = vmatpush1.bf16.msra.mxu0 %v3820
      %3934 = vmatprep.subr.bf16.mxu0 0
      %3935 = vmatpush1.bf16.msra.mxu0 %v3819
      %3936 = vmatprep.subr.bf16.mxu0 0
      %3937 = vmatpush2.bf16.msra.mxu0 0
      %3938 = vmatprep.subr.bf16.mxu0 0
      %3939 = vmatpush2.bf16.msra.mxu0 0
      %3940 = vmatprep.subr.bf16.mxu0 0
      %3941 = vmatpush2.bf16.msra.mxu0 0
      %3942 = vmatprep.subr.bf16.mxu0 0
      %3943 = vmatpush2.bf16.msra.mxu0 0
      %3944 = vmatprep.subr.bf16.mxu0 0
      %3945 = vmatpush2.bf16.msra.mxu0 0
      %3946 = vmatprep.subr.bf16.mxu0 0
      %3947 = vmatpush2.bf16.msra.mxu0 0
      %3948 = vmatprep.subr.bf16.mxu0 0
      %3949 = vmatpush2.bf16.msra.mxu0 0
      %3950 = vmatprep.subr.bf16.mxu0 0
      %3951 = vmatpush2.bf16.msra.mxu0 0
      %3952 = vmatprep.mubr.bf16.mxu0 0
      %3953 = vmatmul.mubr.bf16.gmra.mxu0 %v3888
      %v3954 = vpop.f32.mrf.mxu0
      %v3955 = vadd.f32 0.0, %v3954
      %v3956 = vpop.f32.mrf.mxu0
      %v3957 = vpop.f32.mrf.mxu0
      %v3958 = vadd.f32 0.0, %v3957
      %v3959 = vpop.f32.mrf.mxu0
      %3960 = vmatprep.mubr.bf16.mxu0 0
      %3961 = vmatmul.mubr.bf16.gmra.mxu0 %v3891
      %v3962 = vpop.f32.mrf.mxu0
      %v3963 = vadd.f32 0.0, %v3962
      %v3964 = vpop.f32.mrf.mxu0
      %v3965 = vpop.f32.mrf.mxu0
      %v3966 = vadd.f32 0.0, %v3965
      %v3967 = vpop.f32.mrf.mxu0
      %3968 = vmatprep.mubr.bf16.mxu0 0
      %3969 = vmatmul.mubr.bf16.gmra.mxu0 %v3894
      %v3970 = vpop.f32.mrf.mxu0
      %v3971 = vadd.f32 0.0, %v3970
      %v3972 = vpop.f32.mrf.mxu0
      %v3973 = vpop.f32.mrf.mxu0
      %v3974 = vadd.f32 0.0, %v3973
      %v3975 = vpop.f32.mrf.mxu0
      %3976 = vmatprep.mubr.bf16.mxu0 0
      %3977 = vmatmul.mubr.bf16.gmra.mxu0 %v3897
      %v3978 = vpop.f32.mrf.mxu0
      %v3979 = vadd.f32 0.0, %v3978
      %v3980 = vpop.f32.mrf.mxu0
      %v3981 = vpop.f32.mrf.mxu0
      %v3982 = vadd.f32 0.0, %v3981
      %v3983 = vpop.f32.mrf.mxu0
      %3984 = vmatprep.mubr.bf16.mxu0 0
      %3985 = vmatmul.mubr.bf16.gmra.mxu0 %v3900
      %v3986 = vpop.f32.mrf.mxu0
      %v3987 = vadd.f32 0.0, %v3986
      %v3988 = vpop.f32.mrf.mxu0
      %v3989 = vpop.f32.mrf.mxu0
      %v3990 = vadd.f32 0.0, %v3989
      %v3991 = vpop.f32.mrf.mxu0
      %3992 = vmatprep.mubr.bf16.mxu0 0
      %3993 = vmatmul.mubr.bf16.gmra.mxu0 %v3903
      %v3994 = vpop.f32.mrf.mxu0
      %v3995 = vadd.f32 0.0, %v3994
      %v3996 = vpop.f32.mrf.mxu0
      %v3997 = vpop.f32.mrf.mxu0
      %v3998 = vadd.f32 0.0, %v3997
      %v3999 = vpop.f32.mrf.mxu0
      %4000 = vmatprep.mubr.bf16.mxu0 0
      %4001 = vmatmul.mubr.bf16.gmra.mxu0 %v3906
      %v4002 = vpop.f32.mrf.mxu0
      %v4003 = vadd.f32 0.0, %v4002
      %v4004 = vpop.f32.mrf.mxu0
      %v4005 = vpop.f32.mrf.mxu0
      %v4006 = vadd.f32 0.0, %v4005
      %v4007 = vpop.f32.mrf.mxu0
      %4008 = vmatprep.mubr.bf16.mxu0 0
      %4009 = vmatmul.mubr.bf16.gmra.mxu0 %v3909
      %v4010 = vpop.f32.mrf.mxu0
      %v4011 = vadd.f32 0.0, %v4010
      %v4012 = vpop.f32.mrf.mxu0
      %v4013 = vpop.f32.mrf.mxu0
      %v4014 = vadd.f32 0.0, %v4013
      %v4015 = vpop.f32.mrf.mxu0
      %4016 = vmatprep.mubr.bf16.mxu0 0
      %4017 = vmatmul.mubr.bf16.gmra.mxu0 %v3912
      %v4018 = vpop.f32.mrf.mxu0
      %v4019 = vadd.f32 0.0, %v4018
      %v4020 = vpop.f32.mrf.mxu0
      %v4021 = vpop.f32.mrf.mxu0
      %v4022 = vadd.f32 0.0, %v4021
      %v4023 = vpop.f32.mrf.mxu0
      %4024 = vdwg.mxu0
      %v4025 = vpack.c.bf16 %v3958, %v3955
      %v4026 = vpack.c.bf16 %v3966, %v3963
      %v4027 = vpack.c.bf16 %v3974, %v3971
      %v4028 = vpack.c.bf16 %v3982, %v3979
      %v4029 = vpack.c.bf16 %v3990, %v3987
      %v4030 = vpack.c.bf16 %v3998, %v3995
      %v4031 = vpack.c.bf16 %v4006, %v4003
      %v4032 = vpack.c.bf16 %v4014, %v4011
      %v4033 = vpack.c.bf16 %v4022, %v4019
      %v4034 = vld [vmem:[%s5] sm:$0xf]
      %v4035 = vld [vmem:[%s5 + $0x4] sm:$0xf]
      %v4036 = vld [vmem:[%s5 + $0x8] sm:$0xf]
      %v4037 = vld [vmem:[%s5 + $0xc] sm:$0xf]
      %v4038 = vld [vmem:[%s5 + $0x10] sm:$0xf]
      %v4039 = vld [vmem:[%s5 + $0x14] sm:$0xf]
      %v4040 = vld [vmem:[%s5 + $0x18] sm:$0xf]
      %v4041 = vld [vmem:[%s5 + $0x1c] sm:$0xf]
      %s4042 = scalar_lea.vmem %s5, 32
      %v4043 = vld [vmem:[%s4042] sm:$0xf]
      %v4044 = vld [vmem:[%s4042 + $0x4] sm:$0xf]
      %v4045 = vld [vmem:[%s4042 + $0x8] sm:$0xf]
      %v4046 = vld [vmem:[%s4042 + $0xc] sm:$0xf]
      %v4047 = vld [vmem:[%s4042 + $0x10] sm:$0xf]
      %v4048 = vld [vmem:[%s4042 + $0x14] sm:$0xf]
      %v4049 = vld [vmem:[%s4042 + $0x18] sm:$0xf]
      %v4050 = vld [vmem:[%s4042 + $0x1c] sm:$0xf]
      %v4059 = vunpack.c.l.b16 %v4043
      %v4060 = vunpack.c.l.b16 %v4044
      %v4061 = vunpack.c.l.b16 %v4045
      %v4062 = vunpack.c.l.b16 %v4046
      %v4063 = vunpack.c.l.b16 %v4047
      %v4064 = vunpack.c.l.b16 %v4048
      %v4065 = vunpack.c.l.b16 %v4049
      %v4066 = vunpack.c.l.b16 %v4050
      %v4067 = vpack.c.b16 %v4060, %v4059
      %v4068 = vpack.c.b16 %v4062, %v4061
      %v4069 = vpack.c.b16 %v4064, %v4063
      %v4070 = vpack.c.b16 %v4066, %v4065
      %v4076 = vsel %vm3732, %v4026, 0
      %4078 = vmatprep.subr.bf16.mxu0 0
      %4079 = vmatpush1.bf16.msra.mxu0 0
      %4080 = vmatprep.subr.bf16.mxu0 0
      %4081 = vmatpush1.bf16.msra.mxu0 0
      %4082 = vmatprep.subr.bf16.mxu0 0
      %4083 = vmatpush1.bf16.msra.mxu0 0
      %4084 = vmatprep.subr.bf16.mxu0 0
      %4085 = vmatpush1.bf16.msra.mxu0 0
      %4086 = vmatprep.subr.bf16.mxu0 0
      %4087 = vmatpush1.bf16.msra.mxu0 %v4070
      %4088 = vmatprep.subr.bf16.mxu0 0
      %4089 = vmatpush1.bf16.msra.mxu0 %v4069
      %4090 = vmatprep.subr.bf16.mxu0 0
      %4091 = vmatpush1.bf16.msra.mxu0 %v4068
      %4092 = vmatprep.subr.bf16.mxu0 0
      %4093 = vmatpush1.bf16.msra.mxu0 %v4067
      %4094 = vmatprep.subr.bf16.mxu0 0
      %4095 = vmatpush2.bf16.msra.mxu0 0
      %4096 = vmatprep.subr.bf16.mxu0 0
      %4097 = vmatpush2.bf16.msra.mxu0 0
      %4098 = vmatprep.subr.bf16.mxu0 0
      %4099 = vmatpush2.bf16.msra.mxu0 0
      %4100 = vmatprep.subr.bf16.mxu0 0
      %4101 = vmatpush2.bf16.msra.mxu0 0
      %4102 = vmatprep.subr.bf16.mxu0 0
      %4103 = vmatpush2.bf16.msra.mxu0 0
      %4104 = vmatprep.subr.bf16.mxu0 0
      %4105 = vmatpush2.bf16.msra.mxu0 0
      %4106 = vmatprep.subr.bf16.mxu0 0
      %4107 = vmatpush2.bf16.msra.mxu0 0
      %4108 = vmatprep.subr.bf16.mxu0 0
      %4109 = vmatpush2.bf16.msra.mxu0 0
      %4110 = vmatprep.mubr.bf16.mxu0 0
      %4111 = vmatmul.mubr.bf16.gmra.mxu0 %v4076
      %v4112 = vpop.f32.mrf.mxu0
      %v4113 = vadd.f32 0.0, %v4112
      %v4114 = vpop.f32.mrf.mxu0
      %v4115 = vpop.f32.mrf.mxu0
      %v4116 = vadd.f32 0.0, %v4115
      %v4117 = vpop.f32.mrf.mxu0
      %4118 = vdwg.mxu0
      %v4127 = vunpack.c.l.b16 %v4034
      %v4128 = vunpack.c.l.b16 %v4035
      %v4129 = vunpack.c.l.b16 %v4036
      %v4130 = vunpack.c.l.b16 %v4037
      %v4131 = vunpack.c.l.b16 %v4038
      %v4132 = vunpack.c.l.b16 %v4039
      %v4133 = vunpack.c.l.b16 %v4040
      %v4134 = vunpack.c.l.b16 %v4041
      %v4135 = vpack.c.b16 %v4128, %v4127
      %v4136 = vpack.c.b16 %v4130, %v4129
      %v4137 = vpack.c.b16 %v4132, %v4131
      %v4138 = vpack.c.b16 %v4134, %v4133
      %v4144 = vsel %vm3732, %v4025, 0
      %4146 = vmatprep.subr.bf16.mxu0 0
      %4147 = vmatpush1.bf16.msra.mxu0 0
      %4148 = vmatprep.subr.bf16.mxu0 0
      %4149 = vmatpush1.bf16.msra.mxu0 0
      %4150 = vmatprep.subr.bf16.mxu0 0
      %4151 = vmatpush1.bf16.msra.mxu0 0
      %4152 = vmatprep.subr.bf16.mxu0 0
      %4153 = vmatpush1.bf16.msra.mxu0 0
      %4154 = vmatprep.subr.bf16.mxu0 0
      %4155 = vmatpush1.bf16.msra.mxu0 %v4138
      %4156 = vmatprep.subr.bf16.mxu0 0
      %4157 = vmatpush1.bf16.msra.mxu0 %v4137
      %4158 = vmatprep.subr.bf16.mxu0 0
      %4159 = vmatpush1.bf16.msra.mxu0 %v4136
      %4160 = vmatprep.subr.bf16.mxu0 0
      %4161 = vmatpush1.bf16.msra.mxu0 %v4135
      %4162 = vmatprep.subr.bf16.mxu0 0
      %4163 = vmatpush2.bf16.msra.mxu0 0
      %4164 = vmatprep.subr.bf16.mxu0 0
      %4165 = vmatpush2.bf16.msra.mxu0 0
      %4166 = vmatprep.subr.bf16.mxu0 0
      %4167 = vmatpush2.bf16.msra.mxu0 0
      %4168 = vmatprep.subr.bf16.mxu0 0
      %4169 = vmatpush2.bf16.msra.mxu0 0
      %4170 = vmatprep.subr.bf16.mxu0 0
      %4171 = vmatpush2.bf16.msra.mxu0 0
      %4172 = vmatprep.subr.bf16.mxu0 0
      %4173 = vmatpush2.bf16.msra.mxu0 0
      %4174 = vmatprep.subr.bf16.mxu0 0
      %4175 = vmatpush2.bf16.msra.mxu0 0
      %4176 = vmatprep.subr.bf16.mxu0 0
      %4177 = vmatpush2.bf16.msra.mxu0 0
      %4178 = vmatprep.mubr.bf16.mxu0 0
      %4179 = vmatmul.mubr.bf16.gmra.mxu0 %v4144
      %v4180 = vpop.f32.mrf.mxu0
      %v4181 = vadd.f32 %v4113, %v4180
      %v4182 = vpop.f32.mrf.mxu0
      %v4183 = vpop.f32.mrf.mxu0
      %v4184 = vadd.f32 %v4116, %v4183
      %v4185 = vpop.f32.mrf.mxu0
      %4186 = vdwg.mxu0
      %s4187 = scalar_lea.vmem %s5, 64
      %v4188 = vld [vmem:[%s4187] sm:$0xf]
      %v4189 = vld [vmem:[%s4187 + $0x4] sm:$0xf]
      %v4190 = vld [vmem:[%s4187 + $0x8] sm:$0xf]
      %v4191 = vld [vmem:[%s4187 + $0xc] sm:$0xf]
      %v4192 = vld [vmem:[%s4187 + $0x10] sm:$0xf]
      %v4193 = vld [vmem:[%s4187 + $0x14] sm:$0xf]
      %v4194 = vld [vmem:[%s4187 + $0x18] sm:$0xf]
      %v4195 = vld [vmem:[%s4187 + $0x1c] sm:$0xf]
      %v4204 = vunpack.c.l.b16 %v4188
      %v4205 = vunpack.c.l.b16 %v4189
      %v4206 = vunpack.c.l.b16 %v4190
      %v4207 = vunpack.c.l.b16 %v4191
      %v4208 = vunpack.c.l.b16 %v4192
      %v4209 = vunpack.c.l.b16 %v4193
      %v4210 = vunpack.c.l.b16 %v4194
      %v4211 = vunpack.c.l.b16 %v4195
      %v4212 = vpack.c.b16 %v4205, %v4204
      %v4213 = vpack.c.b16 %v4207, %v4206
      %v4214 = vpack.c.b16 %v4209, %v4208
      %v4215 = vpack.c.b16 %v4211, %v4210
      %v4221 = vsel %vm3732, %v4027, 0
      %4223 = vmatprep.subr.bf16.mxu0 0
      %4224 = vmatpush1.bf16.msra.mxu0 0
      %4225 = vmatprep.subr.bf16.mxu0 0
      %4226 = vmatpush1.bf16.msra.mxu0 0
      %4227 = vmatprep.subr.bf16.mxu0 0
      %4228 = vmatpush1.bf16.msra.mxu0 0
      %4229 = vmatprep.subr.bf16.mxu0 0
      %4230 = vmatpush1.bf16.msra.mxu0 0
      %4231 = vmatprep.subr.bf16.mxu0 0
      %4232 = vmatpush1.bf16.msra.mxu0 %v4215
      %4233 = vmatprep.subr.bf16.mxu0 0
      %4234 = vmatpush1.bf16.msra.mxu0 %v4214
      %4235 = vmatprep.subr.bf16.mxu0 0
      %4236 = vmatpush1.bf16.msra.mxu0 %v4213
      %4237 = vmatprep.subr.bf16.mxu0 0
      %4238 = vmatpush1.bf16.msra.mxu0 %v4212
      %4239 = vmatprep.subr.bf16.mxu0 0
      %4240 = vmatpush2.bf16.msra.mxu0 0
      %4241 = vmatprep.subr.bf16.mxu0 0
      %4242 = vmatpush2.bf16.msra.mxu0 0
      %4243 = vmatprep.subr.bf16.mxu0 0
      %4244 = vmatpush2.bf16.msra.mxu0 0
      %4245 = vmatprep.subr.bf16.mxu0 0
      %4246 = vmatpush2.bf16.msra.mxu0 0
      %4247 = vmatprep.subr.bf16.mxu0 0
      %4248 = vmatpush2.bf16.msra.mxu0 0
      %4249 = vmatprep.subr.bf16.mxu0 0
      %4250 = vmatpush2.bf16.msra.mxu0 0
      %4251 = vmatprep.subr.bf16.mxu0 0
      %4252 = vmatpush2.bf16.msra.mxu0 0
      %4253 = vmatprep.subr.bf16.mxu0 0
      %4254 = vmatpush2.bf16.msra.mxu0 0
      %4255 = vmatprep.mubr.bf16.mxu0 0
      %4256 = vmatmul.mubr.bf16.gmra.mxu0 %v4221
      %v4257 = vpop.f32.mrf.mxu0
      %v4258 = vadd.f32 0.0, %v4257
      %v4259 = vpop.f32.mrf.mxu0
      %v4260 = vpop.f32.mrf.mxu0
      %v4261 = vadd.f32 0.0, %v4260
      %v4262 = vpop.f32.mrf.mxu0
      %4263 = vdwg.mxu0
      %v4264 = vadd.f32 %v4181, %v4258
      %v4265 = vadd.f32 %v4184, %v4261
      %s4266 = scalar_lea.vmem %s5, 96
      %v4267 = vld [vmem:[%s4266] sm:$0xf]
      %v4268 = vld [vmem:[%s4266 + $0x4] sm:$0xf]
      %v4269 = vld [vmem:[%s4266 + $0x8] sm:$0xf]
      %v4270 = vld [vmem:[%s4266 + $0xc] sm:$0xf]
      %v4271 = vld [vmem:[%s4266 + $0x10] sm:$0xf]
      %v4272 = vld [vmem:[%s4266 + $0x14] sm:$0xf]
      %v4273 = vld [vmem:[%s4266 + $0x18] sm:$0xf]
      %v4274 = vld [vmem:[%s4266 + $0x1c] sm:$0xf]
      %v4283 = vunpack.c.l.b16 %v4267
      %v4284 = vunpack.c.l.b16 %v4268
      %v4285 = vunpack.c.l.b16 %v4269
      %v4286 = vunpack.c.l.b16 %v4270
      %v4287 = vunpack.c.l.b16 %v4271
      %v4288 = vunpack.c.l.b16 %v4272
      %v4289 = vunpack.c.l.b16 %v4273
      %v4290 = vunpack.c.l.b16 %v4274
      %v4291 = vpack.c.b16 %v4284, %v4283
      %v4292 = vpack.c.b16 %v4286, %v4285
      %v4293 = vpack.c.b16 %v4288, %v4287
      %v4294 = vpack.c.b16 %v4290, %v4289
      %v4300 = vsel %vm3732, %v4028, 0
      %4302 = vmatprep.subr.bf16.mxu0 0
      %4303 = vmatpush1.bf16.msra.mxu0 0
      %4304 = vmatprep.subr.bf16.mxu0 0
      %4305 = vmatpush1.bf16.msra.mxu0 0
      %4306 = vmatprep.subr.bf16.mxu0 0
      %4307 = vmatpush1.bf16.msra.mxu0 0
      %4308 = vmatprep.subr.bf16.mxu0 0
      %4309 = vmatpush1.bf16.msra.mxu0 0
      %4310 = vmatprep.subr.bf16.mxu0 0
      %4311 = vmatpush1.bf16.msra.mxu0 %v4294
      %4312 = vmatprep.subr.bf16.mxu0 0
      %4313 = vmatpush1.bf16.msra.mxu0 %v4293
      %4314 = vmatprep.subr.bf16.mxu0 0
      %4315 = vmatpush1.bf16.msra.mxu0 %v4292
      %4316 = vmatprep.subr.bf16.mxu0 0
      %4317 = vmatpush1.bf16.msra.mxu0 %v4291
      %4318 = vmatprep.subr.bf16.mxu0 0
      %4319 = vmatpush2.bf16.msra.mxu0 0
      %4320 = vmatprep.subr.bf16.mxu0 0
      %4321 = vmatpush2.bf16.msra.mxu0 0
      %4322 = vmatprep.subr.bf16.mxu0 0
      %4323 = vmatpush2.bf16.msra.mxu0 0
      %4324 = vmatprep.subr.bf16.mxu0 0
      %4325 = vmatpush2.bf16.msra.mxu0 0
      %4326 = vmatprep.subr.bf16.mxu0 0
      %4327 = vmatpush2.bf16.msra.mxu0 0
      %4328 = vmatprep.subr.bf16.mxu0 0
      %4329 = vmatpush2.bf16.msra.mxu0 0
      %4330 = vmatprep.subr.bf16.mxu0 0
      %4331 = vmatpush2.bf16.msra.mxu0 0
      %4332 = vmatprep.subr.bf16.mxu0 0
      %4333 = vmatpush2.bf16.msra.mxu0 0
      %4334 = vmatprep.mubr.bf16.mxu0 0
      %4335 = vmatmul.mubr.bf16.gmra.mxu0 %v4300
      %v4336 = vpop.f32.mrf.mxu0
      %v4337 = vadd.f32 0.0, %v4336
      %v4338 = vpop.f32.mrf.mxu0
      %v4339 = vpop.f32.mrf.mxu0
      %v4340 = vadd.f32 0.0, %v4339
      %v4341 = vpop.f32.mrf.mxu0
      %4342 = vdwg.mxu0
      %v4343 = vadd.f32 %v4264, %v4337
      %v4344 = vadd.f32 %v4265, %v4340
      %s4345 = scalar_lea.vmem %s5, 128
      %v4346 = vld [vmem:[%s4345] sm:$0xf]
      %v4347 = vld [vmem:[%s4345 + $0x4] sm:$0xf]
      %v4348 = vld [vmem:[%s4345 + $0x8] sm:$0xf]
      %v4349 = vld [vmem:[%s4345 + $0xc] sm:$0xf]
      %v4350 = vld [vmem:[%s4345 + $0x10] sm:$0xf]
      %v4351 = vld [vmem:[%s4345 + $0x14] sm:$0xf]
      %v4352 = vld [vmem:[%s4345 + $0x18] sm:$0xf]
      %v4353 = vld [vmem:[%s4345 + $0x1c] sm:$0xf]
      %v4362 = vunpack.c.l.b16 %v4346
      %v4363 = vunpack.c.l.b16 %v4347
      %v4364 = vunpack.c.l.b16 %v4348
      %v4365 = vunpack.c.l.b16 %v4349
      %v4366 = vunpack.c.l.b16 %v4350
      %v4367 = vunpack.c.l.b16 %v4351
      %v4368 = vunpack.c.l.b16 %v4352
      %v4369 = vunpack.c.l.b16 %v4353
      %v4370 = vpack.c.b16 %v4363, %v4362
      %v4371 = vpack.c.b16 %v4365, %v4364
      %v4372 = vpack.c.b16 %v4367, %v4366
      %v4373 = vpack.c.b16 %v4369, %v4368
      %v4379 = vsel %vm3732, %v4029, 0
      %4381 = vmatprep.subr.bf16.mxu0 0
      %4382 = vmatpush1.bf16.msra.mxu0 0
      %4383 = vmatprep.subr.bf16.mxu0 0
      %4384 = vmatpush1.bf16.msra.mxu0 0
      %4385 = vmatprep.subr.bf16.mxu0 0
      %4386 = vmatpush1.bf16.msra.mxu0 0
      %4387 = vmatprep.subr.bf16.mxu0 0
      %4388 = vmatpush1.bf16.msra.mxu0 0
      %4389 = vmatprep.subr.bf16.mxu0 0
      %4390 = vmatpush1.bf16.msra.mxu0 %v4373
      %4391 = vmatprep.subr.bf16.mxu0 0
      %4392 = vmatpush1.bf16.msra.mxu0 %v4372
      %4393 = vmatprep.subr.bf16.mxu0 0
      %4394 = vmatpush1.bf16.msra.mxu0 %v4371
      %4395 = vmatprep.subr.bf16.mxu0 0
      %4396 = vmatpush1.bf16.msra.mxu0 %v4370
      %4397 = vmatprep.subr.bf16.mxu0 0
      %4398 = vmatpush2.bf16.msra.mxu0 0
      %4399 = vmatprep.subr.bf16.mxu0 0
      %4400 = vmatpush2.bf16.msra.mxu0 0
      %4401 = vmatprep.subr.bf16.mxu0 0
      %4402 = vmatpush2.bf16.msra.mxu0 0
      %4403 = vmatprep.subr.bf16.mxu0 0
      %4404 = vmatpush2.bf16.msra.mxu0 0
      %4405 = vmatprep.subr.bf16.mxu0 0
      %4406 = vmatpush2.bf16.msra.mxu0 0
      %4407 = vmatprep.subr.bf16.mxu0 0
      %4408 = vmatpush2.bf16.msra.mxu0 0
      %4409 = vmatprep.subr.bf16.mxu0 0
      %4410 = vmatpush2.bf16.msra.mxu0 0
      %4411 = vmatprep.subr.bf16.mxu0 0
      %4412 = vmatpush2.bf16.msra.mxu0 0
      %4413 = vmatprep.mubr.bf16.mxu0 0
      %4414 = vmatmul.mubr.bf16.gmra.mxu0 %v4379
      %v4415 = vpop.f32.mrf.mxu0
      %v4416 = vadd.f32 0.0, %v4415
      %v4417 = vpop.f32.mrf.mxu0
      %v4418 = vpop.f32.mrf.mxu0
      %v4419 = vadd.f32 0.0, %v4418
      %v4420 = vpop.f32.mrf.mxu0
      %4421 = vdwg.mxu0
      %v4422 = vadd.f32 %v4343, %v4416
      %v4423 = vadd.f32 %v4344, %v4419
      %s4424 = scalar_lea.vmem %s5, 160
      %v4425 = vld [vmem:[%s4424] sm:$0xf]
      %v4426 = vld [vmem:[%s4424 + $0x4] sm:$0xf]
      %v4427 = vld [vmem:[%s4424 + $0x8] sm:$0xf]
      %v4428 = vld [vmem:[%s4424 + $0xc] sm:$0xf]
      %v4429 = vld [vmem:[%s4424 + $0x10] sm:$0xf]
      %v4430 = vld [vmem:[%s4424 + $0x14] sm:$0xf]
      %v4431 = vld [vmem:[%s4424 + $0x18] sm:$0xf]
      %v4432 = vld [vmem:[%s4424 + $0x1c] sm:$0xf]
      %v4441 = vunpack.c.l.b16 %v4425
      %v4442 = vunpack.c.l.b16 %v4426
      %v4443 = vunpack.c.l.b16 %v4427
      %v4444 = vunpack.c.l.b16 %v4428
      %v4445 = vunpack.c.l.b16 %v4429
      %v4446 = vunpack.c.l.b16 %v4430
      %v4447 = vunpack.c.l.b16 %v4431
      %v4448 = vunpack.c.l.b16 %v4432
      %v4449 = vpack.c.b16 %v4442, %v4441
      %v4450 = vpack.c.b16 %v4444, %v4443
      %v4451 = vpack.c.b16 %v4446, %v4445
      %v4452 = vpack.c.b16 %v4448, %v4447
      %v4458 = vsel %vm3732, %v4030, 0
      %4460 = vmatprep.subr.bf16.mxu0 0
      %4461 = vmatpush1.bf16.msra.mxu0 0
      %4462 = vmatprep.subr.bf16.mxu0 0
      %4463 = vmatpush1.bf16.msra.mxu0 0
      %4464 = vmatprep.subr.bf16.mxu0 0
      %4465 = vmatpush1.bf16.msra.mxu0 0
      %4466 = vmatprep.subr.bf16.mxu0 0
      %4467 = vmatpush1.bf16.msra.mxu0 0
      %4468 = vmatprep.subr.bf16.mxu0 0
      %4469 = vmatpush1.bf16.msra.mxu0 %v4452
      %4470 = vmatprep.subr.bf16.mxu0 0
      %4471 = vmatpush1.bf16.msra.mxu0 %v4451
      %4472 = vmatprep.subr.bf16.mxu0 0
      %4473 = vmatpush1.bf16.msra.mxu0 %v4450
      %4474 = vmatprep.subr.bf16.mxu0 0
      %4475 = vmatpush1.bf16.msra.mxu0 %v4449
      %4476 = vmatprep.subr.bf16.mxu0 0
      %4477 = vmatpush2.bf16.msra.mxu0 0
      %4478 = vmatprep.subr.bf16.mxu0 0
      %4479 = vmatpush2.bf16.msra.mxu0 0
      %4480 = vmatprep.subr.bf16.mxu0 0
      %4481 = vmatpush2.bf16.msra.mxu0 0
      %4482 = vmatprep.subr.bf16.mxu0 0
      %4483 = vmatpush2.bf16.msra.mxu0 0
      %4484 = vmatprep.subr.bf16.mxu0 0
      %4485 = vmatpush2.bf16.msra.mxu0 0
      %4486 = vmatprep.subr.bf16.mxu0 0
      %4487 = vmatpush2.bf16.msra.mxu0 0
      %4488 = vmatprep.subr.bf16.mxu0 0
      %4489 = vmatpush2.bf16.msra.mxu0 0
      %4490 = vmatprep.subr.bf16.mxu0 0
      %4491 = vmatpush2.bf16.msra.mxu0 0
      %4492 = vmatprep.mubr.bf16.mxu0 0
      %4493 = vmatmul.mubr.bf16.gmra.mxu0 %v4458
      %v4494 = vpop.f32.mrf.mxu0
      %v4495 = vadd.f32 0.0, %v4494
      %v4496 = vpop.f32.mrf.mxu0
      %v4497 = vpop.f32.mrf.mxu0
      %v4498 = vadd.f32 0.0, %v4497
      %v4499 = vpop.f32.mrf.mxu0
      %4500 = vdwg.mxu0
      %v4501 = vadd.f32 %v4422, %v4495
      %v4502 = vadd.f32 %v4423, %v4498
      %s4503 = scalar_lea.vmem %s5, 192
      %v4504 = vld [vmem:[%s4503] sm:$0xf]
      %v4505 = vld [vmem:[%s4503 + $0x4] sm:$0xf]
      %v4506 = vld [vmem:[%s4503 + $0x8] sm:$0xf]
      %v4507 = vld [vmem:[%s4503 + $0xc] sm:$0xf]
      %v4508 = vld [vmem:[%s4503 + $0x10] sm:$0xf]
      %v4509 = vld [vmem:[%s4503 + $0x14] sm:$0xf]
      %v4510 = vld [vmem:[%s4503 + $0x18] sm:$0xf]
      %v4511 = vld [vmem:[%s4503 + $0x1c] sm:$0xf]
      %v4520 = vunpack.c.l.b16 %v4504
      %v4521 = vunpack.c.l.b16 %v4505
      %v4522 = vunpack.c.l.b16 %v4506
      %v4523 = vunpack.c.l.b16 %v4507
      %v4524 = vunpack.c.l.b16 %v4508
      %v4525 = vunpack.c.l.b16 %v4509
      %v4526 = vunpack.c.l.b16 %v4510
      %v4527 = vunpack.c.l.b16 %v4511
      %v4528 = vpack.c.b16 %v4521, %v4520
      %v4529 = vpack.c.b16 %v4523, %v4522
      %v4530 = vpack.c.b16 %v4525, %v4524
      %v4531 = vpack.c.b16 %v4527, %v4526
      %v4537 = vsel %vm3732, %v4031, 0
      %4539 = vmatprep.subr.bf16.mxu0 0
      %4540 = vmatpush1.bf16.msra.mxu0 0
      %4541 = vmatprep.subr.bf16.mxu0 0
      %4542 = vmatpush1.bf16.msra.mxu0 0
      %4543 = vmatprep.subr.bf16.mxu0 0
      %4544 = vmatpush1.bf16.msra.mxu0 0
      %4545 = vmatprep.subr.bf16.mxu0 0
      %4546 = vmatpush1.bf16.msra.mxu0 0
      %4547 = vmatprep.subr.bf16.mxu0 0
      %4548 = vmatpush1.bf16.msra.mxu0 %v4531
      %4549 = vmatprep.subr.bf16.mxu0 0
      %4550 = vmatpush1.bf16.msra.mxu0 %v4530
      %4551 = vmatprep.subr.bf16.mxu0 0
      %4552 = vmatpush1.bf16.msra.mxu0 %v4529
      %4553 = vmatprep.subr.bf16.mxu0 0
      %4554 = vmatpush1.bf16.msra.mxu0 %v4528
      %4555 = vmatprep.subr.bf16.mxu0 0
      %4556 = vmatpush2.bf16.msra.mxu0 0
      %4557 = vmatprep.subr.bf16.mxu0 0
      %4558 = vmatpush2.bf16.msra.mxu0 0
      %4559 = vmatprep.subr.bf16.mxu0 0
      %4560 = vmatpush2.bf16.msra.mxu0 0
      %4561 = vmatprep.subr.bf16.mxu0 0
      %4562 = vmatpush2.bf16.msra.mxu0 0
      %4563 = vmatprep.subr.bf16.mxu0 0
      %4564 = vmatpush2.bf16.msra.mxu0 0
      %4565 = vmatprep.subr.bf16.mxu0 0
      %4566 = vmatpush2.bf16.msra.mxu0 0
      %4567 = vmatprep.subr.bf16.mxu0 0
      %4568 = vmatpush2.bf16.msra.mxu0 0
      %4569 = vmatprep.subr.bf16.mxu0 0
      %4570 = vmatpush2.bf16.msra.mxu0 0
      %4571 = vmatprep.mubr.bf16.mxu0 0
      %4572 = vmatmul.mubr.bf16.gmra.mxu0 %v4537
      %v4573 = vpop.f32.mrf.mxu0
      %v4574 = vadd.f32 0.0, %v4573
      %v4575 = vpop.f32.mrf.mxu0
      %v4576 = vpop.f32.mrf.mxu0
      %v4577 = vadd.f32 0.0, %v4576
      %v4578 = vpop.f32.mrf.mxu0
      %4579 = vdwg.mxu0
      %v4580 = vadd.f32 %v4501, %v4574
      %v4581 = vadd.f32 %v4502, %v4577
      %s4582 = scalar_lea.vmem %s5, 224
      %v4583 = vld [vmem:[%s4582] sm:$0xf]
      %v4584 = vld [vmem:[%s4582 + $0x4] sm:$0xf]
      %v4585 = vld [vmem:[%s4582 + $0x8] sm:$0xf]
      %v4586 = vld [vmem:[%s4582 + $0xc] sm:$0xf]
      %v4587 = vld [vmem:[%s4582 + $0x10] sm:$0xf]
      %v4588 = vld [vmem:[%s4582 + $0x14] sm:$0xf]
      %v4589 = vld [vmem:[%s4582 + $0x18] sm:$0xf]
      %v4590 = vld [vmem:[%s4582 + $0x1c] sm:$0xf]
      %v4599 = vunpack.c.l.b16 %v4583
      %v4600 = vunpack.c.l.b16 %v4584
      %v4601 = vunpack.c.l.b16 %v4585
      %v4602 = vunpack.c.l.b16 %v4586
      %v4603 = vunpack.c.l.b16 %v4587
      %v4604 = vunpack.c.l.b16 %v4588
      %v4605 = vunpack.c.l.b16 %v4589
      %v4606 = vunpack.c.l.b16 %v4590
      %v4607 = vpack.c.b16 %v4600, %v4599
      %v4608 = vpack.c.b16 %v4602, %v4601
      %v4609 = vpack.c.b16 %v4604, %v4603
      %v4610 = vpack.c.b16 %v4606, %v4605
      %v4616 = vsel %vm3732, %v4032, 0
      %4618 = vmatprep.subr.bf16.mxu0 0
      %4619 = vmatpush1.bf16.msra.mxu0 0
      %4620 = vmatprep.subr.bf16.mxu0 0
      %4621 = vmatpush1.bf16.msra.mxu0 0
      %4622 = vmatprep.subr.bf16.mxu0 0
      %4623 = vmatpush1.bf16.msra.mxu0 0
      %4624 = vmatprep.subr.bf16.mxu0 0
      %4625 = vmatpush1.bf16.msra.mxu0 0
      %4626 = vmatprep.subr.bf16.mxu0 0
      %4627 = vmatpush1.bf16.msra.mxu0 %v4610
      %4628 = vmatprep.subr.bf16.mxu0 0
      %4629 = vmatpush1.bf16.msra.mxu0 %v4609
      %4630 = vmatprep.subr.bf16.mxu0 0
      %4631 = vmatpush1.bf16.msra.mxu0 %v4608
      %4632 = vmatprep.subr.bf16.mxu0 0
      %4633 = vmatpush1.bf16.msra.mxu0 %v4607
      %4634 = vmatprep.subr.bf16.mxu0 0
      %4635 = vmatpush2.bf16.msra.mxu0 0
      %4636 = vmatprep.subr.bf16.mxu0 0
      %4637 = vmatpush2.bf16.msra.mxu0 0
      %4638 = vmatprep.subr.bf16.mxu0 0
      %4639 = vmatpush2.bf16.msra.mxu0 0
      %4640 = vmatprep.subr.bf16.mxu0 0
      %4641 = vmatpush2.bf16.msra.mxu0 0
      %4642 = vmatprep.subr.bf16.mxu0 0
      %4643 = vmatpush2.bf16.msra.mxu0 0
      %4644 = vmatprep.subr.bf16.mxu0 0
      %4645 = vmatpush2.bf16.msra.mxu0 0
      %4646 = vmatprep.subr.bf16.mxu0 0
      %4647 = vmatpush2.bf16.msra.mxu0 0
      %4648 = vmatprep.subr.bf16.mxu0 0
      %4649 = vmatpush2.bf16.msra.mxu0 0
      %4650 = vmatprep.mubr.bf16.mxu0 0
      %4651 = vmatmul.mubr.bf16.gmra.mxu0 %v4616
      %v4652 = vpop.f32.mrf.mxu0
      %v4653 = vadd.f32 0.0, %v4652
      %v4654 = vpop.f32.mrf.mxu0
      %v4655 = vpop.f32.mrf.mxu0
      %v4656 = vadd.f32 0.0, %v4655
      %v4657 = vpop.f32.mrf.mxu0
      %4658 = vdwg.mxu0
      %v4659 = vadd.f32 %v4580, %v4653
      %v4660 = vadd.f32 %v4581, %v4656
      %s4661 = scalar_lea.vmem %s5, 256
      %v4662 = vld [vmem:[%s4661] sm:$0xf]
      %v4663 = vld [vmem:[%s4661 + $0x4] sm:$0xf]
      %v4664 = vld [vmem:[%s4661 + $0x8] sm:$0xf]
      %v4665 = vld [vmem:[%s4661 + $0xc] sm:$0xf]
      %v4666 = vld [vmem:[%s4661 + $0x10] sm:$0xf]
      %v4667 = vld [vmem:[%s4661 + $0x14] sm:$0xf]
      %v4668 = vld [vmem:[%s4661 + $0x18] sm:$0xf]
      %v4669 = vld [vmem:[%s4661 + $0x1c] sm:$0xf]
      %v4678 = vunpack.c.l.b16 %v4662
      %v4679 = vunpack.c.l.b16 %v4663
      %v4680 = vunpack.c.l.b16 %v4664
      %v4681 = vunpack.c.l.b16 %v4665
      %v4682 = vunpack.c.l.b16 %v4666
      %v4683 = vunpack.c.l.b16 %v4667
      %v4684 = vunpack.c.l.b16 %v4668
      %v4685 = vunpack.c.l.b16 %v4669
      %v4686 = vpack.c.b16 %v4679, %v4678
      %v4687 = vpack.c.b16 %v4681, %v4680
      %v4688 = vpack.c.b16 %v4683, %v4682
      %v4689 = vpack.c.b16 %v4685, %v4684
      %v4695 = vsel %vm3732, %v4033, 0
      %4697 = vmatprep.subr.bf16.mxu0 0
      %4698 = vmatpush1.bf16.msra.mxu0 0
      %4699 = vmatprep.subr.bf16.mxu0 0
      %4700 = vmatpush1.bf16.msra.mxu0 0
      %4701 = vmatprep.subr.bf16.mxu0 0
      %4702 = vmatpush1.bf16.msra.mxu0 0
      %4703 = vmatprep.subr.bf16.mxu0 0
      %4704 = vmatpush1.bf16.msra.mxu0 0
      %4705 = vmatprep.subr.bf16.mxu0 0
      %4706 = vmatpush1.bf16.msra.mxu0 %v4689
      %4707 = vmatprep.subr.bf16.mxu0 0
      %4708 = vmatpush1.bf16.msra.mxu0 %v4688
      %4709 = vmatprep.subr.bf16.mxu0 0
      %4710 = vmatpush1.bf16.msra.mxu0 %v4687
      %4711 = vmatprep.subr.bf16.mxu0 0
      %4712 = vmatpush1.bf16.msra.mxu0 %v4686
      %4713 = vmatprep.subr.bf16.mxu0 0
      %4714 = vmatpush2.bf16.msra.mxu0 0
      %4715 = vmatprep.subr.bf16.mxu0 0
      %4716 = vmatpush2.bf16.msra.mxu0 0
      %4717 = vmatprep.subr.bf16.mxu0 0
      %4718 = vmatpush2.bf16.msra.mxu0 0
      %4719 = vmatprep.subr.bf16.mxu0 0
      %4720 = vmatpush2.bf16.msra.mxu0 0
      %4721 = vmatprep.subr.bf16.mxu0 0
      %4722 = vmatpush2.bf16.msra.mxu0 0
      %4723 = vmatprep.subr.bf16.mxu0 0
      %4724 = vmatpush2.bf16.msra.mxu0 0
      %4725 = vmatprep.subr.bf16.mxu0 0
      %4726 = vmatpush2.bf16.msra.mxu0 0
      %4727 = vmatprep.subr.bf16.mxu0 0
      %4728 = vmatpush2.bf16.msra.mxu0 0
      %4729 = vmatprep.mubr.bf16.mxu0 0
      %4730 = vmatmul.mubr.bf16.gmra.mxu0 %v4695
      %v4731 = vpop.f32.mrf.mxu0
      %v4732 = vadd.f32 0.0, %v4731
      %v4733 = vpop.f32.mrf.mxu0
      %v4734 = vpop.f32.mrf.mxu0
      %v4735 = vadd.f32 0.0, %v4734
      %v4736 = vpop.f32.mrf.mxu0
      %4737 = vdwg.mxu0
      %v4738 = vadd.f32 %v4659, %v4732
      %v4739 = vadd.f32 %v4660, %v4735
      %v4740 = vadd.f32 %v4738, %v4739
      %v4741 = vrot.slane %v4740, 4
      %v4742 = vadd.f32 %v4740, %v4741
      %v4743 = vrot.slane %v4742, 2
      %v4744 = vadd.f32 %v4742, %v4743
      %v4745 = vrot.slane %v4744, 1
      %v4746 = vadd.f32 %v4744, %v4745
      %v4747 = vrcp.pop 16.0
      %v4748 = vmul.f32 %v4746, %v4747
      %v4749 = vsub.f32 %v4738, %v4748
      %v4750 = vsub.f32 %v4739, %v4748
      %v4751 = vmul.f32 %v4749, %v4749
      %v4752 = vmul.f32 %v4750, %v4750
      %v4753 = vadd.f32 %v4751, %v4752
      %v4754 = vrot.slane %v4753, 4
      %v4755 = vadd.f32 %v4753, %v4754
      %v4756 = vrot.slane %v4755, 2
      %v4757 = vadd.f32 %v4755, %v4756
      %v4758 = vrot.slane %v4757, 1
      %v4759 = vadd.f32 %v4757, %v4758
      %v4760 = vmul.f32 %v4759, %v4747
      %v4761 = vadd.f32 %v4760, 1e-05
      %v4762 = vrsqrt.pop %v4761
      %v4763 = vmul.f32 %v4749, %v4762
      %v4764 = vmul.f32 %v4750, %v4762
      %vm4765 = vcmp.ge.f32.partialorder %v4763, 0.0
      %vm4766 = vcmp.ge.f32.partialorder %v4764, 0.0
      %v4767 = vmul.f32 %v4763, 0.2
      %v4768 = vmul.f32 %v4764, 0.2
      %v4769 = vsel %vm4765, %v4763, %v4767
      %v4770 = vsel %vm4766, %v4764, %v4768
      %v4771 = vld [vmem:[%s6] sm:$0xff]
      %v4772 = vld [vmem:[%s6 + $0x8] sm:$0xff]
      %v4773 = vmul.f32 %v4769, %v4771
      %v4774 = vmul.f32 %v4770, %v4772
      %4775 = vadd.xlane.f32.xlu0 %v4773
      %v4776 = vpop.xlane.xlu0 %4775
      %4777 = vadd.xlane.f32.xlu0 %v4774
      %v4778 = vpop.xlane.xlu0 %4777
      %v4779 = vadd.f32 %v4776, %v4778
      %v4780 = vrot.slane %v4779, 4
      %v4781 = vadd.f32 %v4779, %v4780
      %v4782 = vrot.slane %v4781, 2
      %v4783 = vadd.f32 %v4781, %v4782
      %v4784 = vrot.slane %v4783, 1
      %v4785 = vadd.f32 %v4783, %v4784
      %v4786 = vsub.f32 0.0, %v4785
      %v4787 = vmul.f32 %v4786, 1.442695
      %v4788 = vpow.pop %v4787
      %v4789 = vadd.f32 %v4788, 1.0
      %v4790 = vrcp.pop %v4789
      %v4791 = vmul.f32 1.0, %v4790
      %vm4792 = vcmask 0
      %4793 = vst.msk [vmem:[%s274] sm:$0x1] %vm4792, %v4791
      %p4794 = scmp.lt.s32.totalorder %s18, 1
      %s4795 = scalar_select %p4794, %s18, 1
      %s4796 = scalar_lea.vmem %s7, %s4795
      // Predicated region
      $region49: #{discriminator_wgan_forward.1} parent=47 // pred_check
        %p4797 = pneg %p188
      $region50: #{discriminator_wgan_forward.1} parent=47 // pred_check_branch
        %4799 = sbr.rel (%p4797) target = $region52
      $region51: #{discriminator_wgan_forward.1} parent=47 // pred_region
        _
      $region52: #{discriminator_wgan_forward.1} parent=47 // pred_fallthru
        _
    $region48: #{discriminator_wgan_forward.1} parent=5 // pred_fallthru
      _
    %p4800 = scmp.le.s32.totalorder 2, %s13
    // Predicated region
    $region53: #{discriminator_wgan_forward.1} parent=5 // pred_check
      %p4801 = pneg %p4800
    $region54: #{discriminator_wgan_forward.1} parent=5 // pred_check_branch
      %4803 = sbr.rel (%p4801) target = $region56
    $region55: #{discriminator_wgan_forward.1} parent=5 // pred_region
      %s4804 = ssub.s32 %s13, 2
      // Predicated region
      $region57: #{discriminator_wgan_forward.1} parent=55 // pred_check
        %p4805 = pneg %p194
      $region58: #{discriminator_wgan_forward.1} parent=55 // pred_check_branch
        %4807 = sbr.rel (%p4805) target = $region60
      $region59: #{discriminator_wgan_forward.1} parent=55 // pred_region
        %p4808 = scmp.lt.s32.totalorder %s19, 1
        %s4809 = scalar_select %p4808, %s19, 1
        %s4810 = scalar_lea.vmem %s7, %s4809
      $region60: #{discriminator_wgan_forward.1} parent=55 // pred_fallthru
        _
    $region56: #{discriminator_wgan_forward.1} parent=5 // pred_fallthru
      _
  $region6: #{discriminator_wgan_forward.1} parent=0 // loop_footer
    %s17 = sadd.s32 1, %s13
  $region7: #{discriminator_wgan_forward.1} parent=0 // loop_footer_branch
    %12 = sbr.rel target = $region3
  $region8: #{discriminator_wgan_forward.1} parent=0 // loop_exit
    _

</llo_original>
